<compile_context>
chip_gen: v7x
topology: tpu7x:2x2x1
jax: 0.10.0
libtpu: 0.0.40
codegen_flags: <defaults>
</compile_context>

<pallas_src>
import jax
import jax.numpy as jnp
from jax.experimental import pallas as pl
from jax.experimental.pallas import tpu as pltpu

VOCAB = 50              # stands in for len(ws)
EMB = 100               # embedding dim (lane-padded to IN_PAD inside)
HID = 128               # LSTM hidden size
NUM_LAYERS = 3
NUM_CLASSES = 14
IN_PAD = 2 * HID        # uniform per-layer input width (= 2H >= EMB)
CLS_PAD = 128           # lane-padded fc2 output width
NEG = -1.0e30           # bias for padded logit lanes (vanishes in softmax)


# ----------------------------------------------------------------------------
# Fused kernel: embedding gather + 3x bidirectional LSTM + fc -> fc2 -> lsmax
# Grid axis 0 = layer index ("arbitrary"): scratch xbuf carries activations.
# ----------------------------------------------------------------------------
def _model_kernel(ids_ref,                       # SMEM [B, T] int32 (prefetch)
                  emb_ref, wih_ref, whh_ref, b_ref,
                  fcw_ref, fcb_ref, fc2w_ref, fc2b_ref,
                  out_ref, xbuf):
    B, T = ids_ref.shape
    H = HID
    layer = pl.program_id(0)
    last = pl.num_programs(0) - 1

    # ---- layer 0 only: gather embeddings time-major into xbuf --------------
    @pl.when(layer == 0)
    def _():
        for t in range(T):
            for b in range(B):
                tok = ids_ref[b, t]
                xbuf[pl.ds(t * B + b, 1), :] = emb_ref[pl.ds(tok, 1), :]

    # ---- this layer's fused bidirectional recurrence ------------------------
    x2d = xbuf[...].astype(jnp.bfloat16)                     # [T*B, IN_PAD]
    wih_fw = wih_ref[0, 0]                                   # [IN_PAD, 4H] bf16
    wih_bw = wih_ref[0, 1]
    whh = whh_ref[0]                                         # [2H, 8H] bf16 block-diag
    b_fw = b_ref[0, 0]                                       # [1, 4H] f32
    b_bw = b_ref[0, 1]

    # Hoisted input projections for the whole sequence: two MXU calls.
    gin_fw = jnp.dot(x2d, wih_fw, preferred_element_type=jnp.float32) + b_fw
    gin_bw = jnp.dot(x2d, wih_bw, preferred_element_type=jnp.float32) + b_bw

    hs_fw = [None] * T
    hs_bw = [None] * T
    h_fw = h_bw = c_fw = c_bw = None
    for s in range(T):                           # fully unrolled recurrence
        r = T - 1 - s                            # backward direction time index
        if s == 0:                               # h == 0: skip the matmul
            g_fw = gin_fw[0:B]
            g_bw = gin_bw[r * B:(r + 1) * B]
        else:
            h_pack = jnp.concatenate([h_fw, h_bw], axis=-1).astype(jnp.bfloat16)
            hh = jnp.dot(h_pack, whh, preferred_element_type=jnp.float32)
            g_fw = gin_fw[s * B:(s + 1) * B] + hh[:, :4 * H]
            g_bw = gin_bw[r * B:(r + 1) * B] + hh[:, 4 * H:]

        i_f = jax.nn.sigmoid(g_fw[:, 0:H]);       i_b = jax.nn.sigmoid(g_bw[:, 0:H])
        f_f = jax.nn.sigmoid(g_fw[:, H:2 * H]);   f_b = jax.nn.sigmoid(g_bw[:, H:2 * H])
        gg_f = jnp.tanh(g_fw[:, 2 * H:3 * H]);    gg_b = jnp.tanh(g_bw[:, 2 * H:3 * H])
        o_f = jax.nn.sigmoid(g_fw[:, 3 * H:]);    o_b = jax.nn.sigmoid(g_bw[:, 3 * H:])

        c_fw = i_f * gg_f if s == 0 else f_f * c_fw + i_f * gg_f
        c_bw = i_b * gg_b if s == 0 else f_b * c_bw + i_b * gg_b
        h_fw = o_f * jnp.tanh(c_fw)
        h_bw = o_b * jnp.tanh(c_bw)
        hs_fw[s] = h_fw
        hs_bw[r] = h_bw

    # ---- not-last layer: write next layer's input sequence (time-major) ----
    @pl.when(layer != last)
    def _():
        rows = [jnp.concatenate([hs_fw[t], hs_bw[t]], axis=-1) for t in range(T)]
        xbuf[...] = jnp.concatenate(rows, axis=0)            # [T*B, 2H] f32

    # ---- last layer: head fc -> fc2 -> log_softmax --------------------------
    @pl.when(layer == last)
    def _():
        feat = jnp.concatenate([h_fw, h_bw], axis=-1)        # [B, 2H] = [h_n[-2];h_n[-1]]
        hid = jnp.dot(feat, fcw_ref[...],
                      preferred_element_type=jnp.float32) + fcb_ref[...]
        logits = jnp.dot(hid, fc2w_ref[...],
                         preferred_element_type=jnp.float32) + fc2b_ref[...]
        m = jnp.max(logits, axis=-1, keepdims=True)
        sh = logits - m
        lse = jnp.log(jnp.sum(jnp.exp(sh), axis=-1, keepdims=True))
        out_ref[...] = (sh - lse)[:, :NUM_CLASSES]


@jax.jit
def my_model_forward(params, token_ids):
    """token_ids: [B, T] int32 -> log-probs [B, NUM_CLASSES]."""
    B, T = token_ids.shape
    grid_spec = pltpu.PrefetchScalarGridSpec(
        num_scalar_prefetch=1,
        grid=(NUM_LAYERS,),
        in_specs=[
            pl.BlockSpec((VOCAB, IN_PAD), lambda l, ids: (0, 0)),          # emb (f32)
            pl.BlockSpec((1, 2, IN_PAD, 4 * HID), lambda l, ids: (l, 0, 0, 0)),  # wih bf16
            pl.BlockSpec((1, 2 * HID, 8 * HID), lambda l, ids: (l, 0, 0)),       # whh bf16
            pl.BlockSpec((1, 2, 1, 4 * HID), lambda l, ids: (l, 0, 0, 0)),       # bias f32
            pl.BlockSpec((2 * HID, HID), lambda l, ids: (0, 0)),           # fc_w
            pl.BlockSpec((1, HID), lambda l, ids: (0, 0)),                 # fc_b
            pl.BlockSpec((HID, CLS_PAD), lambda l, ids: (0, 0)),           # fc2_w
            pl.BlockSpec((1, CLS_PAD), lambda l, ids: (0, 0)),             # fc2_b
        ],
        out_specs=pl.BlockSpec((B, NUM_CLASSES), lambda l, ids: (0, 0)),
        scratch_shapes=[pltpu.VMEM((T * B, IN_PAD), jnp.float32)],
    )
    return pl.pallas_call(
        _model_kernel,
        out_shape=jax.ShapeDtypeStruct((B, NUM_CLASSES), jnp.float32),
        grid_spec=grid_spec,
        compiler_params=pltpu.CompilerParams(
            dimension_semantics=("arbitrary",),
            vmem_limit_bytes=32 * 1024 * 1024),
    )(token_ids.astype(jnp.int32),
      params["emb"], params["wih"], params["whh"], params["bias"],
      params["fc_w"], params["fc_b"], params["fc2_w"], params["fc2_b"])


# ----------------------------------------------------------------------------
# Parameter initialization (string keys only; PyTorch-shaped, then packed)
# ----------------------------------------------------------------------------
def init_params(key):
    keys = jax.random.split(key, 40)
    ki = iter(keys)

    def uni(k, shape, scale):
        return jax.random.uniform(k, shape, jnp.float32, -scale, scale)

    # Embedding, lane-padded EMB -> IN_PAD with zeros (exact: padded wih rows are 0).
    emb = jax.random.normal(next(ki), (VOCAB, EMB), jnp.float32)
    emb_pad = jnp.zeros((VOCAB, IN_PAD), jnp.float32).at[:, :EMB].set(emb)

    s = 1.0 / (HID ** 0.5)
    wih = jnp.zeros((NUM_LAYERS, 2, IN_PAD, 4 * HID), jnp.float32)
    whh = jnp.zeros((NUM_LAYERS, 2 * HID, 8 * HID), jnp.float32)   # block-diag packed
    bias = jnp.zeros((NUM_LAYERS, 2, 1, 4 * HID), jnp.float32)
    for layer in range(NUM_LAYERS):
        in_dim = EMB if layer == 0 else 2 * HID
        for d in range(2):                              # 0 = fw, 1 = bw
            w_ih = uni(next(ki), (4 * HID, in_dim), s)  # PyTorch layout [4H, in]
            w_hh = uni(next(ki), (4 * HID, HID), s)
            b_ih = uni(next(ki), (4 * HID,), s)
            b_hh = uni(next(ki), (4 * HID,), s)
            wih = wih.at[layer, d, :in_dim, :].set(jnp.transpose(w_ih))
            whh = whh.at[layer, d * HID:(d + 1) * HID,
                         d * 4 * HID:(d + 1) * 4 * HID].set(jnp.transpose(w_hh))
            bias = bias.at[layer, d, 0].set(b_ih + b_hh)

    s1 = 1.0 / ((2 * HID) ** 0.5)
    fc_w = jnp.transpose(uni(next(ki), (HID, 2 * HID), s1))        # [2H, H]
    fc_b = uni(next(ki), (1, HID), s1)

    s2 = 1.0 / (HID ** 0.5)
    fc2_w = jnp.transpose(uni(next(ki), (NUM_CLASSES, HID), s2))   # [H, 14]
    fc2_b = uni(next(ki), (1, NUM_CLASSES), s2)
    fc2_w_pad = jnp.zeros((HID, CLS_PAD), jnp.float32).at[:, :NUM_CLASSES].set(fc2_w)
    fc2_b_pad = jnp.full((1, CLS_PAD), NEG, jnp.float32).at[:, :NUM_CLASSES].set(fc2_b)

    return {"emb": emb_pad,
            "wih": wih.astype(jnp.bfloat16),       # bf16 weights, f32 accumulate
            "whh": whh.astype(jnp.bfloat16),
            "bias": bias,
            "fc_w": fc_w, "fc_b": fc_b,
            "fc2_w": fc2_w_pad, "fc2_b": fc2_b_pad}


# ----------------------------------------------------------------------------
# Pure-JAX reference of the same network / same precision (correctness check)
# ----------------------------------------------------------------------------
@jax.jit
def _reference_forward(params, token_ids):
    x = jnp.take(params["emb"], token_ids, axis=0)          # [B, T, IN_PAD]
    x = jnp.transpose(x, (1, 0, 2))                         # [T, B, IN_PAD]
    T, B, _ = x.shape
    h_last = [None, None]
    for layer in range(NUM_LAYERS):
        outs = [None, None]
        for d in range(2):
            wih = params["wih"][layer, d]                                   # bf16
            whh = params["whh"][layer, d * HID:(d + 1) * HID,
                                d * 4 * HID:(d + 1) * 4 * HID]              # bf16
            b = params["bias"][layer, d]
            h = jnp.zeros((B, HID), jnp.float32)
            c = jnp.zeros((B, HID), jnp.float32)
            seq = [None] * T
            steps = range(T) if d == 0 else range(T - 1, -1, -1)
            for t in steps:
                g = (jnp.dot(x[t].astype(jnp.bfloat16), wih,
                             preferred_element_type=jnp.float32) + b
                     + jnp.dot(h.astype(jnp.bfloat16), whh,
                               preferred_element_type=jnp.float32))
                i_g = jax.nn.sigmoid(g[:, :HID])
                f_g = jax.nn.sigmoid(g[:, HID:2 * HID])
                g_g = jnp.tanh(g[:, 2 * HID:3 * HID])
                o_g = jax.nn.sigmoid(g[:, 3 * HID:])
                c = f_g * c + i_g * g_g
                h = o_g * jnp.tanh(c)
                seq[t] = h
            outs[d] = jnp.stack(seq, axis=0)
            if layer == NUM_LAYERS - 1:
                h_last[d] = h
        x = jnp.concatenate(outs, axis=-1)                  # [T, B, 2H]
    feat = jnp.concatenate(h_last, axis=-1)
    hid = feat @ params["fc_w"] + params["fc_b"]
    logits = (hid @ params["fc2_w"] + params["fc2_b"])[:, :NUM_CLASSES]
    return jax.nn.log_softmax(logits, axis=-1)


if __name__ == "__main__":
    key = jax.random.PRNGKey(0)
    k_param, k_data = jax.random.split(key)

    params = init_params(k_param)

    batch, seq_len = 2, 8
    token_ids = jax.random.randint(k_data, (batch, seq_len), 0, VOCAB,
                                   dtype=jnp.int32)

    out = my_model_forward(params, token_ids)
    out = jax.block_until_ready(out)

    assert out.shape == (batch, NUM_CLASSES)
    # log_softmax rows should exponentiate-sum to 1
    assert jnp.allclose(jnp.sum(jnp.exp(out), axis=-1), 1.0, atol=1e-3)
    # cross-check against the pure-JAX reference (same bf16/f32 precision policy)
    ref = jax.block_until_ready(_reference_forward(params, token_ids))
    assert jnp.allclose(out, ref, atol=3e-2, rtol=3e-2), \
        float(jnp.max(jnp.abs(out - ref)))
    print("KERNEL_OK")
</pallas_src>

<mosaic_0001>
module attributes {stable_mosaic.version = 11 : i64} {
  func.func @_model_kernel(%arg0: i32, %arg1: memref<2x8xi32, #tpu.memory_space<smem>>, %arg2: memref<50x256xf32, #tpu.memory_space<vmem>>, %arg3: memref<1x2x256x512xbf16, #tpu.memory_space<vmem>>, %arg4: memref<1x256x1024xbf16, #tpu.memory_space<vmem>>, %arg5: memref<1x2x1x512xf32, #tpu.memory_space<vmem>>, %arg6: memref<256x128xf32, #tpu.memory_space<vmem>>, %arg7: memref<1x128xf32, #tpu.memory_space<vmem>>, %arg8: memref<128x128xf32, #tpu.memory_space<vmem>>, %arg9: memref<1x128xf32, #tpu.memory_space<vmem>>, %arg10: memref<2x14xf32, #tpu.memory_space<vmem>>, %arg11: memref<16x256xf32, #tpu.memory_space<vmem>>) attributes {dimension_semantics = [#tpu.dimension_semantics<arbitrary>], iteration_bounds = array<i64: 3>, scalar_prefetch = 1 : i64, scratch_operands = 1 : i64, tpu.core_type = #tpu.core_type<tc>, window_params = [{pipeline_mode = #tpu.pipeline_mode<synchronous>, transform_indices = @transform_0, window_bounds = array<i64: 50, 256>}, {transform_indices = @transform_1, window_bounds = array<i64: 1, 2, 256, 512>}, {transform_indices = @transform_2, window_bounds = array<i64: 1, 256, 1024>}, {transform_indices = @transform_3, window_bounds = array<i64: 1, 2, 1, 512>}, {pipeline_mode = #tpu.pipeline_mode<synchronous>, transform_indices = @transform_4, window_bounds = array<i64: 256, 128>}, {pipeline_mode = #tpu.pipeline_mode<synchronous>, transform_indices = @transform_5, window_bounds = array<i64: 1, 128>}, {pipeline_mode = #tpu.pipeline_mode<synchronous>, transform_indices = @transform_6, window_bounds = array<i64: 128, 128>}, {pipeline_mode = #tpu.pipeline_mode<synchronous>, transform_indices = @transform_7, window_bounds = array<i64: 1, 128>}, {pipeline_mode = #tpu.pipeline_mode<synchronous>, transform_indices = @transform_8, window_bounds = array<i64: 2, 14>}]} {
    %c0_i32 = arith.constant 0 : i32
    %0 = arith.cmpi eq, %arg0, %c0_i32 : i32
    %1 = arith.extui %0 : i1 to i32
    %c0_i32_0 = arith.constant 0 : i32
    %2 = arith.cmpi ne, %1, %c0_i32_0 : i32
    scf.if %2 {
      %c0_77 = arith.constant 0 : index
      %c0_78 = arith.constant 0 : index
      %476 = memref.load %arg1[%c0_77, %c0_78] : memref<2x8xi32, #tpu.memory_space<smem>>
      %477 = arith.index_cast %476 : i32 to index
      %c0_79 = arith.constant 0 : index
      %478 = vector.load %arg2[%477, %c0_79] : memref<50x256xf32, #tpu.memory_space<vmem>>, vector<1x256xf32>
      %c0_80 = arith.constant 0 : index
      %c0_81 = arith.constant 0 : index
      %479 = vector.load %arg11[%c0_80, %c0_81] : memref<16x256xf32, #tpu.memory_space<vmem>>, vector<1x256xf32>
      tpu.vector_store %arg11[%c0_80, %c0_81], %478 {strides = array<i32>} : memref<16x256xf32, #tpu.memory_space<vmem>>, vector<1x256xf32>,
      %c1_82 = arith.constant 1 : index
      %c0_83 = arith.constant 0 : index
      %480 = memref.load %arg1[%c1_82, %c0_83] : memref<2x8xi32, #tpu.memory_space<smem>>
      %481 = arith.index_cast %480 : i32 to index
      %c0_84 = arith.constant 0 : index
      %482 = vector.load %arg2[%481, %c0_84] : memref<50x256xf32, #tpu.memory_space<vmem>>, vector<1x256xf32>
      %c1_85 = arith.constant 1 : index
      %c0_86 = arith.constant 0 : index
      %483 = vector.load %arg11[%c1_85, %c0_86] : memref<16x256xf32, #tpu.memory_space<vmem>>, vector<1x256xf32>
      tpu.vector_store %arg11[%c1_85, %c0_86], %482 {strides = array<i32>} : memref<16x256xf32, #tpu.memory_space<vmem>>, vector<1x256xf32>,
      %c0_87 = arith.constant 0 : index
      %c1_88 = arith.constant 1 : index
      %484 = memref.load %arg1[%c0_87, %c1_88] : memref<2x8xi32, #tpu.memory_space<smem>>
      %485 = arith.index_cast %484 : i32 to index
      %c0_89 = arith.constant 0 : index
      %486 = vector.load %arg2[%485, %c0_89] : memref<50x256xf32, #tpu.memory_space<vmem>>, vector<1x256xf32>
      %c2 = arith.constant 2 : index
      %c0_90 = arith.constant 0 : index
      %487 = vector.load %arg11[%c2, %c0_90] : memref<16x256xf32, #tpu.memory_space<vmem>>, vector<1x256xf32>
      tpu.vector_store %arg11[%c2, %c0_90], %486 {strides = array<i32>} : memref<16x256xf32, #tpu.memory_space<vmem>>, vector<1x256xf32>,
      %c1_91 = arith.constant 1 : index
      %c1_92 = arith.constant 1 : index
      %488 = memref.load %arg1[%c1_91, %c1_92] : memref<2x8xi32, #tpu.memory_space<smem>>
      %489 = arith.index_cast %488 : i32 to index
      %c0_93 = arith.constant 0 : index
      %490 = vector.load %arg2[%489, %c0_93] : memref<50x256xf32, #tpu.memory_space<vmem>>, vector<1x256xf32>
      %c3 = arith.constant 3 : index
      %c0_94 = arith.constant 0 : index
      %491 = vector.load %arg11[%c3, %c0_94] : memref<16x256xf32, #tpu.memory_space<vmem>>, vector<1x256xf32>
      tpu.vector_store %arg11[%c3, %c0_94], %490 {strides = array<i32>} : memref<16x256xf32, #tpu.memory_space<vmem>>, vector<1x256xf32>,
      %c0_95 = arith.constant 0 : index
      %c2_96 = arith.constant 2 : index
      %492 = memref.load %arg1[%c0_95, %c2_96] : memref<2x8xi32, #tpu.memory_space<smem>>
      %493 = arith.index_cast %492 : i32 to index
      %c0_97 = arith.constant 0 : index
      %494 = vector.load %arg2[%493, %c0_97] : memref<50x256xf32, #tpu.memory_space<vmem>>, vector<1x256xf32>
      %c4 = arith.constant 4 : index
      %c0_98 = arith.constant 0 : index
      %495 = vector.load %arg11[%c4, %c0_98] : memref<16x256xf32, #tpu.memory_space<vmem>>, vector<1x256xf32>
      tpu.vector_store %arg11[%c4, %c0_98], %494 {strides = array<i32>} : memref<16x256xf32, #tpu.memory_space<vmem>>, vector<1x256xf32>,
      %c1_99 = arith.constant 1 : index
      %c2_100 = arith.constant 2 : index
      %496 = memref.load %arg1[%c1_99, %c2_100] : memref<2x8xi32, #tpu.memory_space<smem>>
      %497 = arith.index_cast %496 : i32 to index
      %c0_101 = arith.constant 0 : index
      %498 = vector.load %arg2[%497, %c0_101] : memref<50x256xf32, #tpu.memory_space<vmem>>, vector<1x256xf32>
      %c5 = arith.constant 5 : index
      %c0_102 = arith.constant 0 : index
      %499 = vector.load %arg11[%c5, %c0_102] : memref<16x256xf32, #tpu.memory_space<vmem>>, vector<1x256xf32>
      tpu.vector_store %arg11[%c5, %c0_102], %498 {strides = array<i32>} : memref<16x256xf32, #tpu.memory_space<vmem>>, vector<1x256xf32>,
      %c0_103 = arith.constant 0 : index
      %c3_104 = arith.constant 3 : index
      %500 = memref.load %arg1[%c0_103, %c3_104] : memref<2x8xi32, #tpu.memory_space<smem>>
      %501 = arith.index_cast %500 : i32 to index
      %c0_105 = arith.constant 0 : index
      %502 = vector.load %arg2[%501, %c0_105] : memref<50x256xf32, #tpu.memory_space<vmem>>, vector<1x256xf32>
      %c6 = arith.constant 6 : index
      %c0_106 = arith.constant 0 : index
      %503 = vector.load %arg11[%c6, %c0_106] : memref<16x256xf32, #tpu.memory_space<vmem>>, vector<1x256xf32>
      tpu.vector_store %arg11[%c6, %c0_106], %502 {strides = array<i32>} : memref<16x256xf32, #tpu.memory_space<vmem>>, vector<1x256xf32>,
      %c1_107 = arith.constant 1 : index
      %c3_108 = arith.constant 3 : index
      %504 = memref.load %arg1[%c1_107, %c3_108] : memref<2x8xi32, #tpu.memory_space<smem>>
      %505 = arith.index_cast %504 : i32 to index
      %c0_109 = arith.constant 0 : index
      %506 = vector.load %arg2[%505, %c0_109] : memref<50x256xf32, #tpu.memory_space<vmem>>, vector<1x256xf32>
      %c7 = arith.constant 7 : index
      %c0_110 = arith.constant 0 : index
      %507 = vector.load %arg11[%c7, %c0_110] : memref<16x256xf32, #tpu.memory_space<vmem>>, vector<1x256xf32>
      tpu.vector_store %arg11[%c7, %c0_110], %506 {strides = array<i32>} : memref<16x256xf32, #tpu.memory_space<vmem>>, vector<1x256xf32>,
      %c0_111 = arith.constant 0 : index
      %c4_112 = arith.constant 4 : index
      %508 = memref.load %arg1[%c0_111, %c4_112] : memref<2x8xi32, #tpu.memory_space<smem>>
      %509 = arith.index_cast %508 : i32 to index
      %c0_113 = arith.constant 0 : index
      %510 = vector.load %arg2[%509, %c0_113] : memref<50x256xf32, #tpu.memory_space<vmem>>, vector<1x256xf32>
      %c8 = arith.constant 8 : index
      %c0_114 = arith.constant 0 : index
      %511 = vector.load %arg11[%c8, %c0_114] : memref<16x256xf32, #tpu.memory_space<vmem>>, vector<1x256xf32>
      tpu.vector_store %arg11[%c8, %c0_114], %510 {strides = array<i32>} : memref<16x256xf32, #tpu.memory_space<vmem>>, vector<1x256xf32>,
      %c1_115 = arith.constant 1 : index
      %c4_116 = arith.constant 4 : index
      %512 = memref.load %arg1[%c1_115, %c4_116] : memref<2x8xi32, #tpu.memory_space<smem>>
      %513 = arith.index_cast %512 : i32 to index
      %c0_117 = arith.constant 0 : index
      %514 = vector.load %arg2[%513, %c0_117] : memref<50x256xf32, #tpu.memory_space<vmem>>, vector<1x256xf32>
      %c9 = arith.constant 9 : index
      %c0_118 = arith.constant 0 : index
      %515 = vector.load %arg11[%c9, %c0_118] : memref<16x256xf32, #tpu.memory_space<vmem>>, vector<1x256xf32>
      tpu.vector_store %arg11[%c9, %c0_118], %514 {strides = array<i32>} : memref<16x256xf32, #tpu.memory_space<vmem>>, vector<1x256xf32>,
      %c0_119 = arith.constant 0 : index
      %c5_120 = arith.constant 5 : index
      %516 = memref.load %arg1[%c0_119, %c5_120] : memref<2x8xi32, #tpu.memory_space<smem>>
      %517 = arith.index_cast %516 : i32 to index
      %c0_121 = arith.constant 0 : index
      %518 = vector.load %arg2[%517, %c0_121] : memref<50x256xf32, #tpu.memory_space<vmem>>, vector<1x256xf32>
      %c10 = arith.constant 10 : index
      %c0_122 = arith.constant 0 : index
      %519 = vector.load %arg11[%c10, %c0_122] : memref<16x256xf32, #tpu.memory_space<vmem>>, vector<1x256xf32>
      tpu.vector_store %arg11[%c10, %c0_122], %518 {strides = array<i32>} : memref<16x256xf32, #tpu.memory_space<vmem>>, vector<1x256xf32>,
      %c1_123 = arith.constant 1 : index
      %c5_124 = arith.constant 5 : index
      %520 = memref.load %arg1[%c1_123, %c5_124] : memref<2x8xi32, #tpu.memory_space<smem>>
      %521 = arith.index_cast %520 : i32 to index
      %c0_125 = arith.constant 0 : index
      %522 = vector.load %arg2[%521, %c0_125] : memref<50x256xf32, #tpu.memory_space<vmem>>, vector<1x256xf32>
      %c11 = arith.constant 11 : index
      %c0_126 = arith.constant 0 : index
      %523 = vector.load %arg11[%c11, %c0_126] : memref<16x256xf32, #tpu.memory_space<vmem>>, vector<1x256xf32>
      tpu.vector_store %arg11[%c11, %c0_126], %522 {strides = array<i32>} : memref<16x256xf32, #tpu.memory_space<vmem>>, vector<1x256xf32>,
      %c0_127 = arith.constant 0 : index
      %c6_128 = arith.constant 6 : index
      %524 = memref.load %arg1[%c0_127, %c6_128] : memref<2x8xi32, #tpu.memory_space<smem>>
      %525 = arith.index_cast %524 : i32 to index
      %c0_129 = arith.constant 0 : index
      %526 = vector.load %arg2[%525, %c0_129] : memref<50x256xf32, #tpu.memory_space<vmem>>, vector<1x256xf32>
      %c12 = arith.constant 12 : index
      %c0_130 = arith.constant 0 : index
      %527 = vector.load %arg11[%c12, %c0_130] : memref<16x256xf32, #tpu.memory_space<vmem>>, vector<1x256xf32>
      tpu.vector_store %arg11[%c12, %c0_130], %526 {strides = array<i32>} : memref<16x256xf32, #tpu.memory_space<vmem>>, vector<1x256xf32>,
      %c1_131 = arith.constant 1 : index
      %c6_132 = arith.constant 6 : index
      %528 = memref.load %arg1[%c1_131, %c6_132] : memref<2x8xi32, #tpu.memory_space<smem>>
      %529 = arith.index_cast %528 : i32 to index
      %c0_133 = arith.constant 0 : index
      %530 = vector.load %arg2[%529, %c0_133] : memref<50x256xf32, #tpu.memory_space<vmem>>, vector<1x256xf32>
      %c13 = arith.constant 13 : index
      %c0_134 = arith.constant 0 : index
      %531 = vector.load %arg11[%c13, %c0_134] : memref<16x256xf32, #tpu.memory_space<vmem>>, vector<1x256xf32>
      tpu.vector_store %arg11[%c13, %c0_134], %530 {strides = array<i32>} : memref<16x256xf32, #tpu.memory_space<vmem>>, vector<1x256xf32>,
      %c0_135 = arith.constant 0 : index
      %c7_136 = arith.constant 7 : index
      %532 = memref.load %arg1[%c0_135, %c7_136] : memref<2x8xi32, #tpu.memory_space<smem>>
      %533 = arith.index_cast %532 : i32 to index
      %c0_137 = arith.constant 0 : index
      %534 = vector.load %arg2[%533, %c0_137] : memref<50x256xf32, #tpu.memory_space<vmem>>, vector<1x256xf32>
      %c14 = arith.constant 14 : index
      %c0_138 = arith.constant 0 : index
      %535 = vector.load %arg11[%c14, %c0_138] : memref<16x256xf32, #tpu.memory_space<vmem>>, vector<1x256xf32>
      tpu.vector_store %arg11[%c14, %c0_138], %534 {strides = array<i32>} : memref<16x256xf32, #tpu.memory_space<vmem>>, vector<1x256xf32>,
      %c1_139 = arith.constant 1 : index
      %c7_140 = arith.constant 7 : index
      %536 = memref.load %arg1[%c1_139, %c7_140] : memref<2x8xi32, #tpu.memory_space<smem>>
      %537 = arith.index_cast %536 : i32 to index
      %c0_141 = arith.constant 0 : index
      %538 = vector.load %arg2[%537, %c0_141] : memref<50x256xf32, #tpu.memory_space<vmem>>, vector<1x256xf32>
      %c15 = arith.constant 15 : index
      %c0_142 = arith.constant 0 : index
      %539 = vector.load %arg11[%c15, %c0_142] : memref<16x256xf32, #tpu.memory_space<vmem>>, vector<1x256xf32>
      tpu.vector_store %arg11[%c15, %c0_142], %538 {strides = array<i32>} : memref<16x256xf32, #tpu.memory_space<vmem>>, vector<1x256xf32>,
    } else {
    }
    %c0 = arith.constant 0 : index
    %c0_1 = arith.constant 0 : index
    %3 = vector.load %arg11[%c0, %c0_1] : memref<16x256xf32, #tpu.memory_space<vmem>>, vector<16x256xf32>
    %4 = arith.truncf %3 : vector<16x256xf32> to vector<16x256xbf16>
    %c0_2 = arith.constant 0 : index
    %c0_3 = arith.constant 0 : index
    %c0_4 = arith.constant 0 : index
    %c0_5 = arith.constant 0 : index
    %5 = vector.load %arg3[%c0_2, %c0_3, %c0_4, %c0_5] : memref<1x2x256x512xbf16, #tpu.memory_space<vmem>>, vector<1x1x256x512xbf16>
    %6 = vector.shape_cast %5 : vector<1x1x256x512xbf16> to vector<256x512xbf16>
    %c0_6 = arith.constant 0 : index
    %c1 = arith.constant 1 : index
    %c0_7 = arith.constant 0 : index
    %c0_8 = arith.constant 0 : index
    %7 = vector.load %arg3[%c0_6, %c1, %c0_7, %c0_8] : memref<1x2x256x512xbf16, #tpu.memory_space<vmem>>, vector<1x1x256x512xbf16>
    %8 = vector.shape_cast %7 : vector<1x1x256x512xbf16> to vector<256x512xbf16>
    %c0_9 = arith.constant 0 : index
    %c0_10 = arith.constant 0 : index
    %c0_11 = arith.constant 0 : index
    %9 = vector.load %arg4[%c0_9, %c0_10, %c0_11] : memref<1x256x1024xbf16, #tpu.memory_space<vmem>>, vector<1x256x1024xbf16>
    %10 = vector.shape_cast %9 : vector<1x256x1024xbf16> to vector<256x1024xbf16>
    %c0_12 = arith.constant 0 : index
    %c0_13 = arith.constant 0 : index
    %c0_14 = arith.constant 0 : index
    %c0_15 = arith.constant 0 : index
    %11 = vector.load %arg5[%c0_12, %c0_13, %c0_14, %c0_15] : memref<1x2x1x512xf32, #tpu.memory_space<vmem>>, vector<1x1x1x512xf32>
    %12 = vector.shape_cast %11 : vector<1x1x1x512xf32> to vector<1x512xf32>
    %c0_16 = arith.constant 0 : index
    %c1_17 = arith.constant 1 : index
    %c0_18 = arith.constant 0 : index
    %c0_19 = arith.constant 0 : index
    %13 = vector.load %arg5[%c0_16, %c1_17, %c0_18, %c0_19] : memref<1x2x1x512xf32, #tpu.memory_space<vmem>>, vector<1x1x1x512xf32>
    %14 = vector.shape_cast %13 : vector<1x1x1x512xf32> to vector<1x512xf32>
    %cst = arith.constant dense<0.000000e+00> : vector<16x512xf32>
    %15 = tpu.matmul %4, %6, %cst {dimension_numbers = #tpu.dot_dimension_numbers<[1], [0], [0], [1], [0, 0, 1, 1], [], []>} : vector<16x256xbf16>, vector<256x512xbf16>, vector<16x512xf32> -> vector<16x512xf32>
    %16 = vector.broadcast %12 : vector<1x512xf32> to vector<16x512xf32>
    %17 = arith.addf %15, %16 : vector<16x512xf32>
    %cst_20 = arith.constant dense<0.000000e+00> : vector<16x512xf32>
    %18 = tpu.matmul %4, %8, %cst_20 {dimension_numbers = #tpu.dot_dimension_numbers<[1], [0], [0], [1], [0, 0, 1, 1], [], []>} : vector<16x256xbf16>, vector<256x512xbf16>, vector<16x512xf32> -> vector<16x512xf32>
    %19 = vector.broadcast %14 : vector<1x512xf32> to vector<16x512xf32>
    %20 = arith.addf %18, %19 : vector<16x512xf32>
    %21 = vector.extract_strided_slice %17 {offsets = [0, 0], sizes = [2, 512], strides = [1, 1]} : vector<16x512xf32> to vector<2x512xf32>
    %22 = vector.extract_strided_slice %20 {offsets = [14, 0], sizes = [2, 512], strides = [1, 1]} : vector<16x512xf32> to vector<2x512xf32>
    %23 = vector.extract_strided_slice %21 {offsets = [0, 0], sizes = [2, 128], strides = [1, 1]} : vector<2x512xf32> to vector<2x128xf32>
    %24 = arith.negf %23 : vector<2x128xf32>
    %25 = math.exp %24 : vector<2x128xf32>
    %cst_21 = arith.constant 1.000000e+00 : f32
    %26 = vector.broadcast %cst_21 : f32 to vector<2x128xf32>
    %27 = arith.addf %26, %25 : vector<2x128xf32>
    %28 = arith.divf %26, %27 : vector<2x128xf32>
    %29 = vector.extract_strided_slice %22 {offsets = [0, 0], sizes = [2, 128], strides = [1, 1]} : vector<2x512xf32> to vector<2x128xf32>
    %30 = arith.negf %29 : vector<2x128xf32>
    %31 = math.exp %30 : vector<2x128xf32>
    %cst_22 = arith.constant 1.000000e+00 : f32
    %32 = vector.broadcast %cst_22 : f32 to vector<2x128xf32>
    %33 = arith.addf %32, %31 : vector<2x128xf32>
    %34 = arith.divf %32, %33 : vector<2x128xf32>
    %35 = vector.extract_strided_slice %21 {offsets = [0, 256], sizes = [2, 128], strides = [1, 1]} : vector<2x512xf32> to vector<2x128xf32>
    %36 = math.tanh %35 : vector<2x128xf32>
    %37 = vector.extract_strided_slice %22 {offsets = [0, 256], sizes = [2, 128], strides = [1, 1]} : vector<2x512xf32> to vector<2x128xf32>
    %38 = math.tanh %37 : vector<2x128xf32>
    %39 = vector.extract_strided_slice %21 {offsets = [0, 384], sizes = [2, 128], strides = [1, 1]} : vector<2x512xf32> to vector<2x128xf32>
    %40 = arith.negf %39 : vector<2x128xf32>
    %41 = math.exp %40 : vector<2x128xf32>
    %cst_23 = arith.constant 1.000000e+00 : f32
    %42 = vector.broadcast %cst_23 : f32 to vector<2x128xf32>
    %43 = arith.addf %42, %41 : vector<2x128xf32>
    %44 = arith.divf %42, %43 : vector<2x128xf32>
    %45 = vector.extract_strided_slice %22 {offsets = [0, 384], sizes = [2, 128], strides = [1, 1]} : vector<2x512xf32> to vector<2x128xf32>
    %46 = arith.negf %45 : vector<2x128xf32>
    %47 = math.exp %46 : vector<2x128xf32>
    %cst_24 = arith.constant 1.000000e+00 : f32
    %48 = vector.broadcast %cst_24 : f32 to vector<2x128xf32>
    %49 = arith.addf %48, %47 : vector<2x128xf32>
    %50 = arith.divf %48, %49 : vector<2x128xf32>
    %51 = arith.mulf %28, %36 : vector<2x128xf32>
    %52 = arith.mulf %34, %38 : vector<2x128xf32>
    %53 = math.tanh %51 : vector<2x128xf32>
    %54 = arith.mulf %44, %53 : vector<2x128xf32>
    %55 = math.tanh %52 : vector<2x128xf32>
    %56 = arith.mulf %50, %55 : vector<2x128xf32>
    %57 = tpu.concatenate %54, %56 in 1 : vector<2x128xf32>, vector<2x128xf32> -> vector<2x256xf32>
    %58 = arith.truncf %57 : vector<2x256xf32> to vector<2x256xbf16>
    %cst_25 = arith.constant dense<0.000000e+00> : vector<2x1024xf32>
    %59 = tpu.matmul %58, %10, %cst_25 {dimension_numbers = #tpu.dot_dimension_numbers<[1], [0], [0], [1], [0, 0, 1, 1], [], []>} : vector<2x256xbf16>, vector<256x1024xbf16>, vector<2x1024xf32> -> vector<2x1024xf32>
    %60 = vector.extract_strided_slice %17 {offsets = [2, 0], sizes = [2, 512], strides = [1, 1]} : vector<16x512xf32> to vector<2x512xf32>
    %61 = vector.extract_strided_slice %59 {offsets = [0, 0], sizes = [2, 512], strides = [1, 1]} : vector<2x1024xf32> to vector<2x512xf32>
    %62 = arith.addf %60, %61 : vector<2x512xf32>
    %63 = vector.extract_strided_slice %20 {offsets = [12, 0], sizes = [2, 512], strides = [1, 1]} : vector<16x512xf32> to vector<2x512xf32>
    %64 = vector.extract_strided_slice %59 {offsets = [0, 512], sizes = [2, 512], strides = [1, 1]} : vector<2x1024xf32> to vector<2x512xf32>
    %65 = arith.addf %63, %64 : vector<2x512xf32>
    %66 = vector.extract_strided_slice %62 {offsets = [0, 0], sizes = [2, 128], strides = [1, 1]} : vector<2x512xf32> to vector<2x128xf32>
    %67 = arith.negf %66 : vector<2x128xf32>
    %68 = math.exp %67 : vector<2x128xf32>
    %cst_26 = arith.constant 1.000000e+00 : f32
    %69 = vector.broadcast %cst_26 : f32 to vector<2x128xf32>
    %70 = arith.addf %69, %68 : vector<2x128xf32>
    %71 = arith.divf %69, %70 : vector<2x128xf32>
    %72 = vector.extract_strided_slice %65 {offsets = [0, 0], sizes = [2, 128], strides = [1, 1]} : vector<2x512xf32> to vector<2x128xf32>
    %73 = arith.negf %72 : vector<2x128xf32>
    %74 = math.exp %73 : vector<2x128xf32>
    %cst_27 = arith.constant 1.000000e+00 : f32
    %75 = vector.broadcast %cst_27 : f32 to vector<2x128xf32>
    %76 = arith.addf %75, %74 : vector<2x128xf32>
    %77 = arith.divf %75, %76 : vector<2x128xf32>
    %78 = vector.extract_strided_slice %62 {offsets = [0, 128], sizes = [2, 128], strides = [1, 1]} : vector<2x512xf32> to vector<2x128xf32>
    %79 = arith.negf %78 : vector<2x128xf32>
    %80 = math.exp %79 : vector<2x128xf32>
    %cst_28 = arith.constant 1.000000e+00 : f32
    %81 = vector.broadcast %cst_28 : f32 to vector<2x128xf32>
    %82 = arith.addf %81, %80 : vector<2x128xf32>
    %83 = arith.divf %81, %82 : vector<2x128xf32>
    %84 = vector.extract_strided_slice %65 {offsets = [0, 128], sizes = [2, 128], strides = [1, 1]} : vector<2x512xf32> to vector<2x128xf32>
    %85 = arith.negf %84 : vector<2x128xf32>
    %86 = math.exp %85 : vector<2x128xf32>
    %cst_29 = arith.constant 1.000000e+00 : f32
    %87 = vector.broadcast %cst_29 : f32 to vector<2x128xf32>
    %88 = arith.addf %87, %86 : vector<2x128xf32>
    %89 = arith.divf %87, %88 : vector<2x128xf32>
    %90 = vector.extract_strided_slice %62 {offsets = [0, 256], sizes = [2, 128], strides = [1, 1]} : vector<2x512xf32> to vector<2x128xf32>
    %91 = math.tanh %90 : vector<2x128xf32>
    %92 = vector.extract_strided_slice %65 {offsets = [0, 256], sizes = [2, 128], strides = [1, 1]} : vector<2x512xf32> to vector<2x128xf32>
    %93 = math.tanh %92 : vector<2x128xf32>
    %94 = vector.extract_strided_slice %62 {offsets = [0, 384], sizes = [2, 128], strides = [1, 1]} : vector<2x512xf32> to vector<2x128xf32>
    %95 = arith.negf %94 : vector<2x128xf32>
    %96 = math.exp %95 : vector<2x128xf32>
    %cst_30 = arith.constant 1.000000e+00 : f32
    %97 = vector.broadcast %cst_30 : f32 to vector<2x128xf32>
    %98 = arith.addf %97, %96 : vector<2x128xf32>
    %99 = arith.divf %97, %98 : vector<2x128xf32>
    %100 = vector.extract_strided_slice %65 {offsets = [0, 384], sizes = [2, 128], strides = [1, 1]} : vector<2x512xf32> to vector<2x128xf32>
    %101 = arith.negf %100 : vector<2x128xf32>
    %102 = math.exp %101 : vector<2x128xf32>
    %cst_31 = arith.constant 1.000000e+00 : f32
    %103 = vector.broadcast %cst_31 : f32 to vector<2x128xf32>
    %104 = arith.addf %103, %102 : vector<2x128xf32>
    %105 = arith.divf %103, %104 : vector<2x128xf32>
    %106 = arith.mulf %83, %51 : vector<2x128xf32>
    %107 = arith.mulf %71, %91 : vector<2x128xf32>
    %108 = arith.addf %106, %107 : vector<2x128xf32>
    %109 = arith.mulf %89, %52 : vector<2x128xf32>
    %110 = arith.mulf %77, %93 : vector<2x128xf32>
    %111 = arith.addf %109, %110 : vector<2x128xf32>
    %112 = math.tanh %108 : vector<2x128xf32>
    %113 = arith.mulf %99, %112 : vector<2x128xf32>
    %114 = math.tanh %111 : vector<2x128xf32>
    %115 = arith.mulf %105, %114 : vector<2x128xf32>
    %116 = tpu.concatenate %113, %115 in 1 : vector<2x128xf32>, vector<2x128xf32> -> vector<2x256xf32>
    %117 = arith.truncf %116 : vector<2x256xf32> to vector<2x256xbf16>
    %cst_32 = arith.constant dense<0.000000e+00> : vector<2x1024xf32>
    %118 = tpu.matmul %117, %10, %cst_32 {dimension_numbers = #tpu.dot_dimension_numbers<[1], [0], [0], [1], [0, 0, 1, 1], [], []>} : vector<2x256xbf16>, vector<256x1024xbf16>, vector<2x1024xf32> -> vector<2x1024xf32>
    %119 = vector.extract_strided_slice %17 {offsets = [4, 0], sizes = [2, 512], strides = [1, 1]} : vector<16x512xf32> to vector<2x512xf32>
    %120 = vector.extract_strided_slice %118 {offsets = [0, 0], sizes = [2, 512], strides = [1, 1]} : vector<2x1024xf32> to vector<2x512xf32>
    %121 = arith.addf %119, %120 : vector<2x512xf32>
    %122 = vector.extract_strided_slice %20 {offsets = [10, 0], sizes = [2, 512], strides = [1, 1]} : vector<16x512xf32> to vector<2x512xf32>
    %123 = vector.extract_strided_slice %118 {offsets = [0, 512], sizes = [2, 512], strides = [1, 1]} : vector<2x1024xf32> to vector<2x512xf32>
    %124 = arith.addf %122, %123 : vector<2x512xf32>
    %125 = vector.extract_strided_slice %121 {offsets = [0, 0], sizes = [2, 128], strides = [1, 1]} : vector<2x512xf32> to vector<2x128xf32>
    %126 = arith.negf %125 : vector<2x128xf32>
    %127 = math.exp %126 : vector<2x128xf32>
    %cst_33 = arith.constant 1.000000e+00 : f32
    %128 = vector.broadcast %cst_33 : f32 to vector<2x128xf32>
    %129 = arith.addf %128, %127 : vector<2x128xf32>
    %130 = arith.divf %128, %129 : vector<2x128xf32>
    %131 = vector.extract_strided_slice %124 {offsets = [0, 0], sizes = [2, 128], strides = [1, 1]} : vector<2x512xf32> to vector<2x128xf32>
    %132 = arith.negf %131 : vector<2x128xf32>
    %133 = math.exp %132 : vector<2x128xf32>
    %cst_34 = arith.constant 1.000000e+00 : f32
    %134 = vector.broadcast %cst_34 : f32 to vector<2x128xf32>
    %135 = arith.addf %134, %133 : vector<2x128xf32>
    %136 = arith.divf %134, %135 : vector<2x128xf32>
    %137 = vector.extract_strided_slice %121 {offsets = [0, 128], sizes = [2, 128], strides = [1, 1]} : vector<2x512xf32> to vector<2x128xf32>
    %138 = arith.negf %137 : vector<2x128xf32>
    %139 = math.exp %138 : vector<2x128xf32>
    %cst_35 = arith.constant 1.000000e+00 : f32
    %140 = vector.broadcast %cst_35 : f32 to vector<2x128xf32>
    %141 = arith.addf %140, %139 : vector<2x128xf32>
    %142 = arith.divf %140, %141 : vector<2x128xf32>
    %143 = vector.extract_strided_slice %124 {offsets = [0, 128], sizes = [2, 128], strides = [1, 1]} : vector<2x512xf32> to vector<2x128xf32>
    %144 = arith.negf %143 : vector<2x128xf32>
    %145 = math.exp %144 : vector<2x128xf32>
    %cst_36 = arith.constant 1.000000e+00 : f32
    %146 = vector.broadcast %cst_36 : f32 to vector<2x128xf32>
    %147 = arith.addf %146, %145 : vector<2x128xf32>
    %148 = arith.divf %146, %147 : vector<2x128xf32>
    %149 = vector.extract_strided_slice %121 {offsets = [0, 256], sizes = [2, 128], strides = [1, 1]} : vector<2x512xf32> to vector<2x128xf32>
    %150 = math.tanh %149 : vector<2x128xf32>
    %151 = vector.extract_strided_slice %124 {offsets = [0, 256], sizes = [2, 128], strides = [1, 1]} : vector<2x512xf32> to vector<2x128xf32>
    %152 = math.tanh %151 : vector<2x128xf32>
    %153 = vector.extract_strided_slice %121 {offsets = [0, 384], sizes = [2, 128], strides = [1, 1]} : vector<2x512xf32> to vector<2x128xf32>
    %154 = arith.negf %153 : vector<2x128xf32>
    %155 = math.exp %154 : vector<2x128xf32>
    %cst_37 = arith.constant 1.000000e+00 : f32
    %156 = vector.broadcast %cst_37 : f32 to vector<2x128xf32>
    %157 = arith.addf %156, %155 : vector<2x128xf32>
    %158 = arith.divf %156, %157 : vector<2x128xf32>
    %159 = vector.extract_strided_slice %124 {offsets = [0, 384], sizes = [2, 128], strides = [1, 1]} : vector<2x512xf32> to vector<2x128xf32>
    %160 = arith.negf %159 : vector<2x128xf32>
    %161 = math.exp %160 : vector<2x128xf32>
    %cst_38 = arith.constant 1.000000e+00 : f32
    %162 = vector.broadcast %cst_38 : f32 to vector<2x128xf32>
    %163 = arith.addf %162, %161 : vector<2x128xf32>
    %164 = arith.divf %162, %163 : vector<2x128xf32>
    %165 = arith.mulf %142, %108 : vector<2x128xf32>
    %166 = arith.mulf %130, %150 : vector<2x128xf32>
    %167 = arith.addf %165, %166 : vector<2x128xf32>
    %168 = arith.mulf %148, %111 : vector<2x128xf32>
    %169 = arith.mulf %136, %152 : vector<2x128xf32>
    %170 = arith.addf %168, %169 : vector<2x128xf32>
    %171 = math.tanh %167 : vector<2x128xf32>
    %172 = arith.mulf %158, %171 : vector<2x128xf32>
    %173 = math.tanh %170 : vector<2x128xf32>
    %174 = arith.mulf %164, %173 : vector<2x128xf32>
    %175 = tpu.concatenate %172, %174 in 1 : vector<2x128xf32>, vector<2x128xf32> -> vector<2x256xf32>
    %176 = arith.truncf %175 : vector<2x256xf32> to vector<2x256xbf16>
    %cst_39 = arith.constant dense<0.000000e+00> : vector<2x1024xf32>
    %177 = tpu.matmul %176, %10, %cst_39 {dimension_numbers = #tpu.dot_dimension_numbers<[1], [0], [0], [1], [0, 0, 1, 1], [], []>} : vector<2x256xbf16>, vector<256x1024xbf16>, vector<2x1024xf32> -> vector<2x1024xf32>
    %178 = vector.extract_strided_slice %17 {offsets = [6, 0], sizes = [2, 512], strides = [1, 1]} : vector<16x512xf32> to vector<2x512xf32>
    %179 = vector.extract_strided_slice %177 {offsets = [0, 0], sizes = [2, 512], strides = [1, 1]} : vector<2x1024xf32> to vector<2x512xf32>
    %180 = arith.addf %178, %179 : vector<2x512xf32>
    %181 = vector.extract_strided_slice %20 {offsets = [8, 0], sizes = [2, 512], strides = [1, 1]} : vector<16x512xf32> to vector<2x512xf32>
    %182 = vector.extract_strided_slice %177 {offsets = [0, 512], sizes = [2, 512], strides = [1, 1]} : vector<2x1024xf32> to vector<2x512xf32>
    %183 = arith.addf %181, %182 : vector<2x512xf32>
    %184 = vector.extract_strided_slice %180 {offsets = [0, 0], sizes = [2, 128], strides = [1, 1]} : vector<2x512xf32> to vector<2x128xf32>
    %185 = arith.negf %184 : vector<2x128xf32>
    %186 = math.exp %185 : vector<2x128xf32>
    %cst_40 = arith.constant 1.000000e+00 : f32
    %187 = vector.broadcast %cst_40 : f32 to vector<2x128xf32>
    %188 = arith.addf %187, %186 : vector<2x128xf32>
    %189 = arith.divf %187, %188 : vector<2x128xf32>
    %190 = vector.extract_strided_slice %183 {offsets = [0, 0], sizes = [2, 128], strides = [1, 1]} : vector<2x512xf32> to vector<2x128xf32>
    %191 = arith.negf %190 : vector<2x128xf32>
    %192 = math.exp %191 : vector<2x128xf32>
    %cst_41 = arith.constant 1.000000e+00 : f32
    %193 = vector.broadcast %cst_41 : f32 to vector<2x128xf32>
    %194 = arith.addf %193, %192 : vector<2x128xf32>
    %195 = arith.divf %193, %194 : vector<2x128xf32>
    %196 = vector.extract_strided_slice %180 {offsets = [0, 128], sizes = [2, 128], strides = [1, 1]} : vector<2x512xf32> to vector<2x128xf32>
    %197 = arith.negf %196 : vector<2x128xf32>
    %198 = math.exp %197 : vector<2x128xf32>
    %cst_42 = arith.constant 1.000000e+00 : f32
    %199 = vector.broadcast %cst_42 : f32 to vector<2x128xf32>
    %200 = arith.addf %199, %198 : vector<2x128xf32>
    %201 = arith.divf %199, %200 : vector<2x128xf32>
    %202 = vector.extract_strided_slice %183 {offsets = [0, 128], sizes = [2, 128], strides = [1, 1]} : vector<2x512xf32> to vector<2x128xf32>
    %203 = arith.negf %202 : vector<2x128xf32>
    %204 = math.exp %203 : vector<2x128xf32>
    %cst_43 = arith.constant 1.000000e+00 : f32
    %205 = vector.broadcast %cst_43 : f32 to vector<2x128xf32>
    %206 = arith.addf %205, %204 : vector<2x128xf32>
    %207 = arith.divf %205, %206 : vector<2x128xf32>
    %208 = vector.extract_strided_slice %180 {offsets = [0, 256], sizes = [2, 128], strides = [1, 1]} : vector<2x512xf32> to vector<2x128xf32>
    %209 = math.tanh %208 : vector<2x128xf32>
    %210 = vector.extract_strided_slice %183 {offsets = [0, 256], sizes = [2, 128], strides = [1, 1]} : vector<2x512xf32> to vector<2x128xf32>
    %211 = math.tanh %210 : vector<2x128xf32>
    %212 = vector.extract_strided_slice %180 {offsets = [0, 384], sizes = [2, 128], strides = [1, 1]} : vector<2x512xf32> to vector<2x128xf32>
    %213 = arith.negf %212 : vector<2x128xf32>
    %214 = math.exp %213 : vector<2x128xf32>
    %cst_44 = arith.constant 1.000000e+00 : f32
    %215 = vector.broadcast %cst_44 : f32 to vector<2x128xf32>
    %216 = arith.addf %215, %214 : vector<2x128xf32>
    %217 = arith.divf %215, %216 : vector<2x128xf32>
    %218 = vector.extract_strided_slice %183 {offsets = [0, 384], sizes = [2, 128], strides = [1, 1]} : vector<2x512xf32> to vector<2x128xf32>
    %219 = arith.negf %218 : vector<2x128xf32>
    %220 = math.exp %219 : vector<2x128xf32>
    %cst_45 = arith.constant 1.000000e+00 : f32
    %221 = vector.broadcast %cst_45 : f32 to vector<2x128xf32>
    %222 = arith.addf %221, %220 : vector<2x128xf32>
    %223 = arith.divf %221, %222 : vector<2x128xf32>
    %224 = arith.mulf %201, %167 : vector<2x128xf32>
    %225 = arith.mulf %189, %209 : vector<2x128xf32>
    %226 = arith.addf %224, %225 : vector<2x128xf32>
    %227 = arith.mulf %207, %170 : vector<2x128xf32>
    %228 = arith.mulf %195, %211 : vector<2x128xf32>
    %229 = arith.addf %227, %228 : vector<2x128xf32>
    %230 = math.tanh %226 : vector<2x128xf32>
    %231 = arith.mulf %217, %230 : vector<2x128xf32>
    %232 = math.tanh %229 : vector<2x128xf32>
    %233 = arith.mulf %223, %232 : vector<2x128xf32>
    %234 = tpu.concatenate %231, %233 in 1 : vector<2x128xf32>, vector<2x128xf32> -> vector<2x256xf32>
    %235 = arith.truncf %234 : vector<2x256xf32> to vector<2x256xbf16>
    %cst_46 = arith.constant dense<0.000000e+00> : vector<2x1024xf32>
    %236 = tpu.matmul %235, %10, %cst_46 {dimension_numbers = #tpu.dot_dimension_numbers<[1], [0], [0], [1], [0, 0, 1, 1], [], []>} : vector<2x256xbf16>, vector<256x1024xbf16>, vector<2x1024xf32> -> vector<2x1024xf32>
    %237 = vector.extract_strided_slice %17 {offsets = [8, 0], sizes = [2, 512], strides = [1, 1]} : vector<16x512xf32> to vector<2x512xf32>
    %238 = vector.extract_strided_slice %236 {offsets = [0, 0], sizes = [2, 512], strides = [1, 1]} : vector<2x1024xf32> to vector<2x512xf32>
    %239 = arith.addf %237, %238 : vector<2x512xf32>
    %240 = vector.extract_strided_slice %20 {offsets = [6, 0], sizes = [2, 512], strides = [1, 1]} : vector<16x512xf32> to vector<2x512xf32>
    %241 = vector.extract_strided_slice %236 {offsets = [0, 512], sizes = [2, 512], strides = [1, 1]} : vector<2x1024xf32> to vector<2x512xf32>
    %242 = arith.addf %240, %241 : vector<2x512xf32>
    %243 = vector.extract_strided_slice %239 {offsets = [0, 0], sizes = [2, 128], strides = [1, 1]} : vector<2x512xf32> to vector<2x128xf32>
    %244 = arith.negf %243 : vector<2x128xf32>
    %245 = math.exp %244 : vector<2x128xf32>
    %cst_47 = arith.constant 1.000000e+00 : f32
    %246 = vector.broadcast %cst_47 : f32 to vector<2x128xf32>
    %247 = arith.addf %246, %245 : vector<2x128xf32>
    %248 = arith.divf %246, %247 : vector<2x128xf32>
    %249 = vector.extract_strided_slice %242 {offsets = [0, 0], sizes = [2, 128], strides = [1, 1]} : vector<2x512xf32> to vector<2x128xf32>
    %250 = arith.negf %249 : vector<2x128xf32>
    %251 = math.exp %250 : vector<2x128xf32>
    %cst_48 = arith.constant 1.000000e+00 : f32
    %252 = vector.broadcast %cst_48 : f32 to vector<2x128xf32>
    %253 = arith.addf %252, %251 : vector<2x128xf32>
    %254 = arith.divf %252, %253 : vector<2x128xf32>
    %255 = vector.extract_strided_slice %239 {offsets = [0, 128], sizes = [2, 128], strides = [1, 1]} : vector<2x512xf32> to vector<2x128xf32>
    %256 = arith.negf %255 : vector<2x128xf32>
    %257 = math.exp %256 : vector<2x128xf32>
    %cst_49 = arith.constant 1.000000e+00 : f32
    %258 = vector.broadcast %cst_49 : f32 to vector<2x128xf32>
    %259 = arith.addf %258, %257 : vector<2x128xf32>
    %260 = arith.divf %258, %259 : vector<2x128xf32>
    %261 = vector.extract_strided_slice %242 {offsets = [0, 128], sizes = [2, 128], strides = [1, 1]} : vector<2x512xf32> to vector<2x128xf32>
    %262 = arith.negf %261 : vector<2x128xf32>
    %263 = math.exp %262 : vector<2x128xf32>
    %cst_50 = arith.constant 1.000000e+00 : f32
    %264 = vector.broadcast %cst_50 : f32 to vector<2x128xf32>
    %265 = arith.addf %264, %263 : vector<2x128xf32>
    %266 = arith.divf %264, %265 : vector<2x128xf32>
    %267 = vector.extract_strided_slice %239 {offsets = [0, 256], sizes = [2, 128], strides = [1, 1]} : vector<2x512xf32> to vector<2x128xf32>
    %268 = math.tanh %267 : vector<2x128xf32>
    %269 = vector.extract_strided_slice %242 {offsets = [0, 256], sizes = [2, 128], strides = [1, 1]} : vector<2x512xf32> to vector<2x128xf32>
    %270 = math.tanh %269 : vector<2x128xf32>
    %271 = vector.extract_strided_slice %239 {offsets = [0, 384], sizes = [2, 128], strides = [1, 1]} : vector<2x512xf32> to vector<2x128xf32>
    %272 = arith.negf %271 : vector<2x128xf32>
    %273 = math.exp %272 : vector<2x128xf32>
    %cst_51 = arith.constant 1.000000e+00 : f32
    %274 = vector.broadcast %cst_51 : f32 to vector<2x128xf32>
    %275 = arith.addf %274, %273 : vector<2x128xf32>
    %276 = arith.divf %274, %275 : vector<2x128xf32>
    %277 = vector.extract_strided_slice %242 {offsets = [0, 384], sizes = [2, 128], strides = [1, 1]} : vector<2x512xf32> to vector<2x128xf32>
    %278 = arith.negf %277 : vector<2x128xf32>
    %279 = math.exp %278 : vector<2x128xf32>
    %cst_52 = arith.constant 1.000000e+00 : f32
    %280 = vector.broadcast %cst_52 : f32 to vector<2x128xf32>
    %281 = arith.addf %280, %279 : vector<2x128xf32>
    %282 = arith.divf %280, %281 : vector<2x128xf32>
    %283 = arith.mulf %260, %226 : vector<2x128xf32>
    %284 = arith.mulf %248, %268 : vector<2x128xf32>
    %285 = arith.addf %283, %284 : vector<2x128xf32>
    %286 = arith.mulf %266, %229 : vector<2x128xf32>
    %287 = arith.mulf %254, %270 : vector<2x128xf32>
    %288 = arith.addf %286, %287 : vector<2x128xf32>
    %289 = math.tanh %285 : vector<2x128xf32>
    %290 = arith.mulf %276, %289 : vector<2x128xf32>
    %291 = math.tanh %288 : vector<2x128xf32>
    %292 = arith.mulf %282, %291 : vector<2x128xf32>
    %293 = tpu.concatenate %290, %292 in 1 : vector<2x128xf32>, vector<2x128xf32> -> vector<2x256xf32>
    %294 = arith.truncf %293 : vector<2x256xf32> to vector<2x256xbf16>
    %cst_53 = arith.constant dense<0.000000e+00> : vector<2x1024xf32>
    %295 = tpu.matmul %294, %10, %cst_53 {dimension_numbers = #tpu.dot_dimension_numbers<[1], [0], [0], [1], [0, 0, 1, 1], [], []>} : vector<2x256xbf16>, vector<256x1024xbf16>, vector<2x1024xf32> -> vector<2x1024xf32>
    %296 = vector.extract_strided_slice %17 {offsets = [10, 0], sizes = [2, 512], strides = [1, 1]} : vector<16x512xf32> to vector<2x512xf32>
    %297 = vector.extract_strided_slice %295 {offsets = [0, 0], sizes = [2, 512], strides = [1, 1]} : vector<2x1024xf32> to vector<2x512xf32>
    %298 = arith.addf %296, %297 : vector<2x512xf32>
    %299 = vector.extract_strided_slice %20 {offsets = [4, 0], sizes = [2, 512], strides = [1, 1]} : vector<16x512xf32> to vector<2x512xf32>
    %300 = vector.extract_strided_slice %295 {offsets = [0, 512], sizes = [2, 512], strides = [1, 1]} : vector<2x1024xf32> to vector<2x512xf32>
    %301 = arith.addf %299, %300 : vector<2x512xf32>
    %302 = vector.extract_strided_slice %298 {offsets = [0, 0], sizes = [2, 128], strides = [1, 1]} : vector<2x512xf32> to vector<2x128xf32>
    %303 = arith.negf %302 : vector<2x128xf32>
    %304 = math.exp %303 : vector<2x128xf32>
    %cst_54 = arith.constant 1.000000e+00 : f32
    %305 = vector.broadcast %cst_54 : f32 to vector<2x128xf32>
    %306 = arith.addf %305, %304 : vector<2x128xf32>
    %307 = arith.divf %305, %306 : vector<2x128xf32>
    %308 = vector.extract_strided_slice %301 {offsets = [0, 0], sizes = [2, 128], strides = [1, 1]} : vector<2x512xf32> to vector<2x128xf32>
    %309 = arith.negf %308 : vector<2x128xf32>
    %310 = math.exp %309 : vector<2x128xf32>
    %cst_55 = arith.constant 1.000000e+00 : f32
    %311 = vector.broadcast %cst_55 : f32 to vector<2x128xf32>
    %312 = arith.addf %311, %310 : vector<2x128xf32>
    %313 = arith.divf %311, %312 : vector<2x128xf32>
    %314 = vector.extract_strided_slice %298 {offsets = [0, 128], sizes = [2, 128], strides = [1, 1]} : vector<2x512xf32> to vector<2x128xf32>
    %315 = arith.negf %314 : vector<2x128xf32>
    %316 = math.exp %315 : vector<2x128xf32>
    %cst_56 = arith.constant 1.000000e+00 : f32
    %317 = vector.broadcast %cst_56 : f32 to vector<2x128xf32>
    %318 = arith.addf %317, %316 : vector<2x128xf32>
    %319 = arith.divf %317, %318 : vector<2x128xf32>
    %320 = vector.extract_strided_slice %301 {offsets = [0, 128], sizes = [2, 128], strides = [1, 1]} : vector<2x512xf32> to vector<2x128xf32>
    %321 = arith.negf %320 : vector<2x128xf32>
    %322 = math.exp %321 : vector<2x128xf32>
    %cst_57 = arith.constant 1.000000e+00 : f32
    %323 = vector.broadcast %cst_57 : f32 to vector<2x128xf32>
    %324 = arith.addf %323, %322 : vector<2x128xf32>
    %325 = arith.divf %323, %324 : vector<2x128xf32>
    %326 = vector.extract_strided_slice %298 {offsets = [0, 256], sizes = [2, 128], strides = [1, 1]} : vector<2x512xf32> to vector<2x128xf32>
    %327 = math.tanh %326 : vector<2x128xf32>
    %328 = vector.extract_strided_slice %301 {offsets = [0, 256], sizes = [2, 128], strides = [1, 1]} : vector<2x512xf32> to vector<2x128xf32>
    %329 = math.tanh %328 : vector<2x128xf32>
    %330 = vector.extract_strided_slice %298 {offsets = [0, 384], sizes = [2, 128], strides = [1, 1]} : vector<2x512xf32> to vector<2x128xf32>
    %331 = arith.negf %330 : vector<2x128xf32>
    %332 = math.exp %331 : vector<2x128xf32>
    %cst_58 = arith.constant 1.000000e+00 : f32
    %333 = vector.broadcast %cst_58 : f32 to vector<2x128xf32>
    %334 = arith.addf %333, %332 : vector<2x128xf32>
    %335 = arith.divf %333, %334 : vector<2x128xf32>
    %336 = vector.extract_strided_slice %301 {offsets = [0, 384], sizes = [2, 128], strides = [1, 1]} : vector<2x512xf32> to vector<2x128xf32>
    %337 = arith.negf %336 : vector<2x128xf32>
    %338 = math.exp %337 : vector<2x128xf32>
    %cst_59 = arith.constant 1.000000e+00 : f32
    %339 = vector.broadcast %cst_59 : f32 to vector<2x128xf32>
    %340 = arith.addf %339, %338 : vector<2x128xf32>
    %341 = arith.divf %339, %340 : vector<2x128xf32>
    %342 = arith.mulf %319, %285 : vector<2x128xf32>
    %343 = arith.mulf %307, %327 : vector<2x128xf32>
    %344 = arith.addf %342, %343 : vector<2x128xf32>
    %345 = arith.mulf %325, %288 : vector<2x128xf32>
    %346 = arith.mulf %313, %329 : vector<2x128xf32>
    %347 = arith.addf %345, %346 : vector<2x128xf32>
    %348 = math.tanh %344 : vector<2x128xf32>
    %349 = arith.mulf %335, %348 : vector<2x128xf32>
    %350 = math.tanh %347 : vector<2x128xf32>
    %351 = arith.mulf %341, %350 : vector<2x128xf32>
    %352 = tpu.concatenate %349, %351 in 1 : vector<2x128xf32>, vector<2x128xf32> -> vector<2x256xf32>
    %353 = arith.truncf %352 : vector<2x256xf32> to vector<2x256xbf16>
    %cst_60 = arith.constant dense<0.000000e+00> : vector<2x1024xf32>
    %354 = tpu.matmul %353, %10, %cst_60 {dimension_numbers = #tpu.dot_dimension_numbers<[1], [0], [0], [1], [0, 0, 1, 1], [], []>} : vector<2x256xbf16>, vector<256x1024xbf16>, vector<2x1024xf32> -> vector<2x1024xf32>
    %355 = vector.extract_strided_slice %17 {offsets = [12, 0], sizes = [2, 512], strides = [1, 1]} : vector<16x512xf32> to vector<2x512xf32>
    %356 = vector.extract_strided_slice %354 {offsets = [0, 0], sizes = [2, 512], strides = [1, 1]} : vector<2x1024xf32> to vector<2x512xf32>
    %357 = arith.addf %355, %356 : vector<2x512xf32>
    %358 = vector.extract_strided_slice %20 {offsets = [2, 0], sizes = [2, 512], strides = [1, 1]} : vector<16x512xf32> to vector<2x512xf32>
    %359 = vector.extract_strided_slice %354 {offsets = [0, 512], sizes = [2, 512], strides = [1, 1]} : vector<2x1024xf32> to vector<2x512xf32>
    %360 = arith.addf %358, %359 : vector<2x512xf32>
    %361 = vector.extract_strided_slice %357 {offsets = [0, 0], sizes = [2, 128], strides = [1, 1]} : vector<2x512xf32> to vector<2x128xf32>
    %362 = arith.negf %361 : vector<2x128xf32>
    %363 = math.exp %362 : vector<2x128xf32>
    %cst_61 = arith.constant 1.000000e+00 : f32
    %364 = vector.broadcast %cst_61 : f32 to vector<2x128xf32>
    %365 = arith.addf %364, %363 : vector<2x128xf32>
    %366 = arith.divf %364, %365 : vector<2x128xf32>
    %367 = vector.extract_strided_slice %360 {offsets = [0, 0], sizes = [2, 128], strides = [1, 1]} : vector<2x512xf32> to vector<2x128xf32>
    %368 = arith.negf %367 : vector<2x128xf32>
    %369 = math.exp %368 : vector<2x128xf32>
    %cst_62 = arith.constant 1.000000e+00 : f32
    %370 = vector.broadcast %cst_62 : f32 to vector<2x128xf32>
    %371 = arith.addf %370, %369 : vector<2x128xf32>
    %372 = arith.divf %370, %371 : vector<2x128xf32>
    %373 = vector.extract_strided_slice %357 {offsets = [0, 128], sizes = [2, 128], strides = [1, 1]} : vector<2x512xf32> to vector<2x128xf32>
    %374 = arith.negf %373 : vector<2x128xf32>
    %375 = math.exp %374 : vector<2x128xf32>
    %cst_63 = arith.constant 1.000000e+00 : f32
    %376 = vector.broadcast %cst_63 : f32 to vector<2x128xf32>
    %377 = arith.addf %376, %375 : vector<2x128xf32>
    %378 = arith.divf %376, %377 : vector<2x128xf32>
    %379 = vector.extract_strided_slice %360 {offsets = [0, 128], sizes = [2, 128], strides = [1, 1]} : vector<2x512xf32> to vector<2x128xf32>
    %380 = arith.negf %379 : vector<2x128xf32>
    %381 = math.exp %380 : vector<2x128xf32>
    %cst_64 = arith.constant 1.000000e+00 : f32
    %382 = vector.broadcast %cst_64 : f32 to vector<2x128xf32>
    %383 = arith.addf %382, %381 : vector<2x128xf32>
    %384 = arith.divf %382, %383 : vector<2x128xf32>
    %385 = vector.extract_strided_slice %357 {offsets = [0, 256], sizes = [2, 128], strides = [1, 1]} : vector<2x512xf32> to vector<2x128xf32>
    %386 = math.tanh %385 : vector<2x128xf32>
    %387 = vector.extract_strided_slice %360 {offsets = [0, 256], sizes = [2, 128], strides = [1, 1]} : vector<2x512xf32> to vector<2x128xf32>
    %388 = math.tanh %387 : vector<2x128xf32>
    %389 = vector.extract_strided_slice %357 {offsets = [0, 384], sizes = [2, 128], strides = [1, 1]} : vector<2x512xf32> to vector<2x128xf32>
    %390 = arith.negf %389 : vector<2x128xf32>
    %391 = math.exp %390 : vector<2x128xf32>
    %cst_65 = arith.constant 1.000000e+00 : f32
    %392 = vector.broadcast %cst_65 : f32 to vector<2x128xf32>
    %393 = arith.addf %392, %391 : vector<2x128xf32>
    %394 = arith.divf %392, %393 : vector<2x128xf32>
    %395 = vector.extract_strided_slice %360 {offsets = [0, 384], sizes = [2, 128], strides = [1, 1]} : vector<2x512xf32> to vector<2x128xf32>
    %396 = arith.negf %395 : vector<2x128xf32>
    %397 = math.exp %396 : vector<2x128xf32>
    %cst_66 = arith.constant 1.000000e+00 : f32
    %398 = vector.broadcast %cst_66 : f32 to vector<2x128xf32>
    %399 = arith.addf %398, %397 : vector<2x128xf32>
    %400 = arith.divf %398, %399 : vector<2x128xf32>
    %401 = arith.mulf %378, %344 : vector<2x128xf32>
    %402 = arith.mulf %366, %386 : vector<2x128xf32>
    %403 = arith.addf %401, %402 : vector<2x128xf32>
    %404 = arith.mulf %384, %347 : vector<2x128xf32>
    %405 = arith.mulf %372, %388 : vector<2x128xf32>
    %406 = arith.addf %404, %405 : vector<2x128xf32>
    %407 = math.tanh %403 : vector<2x128xf32>
    %408 = arith.mulf %394, %407 : vector<2x128xf32>
    %409 = math.tanh %406 : vector<2x128xf32>
    %410 = arith.mulf %400, %409 : vector<2x128xf32>
    %411 = tpu.concatenate %408, %410 in 1 : vector<2x128xf32>, vector<2x128xf32> -> vector<2x256xf32>
    %412 = arith.truncf %411 : vector<2x256xf32> to vector<2x256xbf16>
    %cst_67 = arith.constant dense<0.000000e+00> : vector<2x1024xf32>
    %413 = tpu.matmul %412, %10, %cst_67 {dimension_numbers = #tpu.dot_dimension_numbers<[1], [0], [0], [1], [0, 0, 1, 1], [], []>} : vector<2x256xbf16>, vector<256x1024xbf16>, vector<2x1024xf32> -> vector<2x1024xf32>
    %414 = vector.extract_strided_slice %17 {offsets = [14, 0], sizes = [2, 512], strides = [1, 1]} : vector<16x512xf32> to vector<2x512xf32>
    %415 = vector.extract_strided_slice %413 {offsets = [0, 0], sizes = [2, 512], strides = [1, 1]} : vector<2x1024xf32> to vector<2x512xf32>
    %416 = arith.addf %414, %415 : vector<2x512xf32>
    %417 = vector.extract_strided_slice %20 {offsets = [0, 0], sizes = [2, 512], strides = [1, 1]} : vector<16x512xf32> to vector<2x512xf32>
    %418 = vector.extract_strided_slice %413 {offsets = [0, 512], sizes = [2, 512], strides = [1, 1]} : vector<2x1024xf32> to vector<2x512xf32>
    %419 = arith.addf %417, %418 : vector<2x512xf32>
    %420 = vector.extract_strided_slice %416 {offsets = [0, 0], sizes = [2, 128], strides = [1, 1]} : vector<2x512xf32> to vector<2x128xf32>
    %421 = arith.negf %420 : vector<2x128xf32>
    %422 = math.exp %421 : vector<2x128xf32>
    %cst_68 = arith.constant 1.000000e+00 : f32
    %423 = vector.broadcast %cst_68 : f32 to vector<2x128xf32>
    %424 = arith.addf %423, %422 : vector<2x128xf32>
    %425 = arith.divf %423, %424 : vector<2x128xf32>
    %426 = vector.extract_strided_slice %419 {offsets = [0, 0], sizes = [2, 128], strides = [1, 1]} : vector<2x512xf32> to vector<2x128xf32>
    %427 = arith.negf %426 : vector<2x128xf32>
    %428 = math.exp %427 : vector<2x128xf32>
    %cst_69 = arith.constant 1.000000e+00 : f32
    %429 = vector.broadcast %cst_69 : f32 to vector<2x128xf32>
    %430 = arith.addf %429, %428 : vector<2x128xf32>
    %431 = arith.divf %429, %430 : vector<2x128xf32>
    %432 = vector.extract_strided_slice %416 {offsets = [0, 128], sizes = [2, 128], strides = [1, 1]} : vector<2x512xf32> to vector<2x128xf32>
    %433 = arith.negf %432 : vector<2x128xf32>
    %434 = math.exp %433 : vector<2x128xf32>
    %cst_70 = arith.constant 1.000000e+00 : f32
    %435 = vector.broadcast %cst_70 : f32 to vector<2x128xf32>
    %436 = arith.addf %435, %434 : vector<2x128xf32>
    %437 = arith.divf %435, %436 : vector<2x128xf32>
    %438 = vector.extract_strided_slice %419 {offsets = [0, 128], sizes = [2, 128], strides = [1, 1]} : vector<2x512xf32> to vector<2x128xf32>
    %439 = arith.negf %438 : vector<2x128xf32>
    %440 = math.exp %439 : vector<2x128xf32>
    %cst_71 = arith.constant 1.000000e+00 : f32
    %441 = vector.broadcast %cst_71 : f32 to vector<2x128xf32>
    %442 = arith.addf %441, %440 : vector<2x128xf32>
    %443 = arith.divf %441, %442 : vector<2x128xf32>
    %444 = vector.extract_strided_slice %416 {offsets = [0, 256], sizes = [2, 128], strides = [1, 1]} : vector<2x512xf32> to vector<2x128xf32>
    %445 = math.tanh %444 : vector<2x128xf32>
    %446 = vector.extract_strided_slice %419 {offsets = [0, 256], sizes = [2, 128], strides = [1, 1]} : vector<2x512xf32> to vector<2x128xf32>
    %447 = math.tanh %446 : vector<2x128xf32>
    %448 = vector.extract_strided_slice %416 {offsets = [0, 384], sizes = [2, 128], strides = [1, 1]} : vector<2x512xf32> to vector<2x128xf32>
    %449 = arith.negf %448 : vector<2x128xf32>
    %450 = math.exp %449 : vector<2x128xf32>
    %cst_72 = arith.constant 1.000000e+00 : f32
    %451 = vector.broadcast %cst_72 : f32 to vector<2x128xf32>
    %452 = arith.addf %451, %450 : vector<2x128xf32>
    %453 = arith.divf %451, %452 : vector<2x128xf32>
    %454 = vector.extract_strided_slice %419 {offsets = [0, 384], sizes = [2, 128], strides = [1, 1]} : vector<2x512xf32> to vector<2x128xf32>
    %455 = arith.negf %454 : vector<2x128xf32>
    %456 = math.exp %455 : vector<2x128xf32>
    %cst_73 = arith.constant 1.000000e+00 : f32
    %457 = vector.broadcast %cst_73 : f32 to vector<2x128xf32>
    %458 = arith.addf %457, %456 : vector<2x128xf32>
    %459 = arith.divf %457, %458 : vector<2x128xf32>
    %460 = arith.mulf %437, %403 : vector<2x128xf32>
    %461 = arith.mulf %425, %445 : vector<2x128xf32>
    %462 = arith.addf %460, %461 : vector<2x128xf32>
    %463 = arith.mulf %443, %406 : vector<2x128xf32>
    %464 = arith.mulf %431, %447 : vector<2x128xf32>
    %465 = arith.addf %463, %464 : vector<2x128xf32>
    %466 = math.tanh %462 : vector<2x128xf32>
    %467 = arith.mulf %453, %466 : vector<2x128xf32>
    %468 = math.tanh %465 : vector<2x128xf32>
    %469 = arith.mulf %459, %468 : vector<2x128xf32>
    %c2_i32 = arith.constant 2 : i32
    %470 = arith.cmpi ne, %arg0, %c2_i32 : i32
    %471 = arith.extui %470 : i1 to i32
    %c0_i32_74 = arith.constant 0 : i32
    %472 = arith.cmpi ne, %471, %c0_i32_74 : i32
    scf.if %472 {
      %476 = tpu.concatenate %54, %469 in 1 : vector<2x128xf32>, vector<2x128xf32> -> vector<2x256xf32>
      %477 = tpu.concatenate %113, %410 in 1 : vector<2x128xf32>, vector<2x128xf32> -> vector<2x256xf32>
      %478 = tpu.concatenate %172, %351 in 1 : vector<2x128xf32>, vector<2x128xf32> -> vector<2x256xf32>
      %479 = tpu.concatenate %231, %292 in 1 : vector<2x128xf32>, vector<2x128xf32> -> vector<2x256xf32>
      %480 = tpu.concatenate %290, %233 in 1 : vector<2x128xf32>, vector<2x128xf32> -> vector<2x256xf32>
      %481 = tpu.concatenate %349, %174 in 1 : vector<2x128xf32>, vector<2x128xf32> -> vector<2x256xf32>
      %482 = tpu.concatenate %408, %115 in 1 : vector<2x128xf32>, vector<2x128xf32> -> vector<2x256xf32>
      %483 = tpu.concatenate %467, %56 in 1 : vector<2x128xf32>, vector<2x128xf32> -> vector<2x256xf32>
      %484 = tpu.concatenate %476, %477, %478, %479, %480, %481, %482, %483 in 0 : vector<2x256xf32>, vector<2x256xf32>, vector<2x256xf32>, vector<2x256xf32>, vector<2x256xf32>, vector<2x256xf32>, vector<2x256xf32>, vector<2x256xf32> -> vector<16x256xf32>
      %c0_77 = arith.constant 0 : index
      %c0_78 = arith.constant 0 : index
      %485 = vector.load %arg11[%c0_77, %c0_78] : memref<16x256xf32, #tpu.memory_space<vmem>>, vector<16x256xf32>
      tpu.vector_store %arg11[%c0_77, %c0_78], %484 {strides = array<i32>} : memref<16x256xf32, #tpu.memory_space<vmem>>, vector<16x256xf32>,
    } else {
    }
    %c2_i32_75 = arith.constant 2 : i32
    %473 = arith.cmpi eq, %arg0, %c2_i32_75 : i32
    %474 = arith.extui %473 : i1 to i32
    %c0_i32_76 = arith.constant 0 : i32
    %475 = arith.cmpi ne, %474, %c0_i32_76 : i32
    scf.if %475 {
      %476 = tpu.concatenate %467, %469 in 1 : vector<2x128xf32>, vector<2x128xf32> -> vector<2x256xf32>
      %c0_77 = arith.constant 0 : index
      %c0_78 = arith.constant 0 : index
      %477 = vector.load %arg6[%c0_77, %c0_78] : memref<256x128xf32, #tpu.memory_space<vmem>>, vector<256x128xf32>
      %cst_79 = arith.constant dense<0.000000e+00> : vector<2x128xf32>
      %478 = tpu.matmul %476, %477, %cst_79 {dimension_numbers = #tpu.dot_dimension_numbers<[1], [0], [0], [1], [0, 0, 1, 1], [], []>} : vector<2x256xf32>, vector<256x128xf32>, vector<2x128xf32> -> vector<2x128xf32>
      %c0_80 = arith.constant 0 : index
      %c0_81 = arith.constant 0 : index
      %479 = vector.load %arg7[%c0_80, %c0_81] : memref<1x128xf32, #tpu.memory_space<vmem>>, vector<1x128xf32>
      %480 = vector.broadcast %479 : vector<1x128xf32> to vector<2x128xf32>
      %481 = arith.addf %478, %480 : vector<2x128xf32>
      %c0_82 = arith.constant 0 : index
      %c0_83 = arith.constant 0 : index
      %482 = vector.load %arg8[%c0_82, %c0_83] : memref<128x128xf32, #tpu.memory_space<vmem>>, vector<128x128xf32>
      %cst_84 = arith.constant dense<0.000000e+00> : vector<2x128xf32>
      %483 = tpu.matmul %481, %482, %cst_84 {dimension_numbers = #tpu.dot_dimension_numbers<[1], [0], [0], [1], [0, 0, 1, 1], [], []>} : vector<2x128xf32>, vector<128x128xf32>, vector<2x128xf32> -> vector<2x128xf32>
      %c0_85 = arith.constant 0 : index
      %c0_86 = arith.constant 0 : index
      %484 = vector.load %arg9[%c0_85, %c0_86] : memref<1x128xf32, #tpu.memory_space<vmem>>, vector<1x128xf32>
      %485 = vector.broadcast %484 : vector<1x128xf32> to vector<2x128xf32>
      %486 = arith.addf %483, %485 : vector<2x128xf32>
      %cst_87 = arith.constant dense<0xFF800000> : vector<2xf32>
      %487 = vector.multi_reduction <maximumf>, %486, %cst_87 [1] : vector<2x128xf32> to vector<2xf32>
      %488 = vector.shape_cast %487 : vector<2xf32> to vector<2x1xf32>
      %489 = vector.broadcast %488 : vector<2x1xf32> to vector<2x128xf32>
      %490 = arith.subf %486, %489 : vector<2x128xf32>
      %491 = math.exp %490 : vector<2x128xf32>
      %cst_88 = arith.constant dense<0.000000e+00> : vector<2xf32>
      %492 = vector.multi_reduction <add>, %491, %cst_88 [1] : vector<2x128xf32> to vector<2xf32>
      %493 = vector.shape_cast %492 : vector<2xf32> to vector<2x1xf32>
      %494 = math.log %493 : vector<2x1xf32>
      %495 = vector.broadcast %494 : vector<2x1xf32> to vector<2x128xf32>
      %496 = arith.subf %490, %495 : vector<2x128xf32>
      %497 = vector.extract_strided_slice %496 {offsets = [0, 0], sizes = [2, 14], strides = [1, 1]} : vector<2x128xf32> to vector<2x14xf32>
      %c0_89 = arith.constant 0 : index
      %c0_90 = arith.constant 0 : index
      %498 = vector.load %arg10[%c0_89, %c0_90] : memref<2x14xf32, #tpu.memory_space<vmem>>, vector<2x14xf32>
      tpu.vector_store %arg10[%c0_89, %c0_90], %497 {strides = array<i32>} : memref<2x14xf32, #tpu.memory_space<vmem>>, vector<2x14xf32>,
    } else {
    }
    return
  }
  func.func @transform_0(%arg0: i32, %arg1: memref<2x8xi32, #tpu.memory_space<smem>>) -> (i32, i32) {
    %c0_i32 = arith.constant 0 : i32
    %c0_i32_0 = arith.constant 0 : i32
    %c0_i32_1 = arith.constant 0 : i32
    return %c0_i32, %c0_i32_0 : i32, i32
  }
  func.func @transform_1(%arg0: i32, %arg1: memref<2x8xi32, #tpu.memory_space<smem>>) -> (i32, i32, i32, i32) {
    %c0_i32 = arith.constant 0 : i32
    %c0_i32_0 = arith.constant 0 : i32
    %c0_i32_1 = arith.constant 0 : i32
    %c0_i32_2 = arith.constant 0 : i32
    return %arg0, %c0_i32, %c0_i32_0, %c0_i32_1 : i32, i32, i32, i32
  }
  func.func @transform_2(%arg0: i32, %arg1: memref<2x8xi32, #tpu.memory_space<smem>>) -> (i32, i32, i32) {
    %c0_i32 = arith.constant 0 : i32
    %c0_i32_0 = arith.constant 0 : i32
    %c0_i32_1 = arith.constant 0 : i32
    return %arg0, %c0_i32, %c0_i32_0 : i32, i32, i32
  }
  func.func @transform_3(%arg0: i32, %arg1: memref<2x8xi32, #tpu.memory_space<smem>>) -> (i32, i32, i32, i32) {
    %c0_i32 = arith.constant 0 : i32
    %c0_i32_0 = arith.constant 0 : i32
    %c0_i32_1 = arith.constant 0 : i32
    %c0_i32_2 = arith.constant 0 : i32
    return %arg0, %c0_i32, %c0_i32_0, %c0_i32_1 : i32, i32, i32, i32
  }
  func.func @transform_4(%arg0: i32, %arg1: memref<2x8xi32, #tpu.memory_space<smem>>) -> (i32, i32) {
    %c0_i32 = arith.constant 0 : i32
    %c0_i32_0 = arith.constant 0 : i32
    %c0_i32_1 = arith.constant 0 : i32
    return %c0_i32, %c0_i32_0 : i32, i32
  }
  func.func @transform_5(%arg0: i32, %arg1: memref<2x8xi32, #tpu.memory_space<smem>>) -> (i32, i32) {
    %c0_i32 = arith.constant 0 : i32
    %c0_i32_0 = arith.constant 0 : i32
    %c0_i32_1 = arith.constant 0 : i32
    return %c0_i32, %c0_i32_0 : i32, i32
  }
  func.func @transform_6(%arg0: i32, %arg1: memref<2x8xi32, #tpu.memory_space<smem>>) -> (i32, i32) {
    %c0_i32 = arith.constant 0 : i32
    %c0_i32_0 = arith.constant 0 : i32
    %c0_i32_1 = arith.constant 0 : i32
    return %c0_i32, %c0_i32_0 : i32, i32
  }
  func.func @transform_7(%arg0: i32, %arg1: memref<2x8xi32, #tpu.memory_space<smem>>) -> (i32, i32) {
    %c0_i32 = arith.constant 0 : i32
    %c0_i32_0 = arith.constant 0 : i32
    %c0_i32_1 = arith.constant 0 : i32
    return %c0_i32, %c0_i32_0 : i32, i32
  }
  func.func @transform_8(%arg0: i32, %arg1: memref<2x8xi32, #tpu.memory_space<smem>>) -> (i32, i32) {
    %c0_i32 = arith.constant 0 : i32
    %c0_i32_0 = arith.constant 0 : i32
    %c0_i32_1 = arith.constant 0 : i32
    return %c0_i32, %c0_i32_0 : i32, i32
  }
}

</mosaic_0001>

<llo_original>
// kernel: my_model_forward.1
$region0: #{my_model_forward.1}
  #allocation0 [shape = 'u32[]', space=smem, size = 0x4, offset = 0x4, fixed_abs, tag = 'smem constant byte address 0x4 - core index']
  #allocation1 [shape = 'u32[144,128]{1,0:T(1,128)}', space=vmem, size = 0x12000, scoped, tag = 'internal scratch']
  #allocation2 [shape = 'f32[16,256]{1,0:T(8,128)}', space=vmem, size = 0x4000, scoped, tag = 'scratch operand']
  #allocation3 [shape = 's32[1]{0}', space=sflag, size = 0x4, scoped, tag = 'scoped memory for my_model_forward.1']
  #allocation4 [shape = 'u8[1024]{0}', space=smem, size = 0x400, scoped, tag = 'prefetched SMEM operand 0']
  %s0 = inlined_call_operand.hbm [shape: s32[2,8], index: 0, kind: input, shape index: {}]
  %s1 = inlined_call_operand.hbm [shape: f32[50,256], index: 1, kind: input, shape index: {}]
  %s2 = inlined_call_operand.hbm [shape: bf16[3,2,256,512], index: 2, kind: input, shape index: {}]
  %s3 = inlined_call_operand.hbm [shape: bf16[3,256,1024], index: 3, kind: input, shape index: {}]
  %s4 = inlined_call_operand.hbm [shape: f32[3,2,1,512], index: 4, kind: input, shape index: {}]
  %s5 = inlined_call_operand.hbm [shape: f32[256,128], index: 5, kind: input, shape index: {}]
  %s6 = inlined_call_operand.hbm [shape: f32[1,128], index: 6, kind: input, shape index: {}]
  %s7 = inlined_call_operand.hbm [shape: f32[128,128], index: 7, kind: input, shape index: {}]
  %s8 = inlined_call_operand.hbm [shape: f32[1,128], index: 8, kind: input, shape index: {}]
  %s9 = inlined_call_operand.hbm [shape: f32[2,14], index: 9, kind: output, shape index: {}]
  %s10 = sld [smem:[#allocation0]]
  $region109: #{my_model_forward.1} parent=0
    _
  %s12 = ssub.s32 1, %s10
  %s13 = scalar_select 0, %s12, %s10
  %15 = dma.hbm_to_smem %s0, 32, [#allocation4], [#allocation3]
  %16 = dma.done [#allocation3], 32
  %17 = sfence
  $region1: #{my_model_forward.1} parent=0
    #allocation5 [shape = 'u8[57344]{0}', space=vmem, size = 0xe000, scoped, tag = 'input window, operand 1, single buffered']
    #allocation6 [shape = 's32[2]{0}', space=sflag, size = 0x8, scoped, tag = 'scoped memory for my_model_forward.1']
    #allocation7 [shape = 's32[2]{0}', space=sflag, size = 0x8, scoped, tag = 'scoped memory for my_model_forward.1']
    #allocation8 [shape = 'u8[1048576]{0}', space=vmem, size = 0x100000, scoped, tag = 'input window, operand 2']
    #allocation9 [shape = 's32[2]{0}', space=sflag, size = 0x8, scoped, tag = 'scoped memory for my_model_forward.1']
    #allocation10 [shape = 'u8[1048576]{0}', space=vmem, size = 0x100000, scoped, tag = 'input window, operand 3']
    #allocation11 [shape = 'u8[8192]{0}', space=vmem, size = 0x2000, scoped, tag = 'input window, operand 4']
    #allocation12 [shape = 's32[2]{0}', space=sflag, size = 0x8, scoped, tag = 'scoped memory for my_model_forward.1']
    #allocation13 [shape = 'u8[131072]{0}', space=vmem, size = 0x20000, scoped, tag = 'input window, operand 5, single buffered']
    #allocation14 [shape = 'u8[512]{0}', space=vmem, size = 0x400, scoped, tag = 'input window, operand 6, single buffered']
    #allocation15 [shape = 's32[1]{0}', space=sflag, size = 0x4, scoped, tag = 'scoped memory for my_model_forward.1']
    #allocation16 [shape = 'u8[65536]{0}', space=vmem, size = 0x10000, scoped, tag = 'input window, operand 7, single buffered']
    #allocation17 [shape = 'u8[512]{0}', space=vmem, size = 0x400, scoped, tag = 'input window, operand 8, single buffered']
    #allocation18 [shape = 's32[1]{0}', space=sflag, size = 0x4, scoped, tag = 'scoped memory for my_model_forward.1']
    #allocation19 [shape = 'u8[1024]{0}', space=vmem, size = 0x400, scoped, tag = 'output window, operand 0, single buffered']
    %18 = vsyncpa [#allocation6], 0
    %19 = vsyncpa [#allocation9], 0
    %s20 = scalar_lea.sflag [#allocation9], 1
    %21 = vsyncpa %s20, 0
    %22 = vsyncpa [#allocation12], 0
    %s23 = scalar_lea.sflag [#allocation12], 1
    %24 = vsyncpa %s23, 0
    %25 = vsyncpa [#allocation15], 0
    %26 = vsyncpa [#allocation18], 0
    %27 = vsyncpa [#allocation7], 0
    loop: start=0, step=1, limit=5
    $region2: #{my_model_forward.1} parent=1 // loop_pre_header
      _
    $region3: #{my_model_forward.1} parent=1 // loop_header
      %s29 = sphi 0, %s33
      %p30 = scmp.ge.s32.totalorder %s29, 5
      %s37 = sphi 0, %s37
      %s39 = sphi 0, %s37
      %s40 = sphi 0, %s39
      %s54 = sphi 0, %s40
      %s60 = sphi 0, %s62
      %s63 = sphi 0, %s60
      %s64 = sphi 0, %s63
      %s80 = sphi 0, %s64
      %s86 = sphi 0, %s88
      %s89 = sphi 0, %s86
      %s90 = sphi 0, %s89
      %s106 = sphi 0, %s90
      %s112 = sphi 0, %s114
      %s115 = sphi 0, %s112
      %s116 = sphi 0, %s115
      %s132 = sphi 0, %s116
      %s136 = sphi 0, %s136
      %s138 = sphi 0, %s136
      %s139 = sphi 0, %s138
      %s153 = sphi 0, %s139
      %s157 = sphi 0, %s157
      %s159 = sphi 0, %s157
      %s160 = sphi 0, %s159
      %s174 = sphi 0, %s160
      %s178 = sphi 0, %s178
      %s180 = sphi 0, %s178
      %s181 = sphi 0, %s180
      %s195 = sphi 0, %s181
      %s199 = sphi 0, %s199
      %s201 = sphi 0, %s199
      %s202 = sphi 0, %s201
      %s216 = sphi 0, %s202
      %s220 = sphi 0, %s220
      %s222 = sphi 0, %s220
      %s223 = sphi 0, %s222
      %s237 = sphi 0, %s223
    $region4: #{my_model_forward.1} parent=1 // loop_header_branch
      %32 = sbr.rel (%p30) target = $region8
    $region5: #{my_model_forward.1} parent=1 // loop_body
      %s34 = ssub.s32 %s29, 1
      %s35 = ssub.s32 %s29, 2
      %s36 = sadd.s32 %s29, 1
      %s38 = sadd.s32 %s37, 1
      %p41 = scmp.eq.s32.totalorder %s29, 2
      %p42 = scmp.ne.s32.totalorder %s37, %s39
      %p43 = scmp.eq.s32.totalorder %s29, 0
      %p44 = por %p42, %p43
      %p45 = scmp.ne.s32.totalorder %s37, %s39
      %p46 = scmp.eq.s32.totalorder %s34, 2
      %p47 = por %p45, %p46
      %p48 = scmp.ne.s32.totalorder %s39, %s40
      %p49 = scmp.eq.s32.totalorder %s34, 0
      %p50 = por %p48, %p49
      %p51 = scmp.ne.s32.totalorder %s39, %s40
      %p52 = scmp.eq.s32.totalorder %s35, 2
      %p53 = por %p51, %p52
      %p55 = scmp.ne.s32.totalorder %s40, %s54
      %p56 = scmp.eq.s32.totalorder %s35, 0
      %p57 = por %p55, %p56
      %s58 = ssub.s32 %s29, %s36
      %p59 = scmp.eq.s32.totalorder %s58, 0
      %s61 = sadd.s32 %s60, 1
      %s62 = scalar_select %p59, %s60, %s61
      %p65 = pneg %p59
      %p66 = scmp.eq.s32.totalorder %s29, 2
      %p67 = por %p65, %p66
      %p68 = scmp.ne.s32.totalorder %s60, %s63
      %p69 = scmp.eq.s32.totalorder %s29, 0
      %p70 = por %p68, %p69
      %p71 = scmp.ne.s32.totalorder %s60, %s63
      %p72 = scmp.eq.s32.totalorder %s34, 2
      %p73 = por %p71, %p72
      %p74 = scmp.ne.s32.totalorder %s63, %s64
      %p75 = scmp.eq.s32.totalorder %s34, 0
      %p76 = por %p74, %p75
      %p77 = scmp.ne.s32.totalorder %s63, %s64
      %p78 = scmp.eq.s32.totalorder %s35, 2
      %p79 = por %p77, %p78
      %p81 = scmp.ne.s32.totalorder %s64, %s80
      %p82 = scmp.eq.s32.totalorder %s35, 0
      %p83 = por %p81, %p82
      %s84 = ssub.s32 %s29, %s36
      %p85 = scmp.eq.s32.totalorder %s84, 0
      %s87 = sadd.s32 %s86, 1
      %s88 = scalar_select %p85, %s86, %s87
      %p91 = pneg %p85
      %p92 = scmp.eq.s32.totalorder %s29, 2
      %p93 = por %p91, %p92
      %p94 = scmp.ne.s32.totalorder %s86, %s89
      %p95 = scmp.eq.s32.totalorder %s29, 0
      %p96 = por %p94, %p95
      %p97 = scmp.ne.s32.totalorder %s86, %s89
      %p98 = scmp.eq.s32.totalorder %s34, 2
      %p99 = por %p97, %p98
      %p100 = scmp.ne.s32.totalorder %s89, %s90
      %p101 = scmp.eq.s32.totalorder %s34, 0
      %p102 = por %p100, %p101
      %p103 = scmp.ne.s32.totalorder %s89, %s90
      %p104 = scmp.eq.s32.totalorder %s35, 2
      %p105 = por %p103, %p104
      %p107 = scmp.ne.s32.totalorder %s90, %s106
      %p108 = scmp.eq.s32.totalorder %s35, 0
      %p109 = por %p107, %p108
      %s110 = ssub.s32 %s29, %s36
      %p111 = scmp.eq.s32.totalorder %s110, 0
      %s113 = sadd.s32 %s112, 1
      %s114 = scalar_select %p111, %s112, %s113
      %p117 = pneg %p111
      %p118 = scmp.eq.s32.totalorder %s29, 2
      %p119 = por %p117, %p118
      %p120 = scmp.ne.s32.totalorder %s112, %s115
      %p121 = scmp.eq.s32.totalorder %s29, 0
      %p122 = por %p120, %p121
      %p123 = scmp.ne.s32.totalorder %s112, %s115
      %p124 = scmp.eq.s32.totalorder %s34, 2
      %p125 = por %p123, %p124
      %p126 = scmp.ne.s32.totalorder %s115, %s116
      %p127 = scmp.eq.s32.totalorder %s34, 0
      %p128 = por %p126, %p127
      %p129 = scmp.ne.s32.totalorder %s115, %s116
      %p130 = scmp.eq.s32.totalorder %s35, 2
      %p131 = por %p129, %p130
      %p133 = scmp.ne.s32.totalorder %s116, %s132
      %p134 = scmp.eq.s32.totalorder %s35, 0
      %p135 = por %p133, %p134
      %s137 = sadd.s32 %s136, 1
      %p140 = scmp.eq.s32.totalorder %s29, 2
      %p141 = scmp.ne.s32.totalorder %s136, %s138
      %p142 = scmp.eq.s32.totalorder %s29, 0
      %p143 = por %p141, %p142
      %p144 = scmp.ne.s32.totalorder %s136, %s138
      %p145 = scmp.eq.s32.totalorder %s34, 2
      %p146 = por %p144, %p145
      %p147 = scmp.ne.s32.totalorder %s138, %s139
      %p148 = scmp.eq.s32.totalorder %s34, 0
      %p149 = por %p147, %p148
      %p150 = scmp.ne.s32.totalorder %s138, %s139
      %p151 = scmp.eq.s32.totalorder %s35, 2
      %p152 = por %p150, %p151
      %p154 = scmp.ne.s32.totalorder %s139, %s153
      %p155 = scmp.eq.s32.totalorder %s35, 0
      %p156 = por %p154, %p155
      %s158 = sadd.s32 %s157, 1
      %p161 = scmp.eq.s32.totalorder %s29, 2
      %p162 = scmp.ne.s32.totalorder %s157, %s159
      %p163 = scmp.eq.s32.totalorder %s29, 0
      %p164 = por %p162, %p163
      %p165 = scmp.ne.s32.totalorder %s157, %s159
      %p166 = scmp.eq.s32.totalorder %s34, 2
      %p167 = por %p165, %p166
      %p168 = scmp.ne.s32.totalorder %s159, %s160
      %p169 = scmp.eq.s32.totalorder %s34, 0
      %p170 = por %p168, %p169
      %p171 = scmp.ne.s32.totalorder %s159, %s160
      %p172 = scmp.eq.s32.totalorder %s35, 2
      %p173 = por %p171, %p172
      %p175 = scmp.ne.s32.totalorder %s160, %s174
      %p176 = scmp.eq.s32.totalorder %s35, 0
      %p177 = por %p175, %p176
      %s179 = sadd.s32 %s178, 1
      %p182 = scmp.eq.s32.totalorder %s29, 2
      %p183 = scmp.ne.s32.totalorder %s178, %s180
      %p184 = scmp.eq.s32.totalorder %s29, 0
      %p185 = por %p183, %p184
      %p186 = scmp.ne.s32.totalorder %s178, %s180
      %p187 = scmp.eq.s32.totalorder %s34, 2
      %p188 = por %p186, %p187
      %p189 = scmp.ne.s32.totalorder %s180, %s181
      %p190 = scmp.eq.s32.totalorder %s34, 0
      %p191 = por %p189, %p190
      %p192 = scmp.ne.s32.totalorder %s180, %s181
      %p193 = scmp.eq.s32.totalorder %s35, 2
      %p194 = por %p192, %p193
      %p196 = scmp.ne.s32.totalorder %s181, %s195
      %p197 = scmp.eq.s32.totalorder %s35, 0
      %p198 = por %p196, %p197
      %s200 = sadd.s32 %s199, 1
      %p203 = scmp.eq.s32.totalorder %s29, 2
      %p204 = scmp.ne.s32.totalorder %s199, %s201
      %p205 = scmp.eq.s32.totalorder %s29, 0
      %p206 = por %p204, %p205
      %p207 = scmp.ne.s32.totalorder %s199, %s201
      %p208 = scmp.eq.s32.totalorder %s34, 2
      %p209 = por %p207, %p208
      %p210 = scmp.ne.s32.totalorder %s201, %s202
      %p211 = scmp.eq.s32.totalorder %s34, 0
      %p212 = por %p210, %p211
      %p213 = scmp.ne.s32.totalorder %s201, %s202
      %p214 = scmp.eq.s32.totalorder %s35, 2
      %p215 = por %p213, %p214
      %p217 = scmp.ne.s32.totalorder %s202, %s216
      %p218 = scmp.eq.s32.totalorder %s35, 0
      %p219 = por %p217, %p218
      %s221 = sadd.s32 %s220, 1
      %p224 = scmp.eq.s32.totalorder %s29, 2
      %p225 = scmp.ne.s32.totalorder %s220, %s222
      %p226 = scmp.eq.s32.totalorder %s29, 0
      %p227 = por %p225, %p226
      %p228 = scmp.ne.s32.totalorder %s220, %s222
      %p229 = scmp.eq.s32.totalorder %s34, 2
      %p230 = por %p228, %p229
      %p231 = scmp.ne.s32.totalorder %s222, %s223
      %p232 = scmp.eq.s32.totalorder %s34, 0
      %p233 = por %p231, %p232
      %p234 = scmp.ne.s32.totalorder %s222, %s223
      %p235 = scmp.eq.s32.totalorder %s35, 2
      %p236 = por %p234, %p235
      %p238 = scmp.ne.s32.totalorder %s223, %s237
      %p239 = scmp.eq.s32.totalorder %s35, 0
      %p240 = por %p238, %p239
      %p241 = scmp.le.s32.totalorder 1, %s29
      %p242 = scmp.lt.s32.totalorder %s29, 4
      %p243 = pnand %p241, %p242
      %p244 = pneg %p243
      // Predicated region
      $region9: #{my_model_forward.1} parent=5 // pred_check
        _
      $region10: #{my_model_forward.1} parent=5 // pred_check_branch
        %246 = sbr.rel (%p243) target = $region12
      $region11: #{my_model_forward.1} parent=5 // pred_region
        %s247 = ssub.s32 %s29, 1
        // Predicated region
        $region13: #{my_model_forward.1} parent=11 // pred_check
          %p248 = pneg %p50
        $region14: #{my_model_forward.1} parent=11 // pred_check_branch
          %250 = sbr.rel (%p248) target = $region16
        $region15: #{my_model_forward.1} parent=11 // pred_region
          %s252 = ssub.s32 1792, 1792
          %253 = vsyncadd [#allocation6], %s252
          %s254 = sshll.u32 [#allocation5], 4
          %s255 = int_to_ptr.vmem [resolvable:$true] %s254
          %260 = dma.hbm_to_vmem [thread:$0]  %s1, 1792, %s255, [#allocation6], 256, 256, 16
        $region16: #{my_model_forward.1} parent=11 // pred_fallthru
          _
        // Predicated region
        $region17: #{my_model_forward.1} parent=11 // pred_check
          %p261 = pneg %p149
        $region18: #{my_model_forward.1} parent=11 // pred_check_branch
          %263 = sbr.rel (%p261) target = $region20
        $region19: #{my_model_forward.1} parent=11 // pred_region
          %s265 = ssub.s32 4096, 4096
          %266 = vsyncadd [#allocation12], %s265
          %s267 = sshll.u32 [#allocation13], 4
          %s268 = int_to_ptr.vmem [resolvable:$true] %s267
          %273 = dma.hbm_to_vmem [thread:$0]  %s5, 4096, %s268, [#allocation12], 128, 128, 8
        $region20: #{my_model_forward.1} parent=11 // pred_fallthru
          _
        // Predicated region
        $region21: #{my_model_forward.1} parent=11 // pred_check
          %p274 = pneg %p170
        $region22: #{my_model_forward.1} parent=11 // pred_check_branch
          %276 = sbr.rel (%p274) target = $region24
        $region23: #{my_model_forward.1} parent=11 // pred_region
          %s278 = ssub.s32 16, 16
          %279 = vsyncadd [#allocation15], %s278
          %s281 = sshll.u32 [#allocation14], 4
          %s282 = int_to_ptr.vmem [resolvable:$true] %s281
          %284 = dma.hbm_to_vmem [thread:$0]  %s6, 16, %s282, [#allocation15]
        $region24: #{my_model_forward.1} parent=11 // pred_fallthru
          _
        // Predicated region
        $region25: #{my_model_forward.1} parent=11 // pred_check
          %p285 = pneg %p191
        $region26: #{my_model_forward.1} parent=11 // pred_check_branch
          %287 = sbr.rel (%p285) target = $region28
        $region27: #{my_model_forward.1} parent=11 // pred_region
          %s289 = ssub.s32 2048, 2048
          %290 = vsyncadd [#allocation15], %s289
          %s291 = sshll.u32 [#allocation16], 4
          %s292 = int_to_ptr.vmem [resolvable:$true] %s291
          %297 = dma.hbm_to_vmem [thread:$0]  %s7, 2048, %s292, [#allocation15], 128, 128, 8
        $region28: #{my_model_forward.1} parent=11 // pred_fallthru
          _
        // Predicated region
        $region29: #{my_model_forward.1} parent=11 // pred_check
          %p298 = pneg %p212
        $region30: #{my_model_forward.1} parent=11 // pred_check_branch
          %300 = sbr.rel (%p298) target = $region32
        $region31: #{my_model_forward.1} parent=11 // pred_region
          %s302 = ssub.s32 16, 16
          %303 = vsyncadd [#allocation18], %s302
          %s305 = sshll.u32 [#allocation17], 4
          %s306 = int_to_ptr.vmem [resolvable:$true] %s305
          %308 = dma.hbm_to_vmem [thread:$0]  %s8, 16, %s306, [#allocation18]
        $region32: #{my_model_forward.1} parent=11 // pred_fallthru
          _
      $region12: #{my_model_forward.1} parent=5 // pred_fallthru
        _
      %p309 = scmp.lt.s32.totalorder %s29, 3
      // Predicated region
      $region33: #{my_model_forward.1} parent=5 // pred_check
        %p310 = pneg %p309
      $region34: #{my_model_forward.1} parent=5 // pred_check_branch
        %312 = sbr.rel (%p310) target = $region36
      $region35: #{my_model_forward.1} parent=5 // pred_region
        // Predicated region
        $region37: #{my_model_forward.1} parent=35 // pred_check
          %p313 = pneg %p70
        $region38: #{my_model_forward.1} parent=35 // pred_check_branch
          %315 = sbr.rel (%p313) target = $region40
        $region39: #{my_model_forward.1} parent=35 // pred_region
          %s316 = sand.u32 %s29, 1
          %s317 = scalar_lea.sflag [#allocation9], %s316
          %s318 = sand.u32 %s60, 1
          %s319 = smul.addr %s318, 1024
          %s320 = scalar_lea.vmem [#allocation8], %s319
          %s322 = ssub.s32 16384, 16384
          %323 = vsyncadd %s317, %s322
          %s324 = smul.addr %s29, 256
          %s325 = smul.addr %s324, 64
          %s326 = scalar_lea.hbm %s2, %s325
          %s327 = sshll.u32 %s320, 4
          %s328 = int_to_ptr.vmem [resolvable:$true] %s327
          %333 = dma.hbm_to_vmem [thread:$0]  %s326, 16384, %s328, %s317, 256, 256, 16
        $region40: #{my_model_forward.1} parent=35 // pred_fallthru
          _
        // Predicated region
        $region41: #{my_model_forward.1} parent=35 // pred_check
          %p334 = pneg %p96
        $region42: #{my_model_forward.1} parent=35 // pred_check_branch
          %336 = sbr.rel (%p334) target = $region44
        $region43: #{my_model_forward.1} parent=35 // pred_region
          %s337 = sand.u32 %s29, 1
          %s338 = scalar_lea.sflag [#allocation9], %s337
          %s339 = sand.u32 %s86, 1
          %s340 = smul.addr %s339, 1024
          %s341 = scalar_lea.vmem [#allocation10], %s340
          %s343 = ssub.s32 16384, 16384
          %344 = vsyncadd %s338, %s343
          %s345 = smul.addr %s29, 256
          %s346 = smul.addr %s345, 64
          %s347 = scalar_lea.hbm %s3, %s346
          %s348 = sshll.u32 %s341, 4
          %s349 = int_to_ptr.vmem [resolvable:$true] %s348
          %354 = dma.hbm_to_vmem [thread:$0]  %s347, 16384, %s349, %s338, 512, 512, 32
        $region44: #{my_model_forward.1} parent=35 // pred_fallthru
          _
        // Predicated region
        $region45: #{my_model_forward.1} parent=35 // pred_check
          %p355 = pneg %p122
        $region46: #{my_model_forward.1} parent=35 // pred_check_branch
          %357 = sbr.rel (%p355) target = $region48
        $region47: #{my_model_forward.1} parent=35 // pred_region
          %s358 = sand.u32 %s29, 1
          %s359 = scalar_lea.sflag [#allocation12], %s358
          %s360 = sand.u32 %s112, 1
          %s361 = smul.addr %s360, 8
          %s362 = scalar_lea.vmem [#allocation11], %s361
          %s364 = ssub.s32 128, 128
          %365 = vsyncadd %s359, %s364
          %s366 = smul.addr %s29, 8
          %s367 = smul.addr %s366, 16
          %s368 = scalar_lea.hbm %s4, %s367
          %s369 = sshll.u32 %s362, 4
          %s370 = int_to_ptr.vmem [resolvable:$true] %s369
          %375 = dma.hbm_to_vmem [thread:$0]  %s368, 128, %s370, %s359, 64, 64, 4
        $region48: #{my_model_forward.1} parent=35 // pred_fallthru
          _
      $region36: #{my_model_forward.1} parent=5 // pred_fallthru
        _
      %p376 = scmp.le.s32.totalorder 1, %s29
      %p377 = scmp.lt.s32.totalorder %s29, 4
      %p378 = pnand %p376, %p377
      %p379 = pneg %p378
      // Predicated region
      $region49: #{my_model_forward.1} parent=5 // pred_check
        _
      $region50: #{my_model_forward.1} parent=5 // pred_check_branch
        %381 = sbr.rel (%p378) target = $region52
      $region51: #{my_model_forward.1} parent=5 // pred_region
        %s382 = ssub.s32 %s29, 1
        // Predicated region
        $region53: #{my_model_forward.1} parent=51 // pred_check
          %p383 = pneg %p50
        $region54: #{my_model_forward.1} parent=51 // pred_check_branch
          %385 = sbr.rel (%p383) target = $region56
        $region55: #{my_model_forward.1} parent=51 // pred_region
          %386 = dma.done [#allocation6], 1792
        $region56: #{my_model_forward.1} parent=51 // pred_fallthru
          _
        %s387 = sand.u32 %s34, 1
        %s388 = scalar_lea.sflag [#allocation9], %s387
        %s389 = sand.u32 %s63, 1
        %s390 = smul.addr %s389, 1024
        %s391 = scalar_lea.vmem [#allocation8], %s390
        // Predicated region
        $region57: #{my_model_forward.1} parent=51 // pred_check
          %p392 = pneg %p76
        $region58: #{my_model_forward.1} parent=51 // pred_check_branch
          %394 = sbr.rel (%p392) target = $region60
        $region59: #{my_model_forward.1} parent=51 // pred_region
          %395 = dma.done %s388, 16384
        $region60: #{my_model_forward.1} parent=51 // pred_fallthru
          _
        %s396 = sand.u32 %s34, 1
        %s397 = scalar_lea.sflag [#allocation9], %s396
        %s398 = sand.u32 %s89, 1
        %s399 = smul.addr %s398, 1024
        %s400 = scalar_lea.vmem [#allocation10], %s399
        // Predicated region
        $region61: #{my_model_forward.1} parent=51 // pred_check
          %p401 = pneg %p102
        $region62: #{my_model_forward.1} parent=51 // pred_check_branch
          %403 = sbr.rel (%p401) target = $region64
        $region63: #{my_model_forward.1} parent=51 // pred_region
          %404 = dma.done %s397, 16384
        $region64: #{my_model_forward.1} parent=51 // pred_fallthru
          _
        %s405 = sand.u32 %s34, 1
        %s406 = scalar_lea.sflag [#allocation12], %s405
        %s407 = sand.u32 %s115, 1
        %s408 = smul.addr %s407, 8
        %s409 = scalar_lea.vmem [#allocation11], %s408
        // Predicated region
        $region65: #{my_model_forward.1} parent=51 // pred_check
          %p410 = pneg %p128
        $region66: #{my_model_forward.1} parent=51 // pred_check_branch
          %412 = sbr.rel (%p410) target = $region68
        $region67: #{my_model_forward.1} parent=51 // pred_region
          %413 = dma.done %s406, 128
        $region68: #{my_model_forward.1} parent=51 // pred_fallthru
          _
        // Predicated region
        $region69: #{my_model_forward.1} parent=51 // pred_check
          %p414 = pneg %p149
        $region70: #{my_model_forward.1} parent=51 // pred_check_branch
          %416 = sbr.rel (%p414) target = $region72
        $region71: #{my_model_forward.1} parent=51 // pred_region
          %417 = dma.done [#allocation12], 4096
        $region72: #{my_model_forward.1} parent=51 // pred_fallthru
          _
        // Predicated region
        $region73: #{my_model_forward.1} parent=51 // pred_check
          %p418 = pneg %p170
        $region74: #{my_model_forward.1} parent=51 // pred_check_branch
          %420 = sbr.rel (%p418) target = $region76
        $region75: #{my_model_forward.1} parent=51 // pred_region
          %421 = dma.done [#allocation15], 16
        $region76: #{my_model_forward.1} parent=51 // pred_fallthru
          _
        // Predicated region
        $region77: #{my_model_forward.1} parent=51 // pred_check
          %p422 = pneg %p191
        $region78: #{my_model_forward.1} parent=51 // pred_check_branch
          %424 = sbr.rel (%p422) target = $region80
        $region79: #{my_model_forward.1} parent=51 // pred_region
          %425 = dma.done [#allocation15], 2048
        $region80: #{my_model_forward.1} parent=51 // pred_fallthru
          _
        // Predicated region
        $region81: #{my_model_forward.1} parent=51 // pred_check
          %p426 = pneg %p212
        $region82: #{my_model_forward.1} parent=51 // pred_check_branch
          %428 = sbr.rel (%p426) target = $region84
        $region83: #{my_model_forward.1} parent=51 // pred_region
          %429 = dma.done [#allocation18], 16
        $region84: #{my_model_forward.1} parent=51 // pred_fallthru
          _
        %p430 = pneg %p50
        %p431 = pneg %p47
        %s432 = sand.u32 %s34, 1
        %s433 = scalar_lea.sflag [#allocation9], %s432
        %s434 = sand.u32 %s63, 1
        %s435 = smul.addr %s434, 1024
        %s436 = scalar_lea.vmem [#allocation8], %s435
        %p437 = pneg %p76
        %p438 = pneg %p73
        %s439 = sand.u32 %s34, 1
        %s440 = scalar_lea.sflag [#allocation9], %s439
        %s441 = sand.u32 %s89, 1
        %s442 = smul.addr %s441, 1024
        %s443 = scalar_lea.vmem [#allocation10], %s442
        %p444 = pneg %p102
        %p445 = pneg %p99
        %s446 = sand.u32 %s34, 1
        %s447 = scalar_lea.sflag [#allocation12], %s446
        %s448 = sand.u32 %s115, 1
        %s449 = smul.addr %s448, 8
        %s450 = scalar_lea.vmem [#allocation11], %s449
        %p451 = pneg %p128
        %p452 = pneg %p125
        %p453 = pneg %p149
        %p454 = pneg %p146
        %p455 = pneg %p170
        %p456 = pneg %p167
        %p457 = pneg %p191
        %p458 = pneg %p188
        %p459 = pneg %p212
        %p460 = pneg %p209
        %p461 = pneg %p233
        %p462 = pneg %p230
        %p463 = scmp.eq.s32.totalorder %s34, 0
        // Predicated region
        $region85: #{my_model_forward.1} parent=51 // pred_check
          %p464 = pneg %p463
        $region86: #{my_model_forward.1} parent=51 // pred_check_branch
          %466 = sbr.rel (%p464) target = $region88
        $region87: #{my_model_forward.1} parent=51 // pred_region
          %s467 = sld [smem:[#allocation4]]
          %s468 = sshra.s32 %s467, 3
          %s469 = sand.u32 %s467, 7
          %s470 = sshra.s32 %s467, 3
          %s471 = sand.u32 %s467, 7
          %s472 = smul.u32 %s468, 2
          %s473 = smul.u32 %s472, 8
          %s474 = sadd.s32 %s473, %s471
          %s475 = scalar_lea.vmem [#allocation5], %s474
          %v476 = vld [vmem:[%s475] ss:$8 sm:$0x3]
          %v477 = vlaneseq
          %vm478 = vcmp.ge.s32.totalorder %v477, 0
          %vm479 = vcmp.lt.s32.totalorder %v477, 256
          %vm480 = vmand %vm478, %vm479
          %481 = vst.msk [vmem:[#allocation2] ss:$8 sm:$0x3] %vm480, %v476
          %482 = vst.msk [vmem:[#allocation2] ss:$8 sm:$0x0] %vm480, %v476
          %s483 = sld [smem:[#allocation4 + $0x80]]
          %s484 = sshra.s32 %s483, 3
          %s485 = sand.u32 %s483, 7
          %s486 = sshra.s32 %s483, 3
          %s487 = sand.u32 %s483, 7
          %s488 = smul.u32 %s484, 2
          %s489 = smul.u32 %s488, 8
          %s490 = sadd.s32 %s489, %s487
          %s491 = scalar_lea.vmem [#allocation5], %s490
          %v492 = vld [vmem:[%s491] ss:$8 sm:$0x3]
          %s493 = scalar_lea.vmem [#allocation2], 1
          %494 = vst.msk [vmem:[%s493] ss:$8 sm:$0x3] %vm480, %v492
          %495 = vst.msk [vmem:[%s493] ss:$8 sm:$0x0] %vm480, %v492
          %s496 = sld [smem:[#allocation4 + $0x1]]
          %s497 = sshra.s32 %s496, 3
          %s498 = sand.u32 %s496, 7
          %s499 = sshra.s32 %s496, 3
          %s500 = sand.u32 %s496, 7
          %s501 = smul.u32 %s497, 2
          %s502 = smul.u32 %s501, 8
          %s503 = sadd.s32 %s502, %s500
          %s504 = scalar_lea.vmem [#allocation5], %s503
          %v505 = vld [vmem:[%s504] ss:$8 sm:$0x3]
          %s506 = scalar_lea.vmem [#allocation2], 2
          %507 = vst.msk [vmem:[%s506] ss:$8 sm:$0x3] %vm480, %v505
          %508 = vst.msk [vmem:[%s506] ss:$8 sm:$0x0] %vm480, %v505
          %s509 = sld [smem:[#allocation4 + $0x81]]
          %s510 = sshra.s32 %s509, 3
          %s511 = sand.u32 %s509, 7
          %s512 = sshra.s32 %s509, 3
          %s513 = sand.u32 %s509, 7
          %s514 = smul.u32 %s510, 2
          %s515 = smul.u32 %s514, 8
          %s516 = sadd.s32 %s515, %s513
          %s517 = scalar_lea.vmem [#allocation5], %s516
          %v518 = vld [vmem:[%s517] ss:$8 sm:$0x3]
          %s519 = scalar_lea.vmem [#allocation2], 3
          %520 = vst.msk [vmem:[%s519] ss:$8 sm:$0x3] %vm480, %v518
          %521 = vst.msk [vmem:[%s519] ss:$8 sm:$0x0] %vm480, %v518
          %s522 = sld [smem:[#allocation4 + $0x2]]
          %s523 = sshra.s32 %s522, 3
          %s524 = sand.u32 %s522, 7
          %s525 = sshra.s32 %s522, 3
          %s526 = sand.u32 %s522, 7
          %s527 = smul.u32 %s523, 2
          %s528 = smul.u32 %s527, 8
          %s529 = sadd.s32 %s528, %s526
          %s530 = scalar_lea.vmem [#allocation5], %s529
          %v531 = vld [vmem:[%s530] ss:$8 sm:$0x3]
          %s532 = scalar_lea.vmem [#allocation2], 4
          %533 = vst.msk [vmem:[%s532] ss:$8 sm:$0x3] %vm480, %v531
          %534 = vst.msk [vmem:[%s532] ss:$8 sm:$0x0] %vm480, %v531
          %s535 = sld [smem:[#allocation4 + $0x82]]
          %s536 = sshra.s32 %s535, 3
          %s537 = sand.u32 %s535, 7
          %s538 = sshra.s32 %s535, 3
          %s539 = sand.u32 %s535, 7
          %s540 = smul.u32 %s536, 2
          %s541 = smul.u32 %s540, 8
          %s542 = sadd.s32 %s541, %s539
          %s543 = scalar_lea.vmem [#allocation5], %s542
          %v544 = vld [vmem:[%s543] ss:$8 sm:$0x3]
          %s545 = scalar_lea.vmem [#allocation2], 5
          %546 = vst.msk [vmem:[%s545] ss:$8 sm:$0x3] %vm480, %v544
          %547 = vst.msk [vmem:[%s545] ss:$8 sm:$0x0] %vm480, %v544
          %s548 = sld [smem:[#allocation4 + $0x3]]
          %s549 = sshra.s32 %s548, 3
          %s550 = sand.u32 %s548, 7
          %s551 = sshra.s32 %s548, 3
          %s552 = sand.u32 %s548, 7
          %s553 = smul.u32 %s549, 2
          %s554 = smul.u32 %s553, 8
          %s555 = sadd.s32 %s554, %s552
          %s556 = scalar_lea.vmem [#allocation5], %s555
          %v557 = vld [vmem:[%s556] ss:$8 sm:$0x3]
          %s558 = scalar_lea.vmem [#allocation2], 6
          %559 = vst.msk [vmem:[%s558] ss:$8 sm:$0x3] %vm480, %v557
          %560 = vst.msk [vmem:[%s558] ss:$8 sm:$0x0] %vm480, %v557
          %s561 = sld [smem:[#allocation4 + $0x83]]
          %s562 = sshra.s32 %s561, 3
          %s563 = sand.u32 %s561, 7
          %s564 = sshra.s32 %s561, 3
          %s565 = sand.u32 %s561, 7
          %s566 = smul.u32 %s562, 2
          %s567 = smul.u32 %s566, 8
          %s568 = sadd.s32 %s567, %s565
          %s569 = scalar_lea.vmem [#allocation5], %s568
          %v570 = vld [vmem:[%s569] ss:$8 sm:$0x3]
          %s571 = scalar_lea.vmem [#allocation2], 7
          %572 = vst.msk [vmem:[%s571] ss:$8 sm:$0x3] %vm480, %v570
          %573 = vst.msk [vmem:[%s571] ss:$8 sm:$0x0] %vm480, %v570
          %s574 = sld [smem:[#allocation4 + $0x4]]
          %s575 = sshra.s32 %s574, 3
          %s576 = sand.u32 %s574, 7
          %s577 = sshra.s32 %s574, 3
          %s578 = sand.u32 %s574, 7
          %s579 = smul.u32 %s575, 2
          %s580 = smul.u32 %s579, 8
          %s581 = sadd.s32 %s580, %s578
          %s582 = scalar_lea.vmem [#allocation5], %s581
          %v583 = vld [vmem:[%s582] ss:$8 sm:$0x3]
          %s584 = scalar_lea.vmem [#allocation2], 16
          %585 = vst.msk [vmem:[%s584] ss:$8 sm:$0x3] %vm480, %v583
          %586 = vst.msk [vmem:[%s584] ss:$8 sm:$0x0] %vm480, %v583
          %s587 = sld [smem:[#allocation4 + $0x84]]
          %s588 = sshra.s32 %s587, 3
          %s589 = sand.u32 %s587, 7
          %s590 = sshra.s32 %s587, 3
          %s591 = sand.u32 %s587, 7
          %s592 = smul.u32 %s588, 2
          %s593 = smul.u32 %s592, 8
          %s594 = sadd.s32 %s593, %s591
          %s595 = scalar_lea.vmem [#allocation5], %s594
          %v596 = vld [vmem:[%s595] ss:$8 sm:$0x3]
          %s597 = scalar_lea.vmem [#allocation2], 17
          %598 = vst.msk [vmem:[%s597] ss:$8 sm:$0x3] %vm480, %v596
          %599 = vst.msk [vmem:[%s597] ss:$8 sm:$0x0] %vm480, %v596
          %s600 = sld [smem:[#allocation4 + $0x5]]
          %s601 = sshra.s32 %s600, 3
          %s602 = sand.u32 %s600, 7
          %s603 = sshra.s32 %s600, 3
          %s604 = sand.u32 %s600, 7
          %s605 = smul.u32 %s601, 2
          %s606 = smul.u32 %s605, 8
          %s607 = sadd.s32 %s606, %s604
          %s608 = scalar_lea.vmem [#allocation5], %s607
          %v609 = vld [vmem:[%s608] ss:$8 sm:$0x3]
          %s610 = scalar_lea.vmem [#allocation2], 18
          %611 = vst.msk [vmem:[%s610] ss:$8 sm:$0x3] %vm480, %v609
          %612 = vst.msk [vmem:[%s610] ss:$8 sm:$0x0] %vm480, %v609
          %s613 = sld [smem:[#allocation4 + $0x85]]
          %s614 = sshra.s32 %s613, 3
          %s615 = sand.u32 %s613, 7
          %s616 = sshra.s32 %s613, 3
          %s617 = sand.u32 %s613, 7
          %s618 = smul.u32 %s614, 2
          %s619 = smul.u32 %s618, 8
          %s620 = sadd.s32 %s619, %s617
          %s621 = scalar_lea.vmem [#allocation5], %s620
          %v622 = vld [vmem:[%s621] ss:$8 sm:$0x3]
          %s623 = scalar_lea.vmem [#allocation2], 19
          %624 = vst.msk [vmem:[%s623] ss:$8 sm:$0x3] %vm480, %v622
          %625 = vst.msk [vmem:[%s623] ss:$8 sm:$0x0] %vm480, %v622
          %s626 = sld [smem:[#allocation4 + $0x6]]
          %s627 = sshra.s32 %s626, 3
          %s628 = sand.u32 %s626, 7
          %s629 = sshra.s32 %s626, 3
          %s630 = sand.u32 %s626, 7
          %s631 = smul.u32 %s627, 2
          %s632 = smul.u32 %s631, 8
          %s633 = sadd.s32 %s632, %s630
          %s634 = scalar_lea.vmem [#allocation5], %s633
          %v635 = vld [vmem:[%s634] ss:$8 sm:$0x3]
          %s636 = scalar_lea.vmem [#allocation2], 20
          %637 = vst.msk [vmem:[%s636] ss:$8 sm:$0x3] %vm480, %v635
          %638 = vst.msk [vmem:[%s636] ss:$8 sm:$0x0] %vm480, %v635
          %s639 = sld [smem:[#allocation4 + $0x86]]
          %s640 = sshra.s32 %s639, 3
          %s641 = sand.u32 %s639, 7
          %s642 = sshra.s32 %s639, 3
          %s643 = sand.u32 %s639, 7
          %s644 = smul.u32 %s640, 2
          %s645 = smul.u32 %s644, 8
          %s646 = sadd.s32 %s645, %s643
          %s647 = scalar_lea.vmem [#allocation5], %s646
          %v648 = vld [vmem:[%s647] ss:$8 sm:$0x3]
          %s649 = scalar_lea.vmem [#allocation2], 21
          %650 = vst.msk [vmem:[%s649] ss:$8 sm:$0x3] %vm480, %v648
          %651 = vst.msk [vmem:[%s649] ss:$8 sm:$0x0] %vm480, %v648
          %s652 = sld [smem:[#allocation4 + $0x7]]
          %s653 = sshra.s32 %s652, 3
          %s654 = sand.u32 %s652, 7
          %s655 = sshra.s32 %s652, 3
          %s656 = sand.u32 %s652, 7
          %s657 = smul.u32 %s653, 2
          %s658 = smul.u32 %s657, 8
          %s659 = sadd.s32 %s658, %s656
          %s660 = scalar_lea.vmem [#allocation5], %s659
          %v661 = vld [vmem:[%s660] ss:$8 sm:$0x3]
          %s662 = scalar_lea.vmem [#allocation2], 22
          %663 = vst.msk [vmem:[%s662] ss:$8 sm:$0x3] %vm480, %v661
          %664 = vst.msk [vmem:[%s662] ss:$8 sm:$0x0] %vm480, %v661
          %s665 = sld [smem:[#allocation4 + $0x87]]
          %s666 = sshra.s32 %s665, 3
          %s667 = sand.u32 %s665, 7
          %s668 = sshra.s32 %s665, 3
          %s669 = sand.u32 %s665, 7
          %s670 = smul.u32 %s666, 2
          %s671 = smul.u32 %s670, 8
          %s672 = sadd.s32 %s671, %s669
          %s673 = scalar_lea.vmem [#allocation5], %s672
          %v674 = vld [vmem:[%s673] ss:$8 sm:$0x3]
          %s675 = scalar_lea.vmem [#allocation2], 23
          %676 = vst.msk [vmem:[%s675] ss:$8 sm:$0x3] %vm480, %v674
          %677 = vst.msk [vmem:[%s675] ss:$8 sm:$0x0] %vm480, %v674
        $region88: #{my_model_forward.1} parent=51 // pred_fallthru
          _
        %v678 = vld [vmem:[#allocation2] sm:$0xff]
        %v679 = vld [vmem:[#allocation2 + $0x8] sm:$0xff]
        %v680 = vld [vmem:[#allocation2 + $0x10] sm:$0xff]
        %v681 = vld [vmem:[#allocation2 + $0x18] sm:$0xff]
        %v682 = vpack.c.bf16 %v680, %v678
        %v683 = vpack.c.bf16 %v681, %v679
        %v684 = vld [vmem:[%s391] sm:$0xff]
        %v685 = vld [vmem:[%s391 + $0x8] sm:$0xff]
        %v686 = vld [vmem:[%s391 + $0x10] sm:$0xff]
        %v687 = vld [vmem:[%s391 + $0x18] sm:$0xff]
        %v688 = vld [vmem:[%s391 + $0x20] sm:$0xff]
        %v689 = vld [vmem:[%s391 + $0x28] sm:$0xff]
        %v690 = vld [vmem:[%s391 + $0x30] sm:$0xff]
        %v691 = vld [vmem:[%s391 + $0x38] sm:$0xff]
        %v692 = vld [vmem:[%s391 + $0x40] sm:$0xff]
        %v693 = vld [vmem:[%s391 + $0x48] sm:$0xff]
        %v694 = vld [vmem:[%s391 + $0x50] sm:$0xff]
        %v695 = vld [vmem:[%s391 + $0x58] sm:$0xff]
        %v696 = vld [vmem:[%s391 + $0x60] sm:$0xff]
        %v697 = vld [vmem:[%s391 + $0x68] sm:$0xff]
        %v698 = vld [vmem:[%s391 + $0x70] sm:$0xff]
        %v699 = vld [vmem:[%s391 + $0x78] sm:$0xff]
        %v700 = vld [vmem:[%s391 + $0x80] sm:$0xff]
        %v701 = vld [vmem:[%s391 + $0x88] sm:$0xff]
        %v702 = vld [vmem:[%s391 + $0x90] sm:$0xff]
        %v703 = vld [vmem:[%s391 + $0x98] sm:$0xff]
        %v704 = vld [vmem:[%s391 + $0xa0] sm:$0xff]
        %v705 = vld [vmem:[%s391 + $0xa8] sm:$0xff]
        %v706 = vld [vmem:[%s391 + $0xb0] sm:$0xff]
        %v707 = vld [vmem:[%s391 + $0xb8] sm:$0xff]
        %v708 = vld [vmem:[%s391 + $0xc0] sm:$0xff]
        %v709 = vld [vmem:[%s391 + $0xc8] sm:$0xff]
        %v710 = vld [vmem:[%s391 + $0xd0] sm:$0xff]
        %v711 = vld [vmem:[%s391 + $0xd8] sm:$0xff]
        %v712 = vld [vmem:[%s391 + $0xe0] sm:$0xff]
        %v713 = vld [vmem:[%s391 + $0xe8] sm:$0xff]
        %v714 = vld [vmem:[%s391 + $0xf0] sm:$0xff]
        %v715 = vld [vmem:[%s391 + $0xf8] sm:$0xff]
        %v716 = vld [vmem:[%s391 + $0x100] sm:$0xff]
        %v717 = vld [vmem:[%s391 + $0x108] sm:$0xff]
        %v718 = vld [vmem:[%s391 + $0x110] sm:$0xff]
        %v719 = vld [vmem:[%s391 + $0x118] sm:$0xff]
        %v720 = vld [vmem:[%s391 + $0x120] sm:$0xff]
        %v721 = vld [vmem:[%s391 + $0x128] sm:$0xff]
        %v722 = vld [vmem:[%s391 + $0x130] sm:$0xff]
        %v723 = vld [vmem:[%s391 + $0x138] sm:$0xff]
        %v724 = vld [vmem:[%s391 + $0x140] sm:$0xff]
        %v725 = vld [vmem:[%s391 + $0x148] sm:$0xff]
        %v726 = vld [vmem:[%s391 + $0x150] sm:$0xff]
        %v727 = vld [vmem:[%s391 + $0x158] sm:$0xff]
        %v728 = vld [vmem:[%s391 + $0x160] sm:$0xff]
        %v729 = vld [vmem:[%s391 + $0x168] sm:$0xff]
        %v730 = vld [vmem:[%s391 + $0x170] sm:$0xff]
        %v731 = vld [vmem:[%s391 + $0x178] sm:$0xff]
        %v732 = vld [vmem:[%s391 + $0x180] sm:$0xff]
        %v733 = vld [vmem:[%s391 + $0x188] sm:$0xff]
        %v734 = vld [vmem:[%s391 + $0x190] sm:$0xff]
        %v735 = vld [vmem:[%s391 + $0x198] sm:$0xff]
        %v736 = vld [vmem:[%s391 + $0x1a0] sm:$0xff]
        %v737 = vld [vmem:[%s391 + $0x1a8] sm:$0xff]
        %v738 = vld [vmem:[%s391 + $0x1b0] sm:$0xff]
        %v739 = vld [vmem:[%s391 + $0x1b8] sm:$0xff]
        %v740 = vld [vmem:[%s391 + $0x1c0] sm:$0xff]
        %v741 = vld [vmem:[%s391 + $0x1c8] sm:$0xff]
        %v742 = vld [vmem:[%s391 + $0x1d0] sm:$0xff]
        %v743 = vld [vmem:[%s391 + $0x1d8] sm:$0xff]
        %v744 = vld [vmem:[%s391 + $0x1e0] sm:$0xff]
        %v745 = vld [vmem:[%s391 + $0x1e8] sm:$0xff]
        %v746 = vld [vmem:[%s391 + $0x1f0] sm:$0xff]
        %v747 = vld [vmem:[%s391 + $0x1f8] sm:$0xff]
        %s748 = scalar_lea.vmem %s391, 512 [#allocation8]
        %v749 = vld [vmem:[%s748] sm:$0xff]
        %v750 = vld [vmem:[%s748 + $0x8] sm:$0xff]
        %v751 = vld [vmem:[%s748 + $0x10] sm:$0xff]
        %v752 = vld [vmem:[%s748 + $0x18] sm:$0xff]
        %v753 = vld [vmem:[%s748 + $0x20] sm:$0xff]
        %v754 = vld [vmem:[%s748 + $0x28] sm:$0xff]
        %v755 = vld [vmem:[%s748 + $0x30] sm:$0xff]
        %v756 = vld [vmem:[%s748 + $0x38] sm:$0xff]
        %v757 = vld [vmem:[%s748 + $0x40] sm:$0xff]
        %v758 = vld [vmem:[%s748 + $0x48] sm:$0xff]
        %v759 = vld [vmem:[%s748 + $0x50] sm:$0xff]
        %v760 = vld [vmem:[%s748 + $0x58] sm:$0xff]
        %v761 = vld [vmem:[%s748 + $0x60] sm:$0xff]
        %v762 = vld [vmem:[%s748 + $0x68] sm:$0xff]
        %v763 = vld [vmem:[%s748 + $0x70] sm:$0xff]
        %v764 = vld [vmem:[%s748 + $0x78] sm:$0xff]
        %v765 = vld [vmem:[%s748 + $0x80] sm:$0xff]
        %v766 = vld [vmem:[%s748 + $0x88] sm:$0xff]
        %v767 = vld [vmem:[%s748 + $0x90] sm:$0xff]
        %v768 = vld [vmem:[%s748 + $0x98] sm:$0xff]
        %v769 = vld [vmem:[%s748 + $0xa0] sm:$0xff]
        %v770 = vld [vmem:[%s748 + $0xa8] sm:$0xff]
        %v771 = vld [vmem:[%s748 + $0xb0] sm:$0xff]
        %v772 = vld [vmem:[%s748 + $0xb8] sm:$0xff]
        %v773 = vld [vmem:[%s748 + $0xc0] sm:$0xff]
        %v774 = vld [vmem:[%s748 + $0xc8] sm:$0xff]
        %v775 = vld [vmem:[%s748 + $0xd0] sm:$0xff]
        %v776 = vld [vmem:[%s748 + $0xd8] sm:$0xff]
        %v777 = vld [vmem:[%s748 + $0xe0] sm:$0xff]
        %v778 = vld [vmem:[%s748 + $0xe8] sm:$0xff]
        %v779 = vld [vmem:[%s748 + $0xf0] sm:$0xff]
        %v780 = vld [vmem:[%s748 + $0xf8] sm:$0xff]
        %v781 = vld [vmem:[%s748 + $0x100] sm:$0xff]
        %v782 = vld [vmem:[%s748 + $0x108] sm:$0xff]
        %v783 = vld [vmem:[%s748 + $0x110] sm:$0xff]
        %v784 = vld [vmem:[%s748 + $0x118] sm:$0xff]
        %v785 = vld [vmem:[%s748 + $0x120] sm:$0xff]
        %v786 = vld [vmem:[%s748 + $0x128] sm:$0xff]
        %v787 = vld [vmem:[%s748 + $0x130] sm:$0xff]
        %v788 = vld [vmem:[%s748 + $0x138] sm:$0xff]
        %v789 = vld [vmem:[%s748 + $0x140] sm:$0xff]
        %v790 = vld [vmem:[%s748 + $0x148] sm:$0xff]
        %v791 = vld [vmem:[%s748 + $0x150] sm:$0xff]
        %v792 = vld [vmem:[%s748 + $0x158] sm:$0xff]
        %v793 = vld [vmem:[%s748 + $0x160] sm:$0xff]
        %v794 = vld [vmem:[%s748 + $0x168] sm:$0xff]
        %v795 = vld [vmem:[%s748 + $0x170] sm:$0xff]
        %v796 = vld [vmem:[%s748 + $0x178] sm:$0xff]
        %v797 = vld [vmem:[%s748 + $0x180] sm:$0xff]
        %v798 = vld [vmem:[%s748 + $0x188] sm:$0xff]
        %v799 = vld [vmem:[%s748 + $0x190] sm:$0xff]
        %v800 = vld [vmem:[%s748 + $0x198] sm:$0xff]
        %v801 = vld [vmem:[%s748 + $0x1a0] sm:$0xff]
        %v802 = vld [vmem:[%s748 + $0x1a8] sm:$0xff]
        %v803 = vld [vmem:[%s748 + $0x1b0] sm:$0xff]
        %v804 = vld [vmem:[%s748 + $0x1b8] sm:$0xff]
        %v805 = vld [vmem:[%s748 + $0x1c0] sm:$0xff]
        %v806 = vld [vmem:[%s748 + $0x1c8] sm:$0xff]
        %v807 = vld [vmem:[%s748 + $0x1d0] sm:$0xff]
        %v808 = vld [vmem:[%s748 + $0x1d8] sm:$0xff]
        %v809 = vld [vmem:[%s748 + $0x1e0] sm:$0xff]
        %v810 = vld [vmem:[%s748 + $0x1e8] sm:$0xff]
        %v811 = vld [vmem:[%s748 + $0x1f0] sm:$0xff]
        %v812 = vld [vmem:[%s748 + $0x1f8] sm:$0xff]
        %v813 = vld [vmem:[%s400] sm:$0xff]
        %v814 = vld [vmem:[%s400 + $0x8] sm:$0xff]
        %v815 = vld [vmem:[%s400 + $0x10] sm:$0xff]
        %v816 = vld [vmem:[%s400 + $0x18] sm:$0xff]
        %v817 = vld [vmem:[%s400 + $0x20] sm:$0xff]
        %v818 = vld [vmem:[%s400 + $0x28] sm:$0xff]
        %v819 = vld [vmem:[%s400 + $0x30] sm:$0xff]
        %v820 = vld [vmem:[%s400 + $0x38] sm:$0xff]
        %v821 = vld [vmem:[%s400 + $0x40] sm:$0xff]
        %v822 = vld [vmem:[%s400 + $0x48] sm:$0xff]
        %v823 = vld [vmem:[%s400 + $0x50] sm:$0xff]
        %v824 = vld [vmem:[%s400 + $0x58] sm:$0xff]
        %v825 = vld [vmem:[%s400 + $0x60] sm:$0xff]
        %v826 = vld [vmem:[%s400 + $0x68] sm:$0xff]
        %v827 = vld [vmem:[%s400 + $0x70] sm:$0xff]
        %v828 = vld [vmem:[%s400 + $0x78] sm:$0xff]
        %v829 = vld [vmem:[%s400 + $0x80] sm:$0xff]
        %v830 = vld [vmem:[%s400 + $0x88] sm:$0xff]
        %v831 = vld [vmem:[%s400 + $0x90] sm:$0xff]
        %v832 = vld [vmem:[%s400 + $0x98] sm:$0xff]
        %v833 = vld [vmem:[%s400 + $0xa0] sm:$0xff]
        %v834 = vld [vmem:[%s400 + $0xa8] sm:$0xff]
        %v835 = vld [vmem:[%s400 + $0xb0] sm:$0xff]
        %v836 = vld [vmem:[%s400 + $0xb8] sm:$0xff]
        %v837 = vld [vmem:[%s400 + $0xc0] sm:$0xff]
        %v838 = vld [vmem:[%s400 + $0xc8] sm:$0xff]
        %v839 = vld [vmem:[%s400 + $0xd0] sm:$0xff]
        %v840 = vld [vmem:[%s400 + $0xd8] sm:$0xff]
        %v841 = vld [vmem:[%s400 + $0xe0] sm:$0xff]
        %v842 = vld [vmem:[%s400 + $0xe8] sm:$0xff]
        %v843 = vld [vmem:[%s400 + $0xf0] sm:$0xff]
        %v844 = vld [vmem:[%s400 + $0xf8] sm:$0xff]
        %v845 = vld [vmem:[%s400 + $0x100] sm:$0xff]
        %v846 = vld [vmem:[%s400 + $0x108] sm:$0xff]
        %v847 = vld [vmem:[%s400 + $0x110] sm:$0xff]
        %v848 = vld [vmem:[%s400 + $0x118] sm:$0xff]
        %v849 = vld [vmem:[%s400 + $0x120] sm:$0xff]
        %v850 = vld [vmem:[%s400 + $0x128] sm:$0xff]
        %v851 = vld [vmem:[%s400 + $0x130] sm:$0xff]
        %v852 = vld [vmem:[%s400 + $0x138] sm:$0xff]
        %v853 = vld [vmem:[%s400 + $0x140] sm:$0xff]
        %v854 = vld [vmem:[%s400 + $0x148] sm:$0xff]
        %v855 = vld [vmem:[%s400 + $0x150] sm:$0xff]
        %v856 = vld [vmem:[%s400 + $0x158] sm:$0xff]
        %v857 = vld [vmem:[%s400 + $0x160] sm:$0xff]
        %v858 = vld [vmem:[%s400 + $0x168] sm:$0xff]
        %v859 = vld [vmem:[%s400 + $0x170] sm:$0xff]
        %v860 = vld [vmem:[%s400 + $0x178] sm:$0xff]
        %v861 = vld [vmem:[%s400 + $0x180] sm:$0xff]
        %v862 = vld [vmem:[%s400 + $0x188] sm:$0xff]
        %v863 = vld [vmem:[%s400 + $0x190] sm:$0xff]
        %v864 = vld [vmem:[%s400 + $0x198] sm:$0xff]
        %v865 = vld [vmem:[%s400 + $0x1a0] sm:$0xff]
        %v866 = vld [vmem:[%s400 + $0x1a8] sm:$0xff]
        %v867 = vld [vmem:[%s400 + $0x1b0] sm:$0xff]
        %v868 = vld [vmem:[%s400 + $0x1b8] sm:$0xff]
        %v869 = vld [vmem:[%s400 + $0x1c0] sm:$0xff]
        %v870 = vld [vmem:[%s400 + $0x1c8] sm:$0xff]
        %v871 = vld [vmem:[%s400 + $0x1d0] sm:$0xff]
        %v872 = vld [vmem:[%s400 + $0x1d8] sm:$0xff]
        %v873 = vld [vmem:[%s400 + $0x1e0] sm:$0xff]
        %v874 = vld [vmem:[%s400 + $0x1e8] sm:$0xff]
        %v875 = vld [vmem:[%s400 + $0x1f0] sm:$0xff]
        %v876 = vld [vmem:[%s400 + $0x1f8] sm:$0xff]
        %v877 = vld [vmem:[%s400 + $0x200] sm:$0xff]
        %v878 = vld [vmem:[%s400 + $0x208] sm:$0xff]
        %v879 = vld [vmem:[%s400 + $0x210] sm:$0xff]
        %v880 = vld [vmem:[%s400 + $0x218] sm:$0xff]
        %v881 = vld [vmem:[%s400 + $0x220] sm:$0xff]
        %v882 = vld [vmem:[%s400 + $0x228] sm:$0xff]
        %v883 = vld [vmem:[%s400 + $0x230] sm:$0xff]
        %v884 = vld [vmem:[%s400 + $0x238] sm:$0xff]
        %v885 = vld [vmem:[%s400 + $0x240] sm:$0xff]
        %v886 = vld [vmem:[%s400 + $0x248] sm:$0xff]
        %v887 = vld [vmem:[%s400 + $0x250] sm:$0xff]
        %v888 = vld [vmem:[%s400 + $0x258] sm:$0xff]
        %v889 = vld [vmem:[%s400 + $0x260] sm:$0xff]
        %v890 = vld [vmem:[%s400 + $0x268] sm:$0xff]
        %v891 = vld [vmem:[%s400 + $0x270] sm:$0xff]
        %v892 = vld [vmem:[%s400 + $0x278] sm:$0xff]
        %v893 = vld [vmem:[%s400 + $0x280] sm:$0xff]
        %v894 = vld [vmem:[%s400 + $0x288] sm:$0xff]
        %v895 = vld [vmem:[%s400 + $0x290] sm:$0xff]
        %v896 = vld [vmem:[%s400 + $0x298] sm:$0xff]
        %v897 = vld [vmem:[%s400 + $0x2a0] sm:$0xff]
        %v898 = vld [vmem:[%s400 + $0x2a8] sm:$0xff]
        %v899 = vld [vmem:[%s400 + $0x2b0] sm:$0xff]
        %v900 = vld [vmem:[%s400 + $0x2b8] sm:$0xff]
        %v901 = vld [vmem:[%s400 + $0x2c0] sm:$0xff]
        %v902 = vld [vmem:[%s400 + $0x2c8] sm:$0xff]
        %v903 = vld [vmem:[%s400 + $0x2d0] sm:$0xff]
        %v904 = vld [vmem:[%s400 + $0x2d8] sm:$0xff]
        %v905 = vld [vmem:[%s400 + $0x2e0] sm:$0xff]
        %v906 = vld [vmem:[%s400 + $0x2e8] sm:$0xff]
        %v907 = vld [vmem:[%s400 + $0x2f0] sm:$0xff]
        %v908 = vld [vmem:[%s400 + $0x2f8] sm:$0xff]
        %v909 = vld [vmem:[%s400 + $0x300] sm:$0xff]
        %v910 = vld [vmem:[%s400 + $0x308] sm:$0xff]
        %v911 = vld [vmem:[%s400 + $0x310] sm:$0xff]
        %v912 = vld [vmem:[%s400 + $0x318] sm:$0xff]
        %v913 = vld [vmem:[%s400 + $0x320] sm:$0xff]
        %v914 = vld [vmem:[%s400 + $0x328] sm:$0xff]
        %v915 = vld [vmem:[%s400 + $0x330] sm:$0xff]
        %v916 = vld [vmem:[%s400 + $0x338] sm:$0xff]
        %v917 = vld [vmem:[%s400 + $0x340] sm:$0xff]
        %v918 = vld [vmem:[%s400 + $0x348] sm:$0xff]
        %v919 = vld [vmem:[%s400 + $0x350] sm:$0xff]
        %v920 = vld [vmem:[%s400 + $0x358] sm:$0xff]
        %v921 = vld [vmem:[%s400 + $0x360] sm:$0xff]
        %v922 = vld [vmem:[%s400 + $0x368] sm:$0xff]
        %v923 = vld [vmem:[%s400 + $0x370] sm:$0xff]
        %v924 = vld [vmem:[%s400 + $0x378] sm:$0xff]
        %v925 = vld [vmem:[%s400 + $0x380] sm:$0xff]
        %v926 = vld [vmem:[%s400 + $0x388] sm:$0xff]
        %v927 = vld [vmem:[%s400 + $0x390] sm:$0xff]
        %v928 = vld [vmem:[%s400 + $0x398] sm:$0xff]
        %v929 = vld [vmem:[%s400 + $0x3a0] sm:$0xff]
        %v930 = vld [vmem:[%s400 + $0x3a8] sm:$0xff]
        %v931 = vld [vmem:[%s400 + $0x3b0] sm:$0xff]
        %v932 = vld [vmem:[%s400 + $0x3b8] sm:$0xff]
        %v933 = vld [vmem:[%s400 + $0x3c0] sm:$0xff]
        %v934 = vld [vmem:[%s400 + $0x3c8] sm:$0xff]
        %v935 = vld [vmem:[%s400 + $0x3d0] sm:$0xff]
        %v936 = vld [vmem:[%s400 + $0x3d8] sm:$0xff]
        %v937 = vld [vmem:[%s400 + $0x3e0] sm:$0xff]
        %v938 = vld [vmem:[%s400 + $0x3e8] sm:$0xff]
        %v939 = vld [vmem:[%s400 + $0x3f0] sm:$0xff]
        %v940 = vld [vmem:[%s400 + $0x3f8] sm:$0xff]
        %v941 = vld [vmem:[%s409] sm:$0xf]
        %s942 = scalar_lea.vmem %s409, 4 [#allocation11]
        %v943 = vld [vmem:[%s942] sm:$0xf]
        %v945 = vlaneseq
        %v946 = vshrl.u32 %v945, 7
        %v947 = vsub.s32 0, %v946
        %v948 = vrot.slane %v941, %v947
        %v949 = vlaneseq
        %v950 = vshrl.u32 %v949, 7
        %v951 = vsub.s32 1, %v950
        %v952 = vrot.slane %v941, %v951
        %v953 = vlaneseq
        %v954 = vshrl.u32 %v953, 7
        %v955 = vsub.s32 2, %v954
        %v956 = vrot.slane %v941, %v955
        %v957 = vlaneseq
        %v958 = vshrl.u32 %v957, 7
        %v959 = vsub.s32 3, %v958
        %v960 = vrot.slane %v941, %v959
        %v1029 = vunpack.c.l.b16 %v684
        %v1030 = vunpack.c.h.b16 %v684
        %v1031 = vunpack.c.l.b16 %v685
        %v1032 = vunpack.c.h.b16 %v685
        %v1033 = vunpack.c.l.b16 %v686
        %v1034 = vunpack.c.h.b16 %v686
        %v1035 = vunpack.c.l.b16 %v687
        %v1036 = vunpack.c.h.b16 %v687
        %v1037 = vunpack.c.l.b16 %v688
        %v1038 = vunpack.c.h.b16 %v688
        %v1039 = vunpack.c.l.b16 %v689
        %v1040 = vunpack.c.h.b16 %v689
        %v1041 = vunpack.c.l.b16 %v690
        %v1042 = vunpack.c.h.b16 %v690
        %v1043 = vunpack.c.l.b16 %v691
        %v1044 = vunpack.c.h.b16 %v691
        %v1045 = vunpack.c.l.b16 %v692
        %v1046 = vunpack.c.h.b16 %v692
        %v1047 = vunpack.c.l.b16 %v693
        %v1048 = vunpack.c.h.b16 %v693
        %v1049 = vunpack.c.l.b16 %v694
        %v1050 = vunpack.c.h.b16 %v694
        %v1051 = vunpack.c.l.b16 %v695
        %v1052 = vunpack.c.h.b16 %v695
        %v1053 = vunpack.c.l.b16 %v696
        %v1054 = vunpack.c.h.b16 %v696
        %v1055 = vunpack.c.l.b16 %v697
        %v1056 = vunpack.c.h.b16 %v697
        %v1057 = vunpack.c.l.b16 %v698
        %v1058 = vunpack.c.h.b16 %v698
        %v1059 = vunpack.c.l.b16 %v699
        %v1060 = vunpack.c.h.b16 %v699
        %v1061 = vunpack.c.l.b16 %v700
        %v1062 = vunpack.c.h.b16 %v700
        %v1063 = vunpack.c.l.b16 %v701
        %v1064 = vunpack.c.h.b16 %v701
        %v1065 = vunpack.c.l.b16 %v702
        %v1066 = vunpack.c.h.b16 %v702
        %v1067 = vunpack.c.l.b16 %v703
        %v1068 = vunpack.c.h.b16 %v703
        %v1069 = vunpack.c.l.b16 %v704
        %v1070 = vunpack.c.h.b16 %v704
        %v1071 = vunpack.c.l.b16 %v705
        %v1072 = vunpack.c.h.b16 %v705
        %v1073 = vunpack.c.l.b16 %v706
        %v1074 = vunpack.c.h.b16 %v706
        %v1075 = vunpack.c.l.b16 %v707
        %v1076 = vunpack.c.h.b16 %v707
        %v1077 = vunpack.c.l.b16 %v708
        %v1078 = vunpack.c.h.b16 %v708
        %v1079 = vunpack.c.l.b16 %v709
        %v1080 = vunpack.c.h.b16 %v709
        %v1081 = vunpack.c.l.b16 %v710
        %v1082 = vunpack.c.h.b16 %v710
        %v1083 = vunpack.c.l.b16 %v711
        %v1084 = vunpack.c.h.b16 %v711
        %v1085 = vunpack.c.l.b16 %v712
        %v1086 = vunpack.c.h.b16 %v712
        %v1087 = vunpack.c.l.b16 %v713
        %v1088 = vunpack.c.h.b16 %v713
        %v1089 = vunpack.c.l.b16 %v714
        %v1090 = vunpack.c.h.b16 %v714
        %v1091 = vunpack.c.l.b16 %v715
        %v1092 = vunpack.c.h.b16 %v715
        %v1093 = vunpack.c.l.b16 %v716
        %v1094 = vunpack.c.h.b16 %v716
        %v1095 = vunpack.c.l.b16 %v717
        %v1096 = vunpack.c.h.b16 %v717
        %v1097 = vunpack.c.l.b16 %v718
        %v1098 = vunpack.c.h.b16 %v718
        %v1099 = vunpack.c.l.b16 %v719
        %v1100 = vunpack.c.h.b16 %v719
        %v1101 = vunpack.c.l.b16 %v720
        %v1102 = vunpack.c.h.b16 %v720
        %v1103 = vunpack.c.l.b16 %v721
        %v1104 = vunpack.c.h.b16 %v721
        %v1105 = vunpack.c.l.b16 %v722
        %v1106 = vunpack.c.h.b16 %v722
        %v1107 = vunpack.c.l.b16 %v723
        %v1108 = vunpack.c.h.b16 %v723
        %v1109 = vunpack.c.l.b16 %v724
        %v1110 = vunpack.c.h.b16 %v724
        %v1111 = vunpack.c.l.b16 %v725
        %v1112 = vunpack.c.h.b16 %v725
        %v1113 = vunpack.c.l.b16 %v726
        %v1114 = vunpack.c.h.b16 %v726
        %v1115 = vunpack.c.l.b16 %v727
        %v1116 = vunpack.c.h.b16 %v727
        %v1117 = vunpack.c.l.b16 %v728
        %v1118 = vunpack.c.h.b16 %v728
        %v1119 = vunpack.c.l.b16 %v729
        %v1120 = vunpack.c.h.b16 %v729
        %v1121 = vunpack.c.l.b16 %v730
        %v1122 = vunpack.c.h.b16 %v730
        %v1123 = vunpack.c.l.b16 %v731
        %v1124 = vunpack.c.h.b16 %v731
        %v1125 = vunpack.c.l.b16 %v732
        %v1126 = vunpack.c.h.b16 %v732
        %v1127 = vunpack.c.l.b16 %v733
        %v1128 = vunpack.c.h.b16 %v733
        %v1129 = vunpack.c.l.b16 %v734
        %v1130 = vunpack.c.h.b16 %v734
        %v1131 = vunpack.c.l.b16 %v735
        %v1132 = vunpack.c.h.b16 %v735
        %v1133 = vunpack.c.l.b16 %v736
        %v1134 = vunpack.c.h.b16 %v736
        %v1135 = vunpack.c.l.b16 %v737
        %v1136 = vunpack.c.h.b16 %v737
        %v1137 = vunpack.c.l.b16 %v738
        %v1138 = vunpack.c.h.b16 %v738
        %v1139 = vunpack.c.l.b16 %v739
        %v1140 = vunpack.c.h.b16 %v739
        %v1141 = vunpack.c.l.b16 %v740
        %v1142 = vunpack.c.h.b16 %v740
        %v1143 = vunpack.c.l.b16 %v741
        %v1144 = vunpack.c.h.b16 %v741
        %v1145 = vunpack.c.l.b16 %v742
        %v1146 = vunpack.c.h.b16 %v742
        %v1147 = vunpack.c.l.b16 %v743
        %v1148 = vunpack.c.h.b16 %v743
        %v1149 = vunpack.c.l.b16 %v744
        %v1150 = vunpack.c.h.b16 %v744
        %v1151 = vunpack.c.l.b16 %v745
        %v1152 = vunpack.c.h.b16 %v745
        %v1153 = vunpack.c.l.b16 %v746
        %v1154 = vunpack.c.h.b16 %v746
        %v1155 = vunpack.c.l.b16 %v747
        %v1156 = vunpack.c.h.b16 %v747
        %v1157 = vpack.c.b16 %v1033, %v1029
        %v1158 = vpack.c.b16 %v1034, %v1030
        %v1159 = vpack.c.b16 %v1035, %v1031
        %v1160 = vpack.c.b16 %v1036, %v1032
        %v1161 = vpack.c.b16 %v1041, %v1037
        %v1162 = vpack.c.b16 %v1042, %v1038
        %v1163 = vpack.c.b16 %v1043, %v1039
        %v1164 = vpack.c.b16 %v1044, %v1040
        %v1165 = vpack.c.b16 %v1049, %v1045
        %v1166 = vpack.c.b16 %v1050, %v1046
        %v1167 = vpack.c.b16 %v1051, %v1047
        %v1168 = vpack.c.b16 %v1052, %v1048
        %v1169 = vpack.c.b16 %v1057, %v1053
        %v1170 = vpack.c.b16 %v1058, %v1054
        %v1171 = vpack.c.b16 %v1059, %v1055
        %v1172 = vpack.c.b16 %v1060, %v1056
        %v1173 = vpack.c.b16 %v1065, %v1061
        %v1174 = vpack.c.b16 %v1066, %v1062
        %v1175 = vpack.c.b16 %v1067, %v1063
        %v1176 = vpack.c.b16 %v1068, %v1064
        %v1177 = vpack.c.b16 %v1073, %v1069
        %v1178 = vpack.c.b16 %v1074, %v1070
        %v1179 = vpack.c.b16 %v1075, %v1071
        %v1180 = vpack.c.b16 %v1076, %v1072
        %v1181 = vpack.c.b16 %v1081, %v1077
        %v1182 = vpack.c.b16 %v1082, %v1078
        %v1183 = vpack.c.b16 %v1083, %v1079
        %v1184 = vpack.c.b16 %v1084, %v1080
        %v1185 = vpack.c.b16 %v1089, %v1085
        %v1186 = vpack.c.b16 %v1090, %v1086
        %v1187 = vpack.c.b16 %v1091, %v1087
        %v1188 = vpack.c.b16 %v1092, %v1088
        %v1189 = vpack.c.b16 %v1097, %v1093
        %v1190 = vpack.c.b16 %v1098, %v1094
        %v1191 = vpack.c.b16 %v1099, %v1095
        %v1192 = vpack.c.b16 %v1100, %v1096
        %v1193 = vpack.c.b16 %v1105, %v1101
        %v1194 = vpack.c.b16 %v1106, %v1102
        %v1195 = vpack.c.b16 %v1107, %v1103
        %v1196 = vpack.c.b16 %v1108, %v1104
        %v1197 = vpack.c.b16 %v1113, %v1109
        %v1198 = vpack.c.b16 %v1114, %v1110
        %v1199 = vpack.c.b16 %v1115, %v1111
        %v1200 = vpack.c.b16 %v1116, %v1112
        %v1201 = vpack.c.b16 %v1121, %v1117
        %v1202 = vpack.c.b16 %v1122, %v1118
        %v1203 = vpack.c.b16 %v1123, %v1119
        %v1204 = vpack.c.b16 %v1124, %v1120
        %v1205 = vpack.c.b16 %v1129, %v1125
        %v1206 = vpack.c.b16 %v1130, %v1126
        %v1207 = vpack.c.b16 %v1131, %v1127
        %v1208 = vpack.c.b16 %v1132, %v1128
        %v1209 = vpack.c.b16 %v1137, %v1133
        %v1210 = vpack.c.b16 %v1138, %v1134
        %v1211 = vpack.c.b16 %v1139, %v1135
        %v1212 = vpack.c.b16 %v1140, %v1136
        %v1213 = vpack.c.b16 %v1145, %v1141
        %v1214 = vpack.c.b16 %v1146, %v1142
        %v1215 = vpack.c.b16 %v1147, %v1143
        %v1216 = vpack.c.b16 %v1148, %v1144
        %v1217 = vpack.c.b16 %v1153, %v1149
        %v1218 = vpack.c.b16 %v1154, %v1150
        %v1219 = vpack.c.b16 %v1155, %v1151
        %v1220 = vpack.c.b16 %v1156, %v1152
        %1285 = vmatprep.subr.bf16.mxu0 %v1158
        %1286 = vmatpush1.bf16.msra.mxu0 %v1157
        %1287 = vmatprep.subr.bf16.mxu0 %v1162
        %1288 = vmatpush1.bf16.msra.mxu0 %v1161
        %1289 = vmatprep.subr.bf16.mxu0 %v1166
        %1290 = vmatpush1.bf16.msra.mxu0 %v1165
        %1291 = vmatprep.subr.bf16.mxu0 %v1170
        %1292 = vmatpush1.bf16.msra.mxu0 %v1169
        %1293 = vmatprep.subr.bf16.mxu0 %v1174
        %1294 = vmatpush1.bf16.msra.mxu0 %v1173
        %1295 = vmatprep.subr.bf16.mxu0 %v1178
        %1296 = vmatpush1.bf16.msra.mxu0 %v1177
        %1297 = vmatprep.subr.bf16.mxu0 %v1182
        %1298 = vmatpush1.bf16.msra.mxu0 %v1181
        %1299 = vmatprep.subr.bf16.mxu0 %v1186
        %1300 = vmatpush1.bf16.msra.mxu0 %v1185
        %1301 = vmatprep.subr.bf16.mxu0 %v1190
        %1302 = vmatpush1.bf16.msra.mxu0 %v1189
        %1303 = vmatprep.subr.bf16.mxu0 %v1194
        %1304 = vmatpush1.bf16.msra.mxu0 %v1193
        %1305 = vmatprep.subr.bf16.mxu0 %v1198
        %1306 = vmatpush1.bf16.msra.mxu0 %v1197
        %1307 = vmatprep.subr.bf16.mxu0 %v1202
        %1308 = vmatpush1.bf16.msra.mxu0 %v1201
        %1309 = vmatprep.subr.bf16.mxu0 %v1206
        %1310 = vmatpush1.bf16.msra.mxu0 %v1205
        %1311 = vmatprep.subr.bf16.mxu0 %v1210
        %1312 = vmatpush1.bf16.msra.mxu0 %v1209
        %1313 = vmatprep.subr.bf16.mxu0 %v1214
        %1314 = vmatpush1.bf16.msra.mxu0 %v1213
        %1315 = vmatprep.subr.bf16.mxu0 %v1218
        %1316 = vmatpush1.bf16.msra.mxu0 %v1217
        %1317 = vmatprep.mubr.bf16.mxu0 %v683
        %1318 = vmatmul.mubr.bf16.gmra.mrb[0].mxu0 %v682
        %v1319 = vpop.f32.mrb[0].mxu0
        %v1320 = vadd.f32 %v948, %v1319
        %v1321 = vpop.f32.mrb[0].mxu0
        %v1322 = vadd.f32 %v952, %v1321
        %v1323 = vpop.f32.mrb[0].mxu0
        %v1324 = vadd.f32 %v948, %v1323
        %v1325 = vpop.f32.mrb[0].mxu0
        %v1326 = vadd.f32 %v952, %v1325
        %1327 = vdwg.mxu0
        %1328 = vmatprep.subr.bf16.mxu0 %v1160
        %1329 = vmatpush1.bf16.msra.mxu0 %v1159
        %1330 = vmatprep.subr.bf16.mxu0 %v1164
        %1331 = vmatpush1.bf16.msra.mxu0 %v1163
        %1332 = vmatprep.subr.bf16.mxu0 %v1168
        %1333 = vmatpush1.bf16.msra.mxu0 %v1167
        %1334 = vmatprep.subr.bf16.mxu0 %v1172
        %1335 = vmatpush1.bf16.msra.mxu0 %v1171
        %1336 = vmatprep.subr.bf16.mxu0 %v1176
        %1337 = vmatpush1.bf16.msra.mxu0 %v1175
        %1338 = vmatprep.subr.bf16.mxu0 %v1180
        %1339 = vmatpush1.bf16.msra.mxu0 %v1179
        %1340 = vmatprep.subr.bf16.mxu0 %v1184
        %1341 = vmatpush1.bf16.msra.mxu0 %v1183
        %1342 = vmatprep.subr.bf16.mxu0 %v1188
        %1343 = vmatpush1.bf16.msra.mxu0 %v1187
        %1344 = vmatprep.subr.bf16.mxu0 %v1192
        %1345 = vmatpush1.bf16.msra.mxu0 %v1191
        %1346 = vmatprep.subr.bf16.mxu0 %v1196
        %1347 = vmatpush1.bf16.msra.mxu0 %v1195
        %1348 = vmatprep.subr.bf16.mxu0 %v1200
        %1349 = vmatpush1.bf16.msra.mxu0 %v1199
        %1350 = vmatprep.subr.bf16.mxu0 %v1204
        %1351 = vmatpush1.bf16.msra.mxu0 %v1203
        %1352 = vmatprep.subr.bf16.mxu0 %v1208
        %1353 = vmatpush1.bf16.msra.mxu0 %v1207
        %1354 = vmatprep.subr.bf16.mxu0 %v1212
        %1355 = vmatpush1.bf16.msra.mxu0 %v1211
        %1356 = vmatprep.subr.bf16.mxu0 %v1216
        %1357 = vmatpush1.bf16.msra.mxu0 %v1215
        %1358 = vmatprep.subr.bf16.mxu0 %v1220
        %1359 = vmatpush1.bf16.msra.mxu0 %v1219
        %1360 = vmatprep.mubr.bf16.mxu0 %v683
        %1361 = vmatmul.mubr.bf16.gmra.mrb[0].mxu0 %v682
        %v1362 = vpop.f32.mrb[0].mxu0
        %v1363 = vadd.f32 %v956, %v1362
        %v1364 = vpop.f32.mrb[0].mxu0
        %v1365 = vadd.f32 %v960, %v1364
        %v1366 = vpop.f32.mrb[0].mxu0
        %v1367 = vadd.f32 %v956, %v1366
        %v1368 = vpop.f32.mrb[0].mxu0
        %v1369 = vadd.f32 %v960, %v1368
        %1370 = vdwg.mxu0
        %v1372 = vlaneseq
        %v1373 = vshrl.u32 %v1372, 7
        %v1374 = vsub.s32 0, %v1373
        %v1375 = vrot.slane %v943, %v1374
        %v1376 = vlaneseq
        %v1377 = vshrl.u32 %v1376, 7
        %v1378 = vsub.s32 1, %v1377
        %v1379 = vrot.slane %v943, %v1378
        %v1380 = vlaneseq
        %v1381 = vshrl.u32 %v1380, 7
        %v1382 = vsub.s32 2, %v1381
        %v1383 = vrot.slane %v943, %v1382
        %v1384 = vlaneseq
        %v1385 = vshrl.u32 %v1384, 7
        %v1386 = vsub.s32 3, %v1385
        %v1387 = vrot.slane %v943, %v1386
        %v1456 = vunpack.c.l.b16 %v749
        %v1457 = vunpack.c.h.b16 %v749
        %v1458 = vunpack.c.l.b16 %v750
        %v1459 = vunpack.c.h.b16 %v750
        %v1460 = vunpack.c.l.b16 %v751
        %v1461 = vunpack.c.h.b16 %v751
        %v1462 = vunpack.c.l.b16 %v752
        %v1463 = vunpack.c.h.b16 %v752
        %v1464 = vunpack.c.l.b16 %v753
        %v1465 = vunpack.c.h.b16 %v753
        %v1466 = vunpack.c.l.b16 %v754
        %v1467 = vunpack.c.h.b16 %v754
        %v1468 = vunpack.c.l.b16 %v755
        %v1469 = vunpack.c.h.b16 %v755
        %v1470 = vunpack.c.l.b16 %v756
        %v1471 = vunpack.c.h.b16 %v756
        %v1472 = vunpack.c.l.b16 %v757
        %v1473 = vunpack.c.h.b16 %v757
        %v1474 = vunpack.c.l.b16 %v758
        %v1475 = vunpack.c.h.b16 %v758
        %v1476 = vunpack.c.l.b16 %v759
        %v1477 = vunpack.c.h.b16 %v759
        %v1478 = vunpack.c.l.b16 %v760
        %v1479 = vunpack.c.h.b16 %v760
        %v1480 = vunpack.c.l.b16 %v761
        %v1481 = vunpack.c.h.b16 %v761
        %v1482 = vunpack.c.l.b16 %v762
        %v1483 = vunpack.c.h.b16 %v762
        %v1484 = vunpack.c.l.b16 %v763
        %v1485 = vunpack.c.h.b16 %v763
        %v1486 = vunpack.c.l.b16 %v764
        %v1487 = vunpack.c.h.b16 %v764
        %v1488 = vunpack.c.l.b16 %v765
        %v1489 = vunpack.c.h.b16 %v765
        %v1490 = vunpack.c.l.b16 %v766
        %v1491 = vunpack.c.h.b16 %v766
        %v1492 = vunpack.c.l.b16 %v767
        %v1493 = vunpack.c.h.b16 %v767
        %v1494 = vunpack.c.l.b16 %v768
        %v1495 = vunpack.c.h.b16 %v768
        %v1496 = vunpack.c.l.b16 %v769
        %v1497 = vunpack.c.h.b16 %v769
        %v1498 = vunpack.c.l.b16 %v770
        %v1499 = vunpack.c.h.b16 %v770
        %v1500 = vunpack.c.l.b16 %v771
        %v1501 = vunpack.c.h.b16 %v771
        %v1502 = vunpack.c.l.b16 %v772
        %v1503 = vunpack.c.h.b16 %v772
        %v1504 = vunpack.c.l.b16 %v773
        %v1505 = vunpack.c.h.b16 %v773
        %v1506 = vunpack.c.l.b16 %v774
        %v1507 = vunpack.c.h.b16 %v774
        %v1508 = vunpack.c.l.b16 %v775
        %v1509 = vunpack.c.h.b16 %v775
        %v1510 = vunpack.c.l.b16 %v776
        %v1511 = vunpack.c.h.b16 %v776
        %v1512 = vunpack.c.l.b16 %v777
        %v1513 = vunpack.c.h.b16 %v777
        %v1514 = vunpack.c.l.b16 %v778
        %v1515 = vunpack.c.h.b16 %v778
        %v1516 = vunpack.c.l.b16 %v779
        %v1517 = vunpack.c.h.b16 %v779
        %v1518 = vunpack.c.l.b16 %v780
        %v1519 = vunpack.c.h.b16 %v780
        %v1520 = vunpack.c.l.b16 %v781
        %v1521 = vunpack.c.h.b16 %v781
        %v1522 = vunpack.c.l.b16 %v782
        %v1523 = vunpack.c.h.b16 %v782
        %v1524 = vunpack.c.l.b16 %v783
        %v1525 = vunpack.c.h.b16 %v783
        %v1526 = vunpack.c.l.b16 %v784
        %v1527 = vunpack.c.h.b16 %v784
        %v1528 = vunpack.c.l.b16 %v785
        %v1529 = vunpack.c.h.b16 %v785
        %v1530 = vunpack.c.l.b16 %v786
        %v1531 = vunpack.c.h.b16 %v786
        %v1532 = vunpack.c.l.b16 %v787
        %v1533 = vunpack.c.h.b16 %v787
        %v1534 = vunpack.c.l.b16 %v788
        %v1535 = vunpack.c.h.b16 %v788
        %v1536 = vunpack.c.l.b16 %v789
        %v1537 = vunpack.c.h.b16 %v789
        %v1538 = vunpack.c.l.b16 %v790
        %v1539 = vunpack.c.h.b16 %v790
        %v1540 = vunpack.c.l.b16 %v791
        %v1541 = vunpack.c.h.b16 %v791
        %v1542 = vunpack.c.l.b16 %v792
        %v1543 = vunpack.c.h.b16 %v792
        %v1544 = vunpack.c.l.b16 %v793
        %v1545 = vunpack.c.h.b16 %v793
        %v1546 = vunpack.c.l.b16 %v794
        %v1547 = vunpack.c.h.b16 %v794
        %v1548 = vunpack.c.l.b16 %v795
        %v1549 = vunpack.c.h.b16 %v795
        %v1550 = vunpack.c.l.b16 %v796
        %v1551 = vunpack.c.h.b16 %v796
        %v1552 = vunpack.c.l.b16 %v797
        %v1553 = vunpack.c.h.b16 %v797
        %v1554 = vunpack.c.l.b16 %v798
        %v1555 = vunpack.c.h.b16 %v798
        %v1556 = vunpack.c.l.b16 %v799
        %v1557 = vunpack.c.h.b16 %v799
        %v1558 = vunpack.c.l.b16 %v800
        %v1559 = vunpack.c.h.b16 %v800
        %v1560 = vunpack.c.l.b16 %v801
        %v1561 = vunpack.c.h.b16 %v801
        %v1562 = vunpack.c.l.b16 %v802
        %v1563 = vunpack.c.h.b16 %v802
        %v1564 = vunpack.c.l.b16 %v803
        %v1565 = vunpack.c.h.b16 %v803
        %v1566 = vunpack.c.l.b16 %v804
        %v1567 = vunpack.c.h.b16 %v804
        %v1568 = vunpack.c.l.b16 %v805
        %v1569 = vunpack.c.h.b16 %v805
        %v1570 = vunpack.c.l.b16 %v806
        %v1571 = vunpack.c.h.b16 %v806
        %v1572 = vunpack.c.l.b16 %v807
        %v1573 = vunpack.c.h.b16 %v807
        %v1574 = vunpack.c.l.b16 %v808
        %v1575 = vunpack.c.h.b16 %v808
        %v1576 = vunpack.c.l.b16 %v809
        %v1577 = vunpack.c.h.b16 %v809
        %v1578 = vunpack.c.l.b16 %v810
        %v1579 = vunpack.c.h.b16 %v810
        %v1580 = vunpack.c.l.b16 %v811
        %v1581 = vunpack.c.h.b16 %v811
        %v1582 = vunpack.c.l.b16 %v812
        %v1583 = vunpack.c.h.b16 %v812
        %v1584 = vpack.c.b16 %v1460, %v1456
        %v1585 = vpack.c.b16 %v1461, %v1457
        %v1586 = vpack.c.b16 %v1462, %v1458
        %v1587 = vpack.c.b16 %v1463, %v1459
        %v1588 = vpack.c.b16 %v1468, %v1464
        %v1589 = vpack.c.b16 %v1469, %v1465
        %v1590 = vpack.c.b16 %v1470, %v1466
        %v1591 = vpack.c.b16 %v1471, %v1467
        %v1592 = vpack.c.b16 %v1476, %v1472
        %v1593 = vpack.c.b16 %v1477, %v1473
        %v1594 = vpack.c.b16 %v1478, %v1474
        %v1595 = vpack.c.b16 %v1479, %v1475
        %v1596 = vpack.c.b16 %v1484, %v1480
        %v1597 = vpack.c.b16 %v1485, %v1481
        %v1598 = vpack.c.b16 %v1486, %v1482
        %v1599 = vpack.c.b16 %v1487, %v1483
        %v1600 = vpack.c.b16 %v1492, %v1488
        %v1601 = vpack.c.b16 %v1493, %v1489
        %v1602 = vpack.c.b16 %v1494, %v1490
        %v1603 = vpack.c.b16 %v1495, %v1491
        %v1604 = vpack.c.b16 %v1500, %v1496
        %v1605 = vpack.c.b16 %v1501, %v1497
        %v1606 = vpack.c.b16 %v1502, %v1498
        %v1607 = vpack.c.b16 %v1503, %v1499
        %v1608 = vpack.c.b16 %v1508, %v1504
        %v1609 = vpack.c.b16 %v1509, %v1505
        %v1610 = vpack.c.b16 %v1510, %v1506
        %v1611 = vpack.c.b16 %v1511, %v1507
        %v1612 = vpack.c.b16 %v1516, %v1512
        %v1613 = vpack.c.b16 %v1517, %v1513
        %v1614 = vpack.c.b16 %v1518, %v1514
        %v1615 = vpack.c.b16 %v1519, %v1515
        %v1616 = vpack.c.b16 %v1524, %v1520
        %v1617 = vpack.c.b16 %v1525, %v1521
        %v1618 = vpack.c.b16 %v1526, %v1522
        %v1619 = vpack.c.b16 %v1527, %v1523
        %v1620 = vpack.c.b16 %v1532, %v1528
        %v1621 = vpack.c.b16 %v1533, %v1529
        %v1622 = vpack.c.b16 %v1534, %v1530
        %v1623 = vpack.c.b16 %v1535, %v1531
        %v1624 = vpack.c.b16 %v1540, %v1536
        %v1625 = vpack.c.b16 %v1541, %v1537
        %v1626 = vpack.c.b16 %v1542, %v1538
        %v1627 = vpack.c.b16 %v1543, %v1539
        %v1628 = vpack.c.b16 %v1548, %v1544
        %v1629 = vpack.c.b16 %v1549, %v1545
        %v1630 = vpack.c.b16 %v1550, %v1546
        %v1631 = vpack.c.b16 %v1551, %v1547
        %v1632 = vpack.c.b16 %v1556, %v1552
        %v1633 = vpack.c.b16 %v1557, %v1553
        %v1634 = vpack.c.b16 %v1558, %v1554
        %v1635 = vpack.c.b16 %v1559, %v1555
        %v1636 = vpack.c.b16 %v1564, %v1560
        %v1637 = vpack.c.b16 %v1565, %v1561
        %v1638 = vpack.c.b16 %v1566, %v1562
        %v1639 = vpack.c.b16 %v1567, %v1563
        %v1640 = vpack.c.b16 %v1572, %v1568
        %v1641 = vpack.c.b16 %v1573, %v1569
        %v1642 = vpack.c.b16 %v1574, %v1570
        %v1643 = vpack.c.b16 %v1575, %v1571
        %v1644 = vpack.c.b16 %v1580, %v1576
        %v1645 = vpack.c.b16 %v1581, %v1577
        %v1646 = vpack.c.b16 %v1582, %v1578
        %v1647 = vpack.c.b16 %v1583, %v1579
        %1712 = vmatprep.subr.bf16.mxu0 %v1585
        %1713 = vmatpush1.bf16.msra.mxu0 %v1584
        %1714 = vmatprep.subr.bf16.mxu0 %v1589
        %1715 = vmatpush1.bf16.msra.mxu0 %v1588
        %1716 = vmatprep.subr.bf16.mxu0 %v1593
        %1717 = vmatpush1.bf16.msra.mxu0 %v1592
        %1718 = vmatprep.subr.bf16.mxu0 %v1597
        %1719 = vmatpush1.bf16.msra.mxu0 %v1596
        %1720 = vmatprep.subr.bf16.mxu0 %v1601
        %1721 = vmatpush1.bf16.msra.mxu0 %v1600
        %1722 = vmatprep.subr.bf16.mxu0 %v1605
        %1723 = vmatpush1.bf16.msra.mxu0 %v1604
        %1724 = vmatprep.subr.bf16.mxu0 %v1609
        %1725 = vmatpush1.bf16.msra.mxu0 %v1608
        %1726 = vmatprep.subr.bf16.mxu0 %v1613
        %1727 = vmatpush1.bf16.msra.mxu0 %v1612
        %1728 = vmatprep.subr.bf16.mxu0 %v1617
        %1729 = vmatpush1.bf16.msra.mxu0 %v1616
        %1730 = vmatprep.subr.bf16.mxu0 %v1621
        %1731 = vmatpush1.bf16.msra.mxu0 %v1620
        %1732 = vmatprep.subr.bf16.mxu0 %v1625
        %1733 = vmatpush1.bf16.msra.mxu0 %v1624
        %1734 = vmatprep.subr.bf16.mxu0 %v1629
        %1735 = vmatpush1.bf16.msra.mxu0 %v1628
        %1736 = vmatprep.subr.bf16.mxu0 %v1633
        %1737 = vmatpush1.bf16.msra.mxu0 %v1632
        %1738 = vmatprep.subr.bf16.mxu0 %v1637
        %1739 = vmatpush1.bf16.msra.mxu0 %v1636
        %1740 = vmatprep.subr.bf16.mxu0 %v1641
        %1741 = vmatpush1.bf16.msra.mxu0 %v1640
        %1742 = vmatprep.subr.bf16.mxu0 %v1645
        %1743 = vmatpush1.bf16.msra.mxu0 %v1644
        %1744 = vmatprep.mubr.bf16.mxu0 %v683
        %1745 = vmatmul.mubr.bf16.gmra.mrb[0].mxu0 %v682
        %v1746 = vpop.f32.mrb[0].mxu0
        %v1747 = vadd.f32 %v1375, %v1746
        %v1748 = vpop.f32.mrb[0].mxu0
        %v1749 = vadd.f32 %v1379, %v1748
        %v1750 = vpop.f32.mrb[0].mxu0
        %v1751 = vadd.f32 %v1375, %v1750
        %v1752 = vpop.f32.mrb[0].mxu0
        %v1753 = vadd.f32 %v1379, %v1752
        %1754 = vdwg.mxu0
        %1755 = vmatprep.subr.bf16.mxu0 %v1587
        %1756 = vmatpush1.bf16.msra.mxu0 %v1586
        %1757 = vmatprep.subr.bf16.mxu0 %v1591
        %1758 = vmatpush1.bf16.msra.mxu0 %v1590
        %1759 = vmatprep.subr.bf16.mxu0 %v1595
        %1760 = vmatpush1.bf16.msra.mxu0 %v1594
        %1761 = vmatprep.subr.bf16.mxu0 %v1599
        %1762 = vmatpush1.bf16.msra.mxu0 %v1598
        %1763 = vmatprep.subr.bf16.mxu0 %v1603
        %1764 = vmatpush1.bf16.msra.mxu0 %v1602
        %1765 = vmatprep.subr.bf16.mxu0 %v1607
        %1766 = vmatpush1.bf16.msra.mxu0 %v1606
        %1767 = vmatprep.subr.bf16.mxu0 %v1611
        %1768 = vmatpush1.bf16.msra.mxu0 %v1610
        %1769 = vmatprep.subr.bf16.mxu0 %v1615
        %1770 = vmatpush1.bf16.msra.mxu0 %v1614
        %1771 = vmatprep.subr.bf16.mxu0 %v1619
        %1772 = vmatpush1.bf16.msra.mxu0 %v1618
        %1773 = vmatprep.subr.bf16.mxu0 %v1623
        %1774 = vmatpush1.bf16.msra.mxu0 %v1622
        %1775 = vmatprep.subr.bf16.mxu0 %v1627
        %1776 = vmatpush1.bf16.msra.mxu0 %v1626
        %1777 = vmatprep.subr.bf16.mxu0 %v1631
        %1778 = vmatpush1.bf16.msra.mxu0 %v1630
        %1779 = vmatprep.subr.bf16.mxu0 %v1635
        %1780 = vmatpush1.bf16.msra.mxu0 %v1634
        %1781 = vmatprep.subr.bf16.mxu0 %v1639
        %1782 = vmatpush1.bf16.msra.mxu0 %v1638
        %1783 = vmatprep.subr.bf16.mxu0 %v1643
        %1784 = vmatpush1.bf16.msra.mxu0 %v1642
        %1785 = vmatprep.subr.bf16.mxu0 %v1647
        %1786 = vmatpush1.bf16.msra.mxu0 %v1646
        %1787 = vmatprep.mubr.bf16.mxu0 %v683
        %1788 = vmatmul.mubr.bf16.gmra.mrb[0].mxu0 %v682
        %v1789 = vpop.f32.mrb[0].mxu0
        %v1790 = vadd.f32 %v1383, %v1789
        %v1791 = vpop.f32.mrb[0].mxu0
        %v1792 = vadd.f32 %v1387, %v1791
        %v1793 = vpop.f32.mrb[0].mxu0
        %v1794 = vadd.f32 %v1383, %v1793
        %v1795 = vpop.f32.mrb[0].mxu0
        %v1796 = vadd.f32 %v1387, %v1795
        %1797 = vdwg.mxu0
        %v1798 = vxor.u32 %v1320, 2147483648
        %v1799 = vmul.f32 %v1798, 1.442695
        %v1800 = vpow.pop %v1799
        %v1801 = vadd.f32 %v1800, 1.0
        %v1802 = vrcp.pop %v1801
        %v1803 = vmul.f32 1.0, %v1802
        %v1804 = vxor.u32 %v1751, 2147483648
        %v1805 = vmul.f32 %v1804, 1.442695
        %v1806 = vpow.pop %v1805
        %v1807 = vadd.f32 %v1806, 1.0
        %v1808 = vrcp.pop %v1807
        %v1809 = vmul.f32 1.0, %v1808
        %v1810 = vtanh.pop %v1363
        %v1811 = vtanh.pop %v1794
        %v1812 = vxor.u32 %v1365, 2147483648
        %v1813 = vmul.f32 %v1812, 1.442695
        %v1814 = vpow.pop %v1813
        %v1815 = vadd.f32 %v1814, 1.0
        %v1816 = vrcp.pop %v1815
        %v1817 = vmul.f32 1.0, %v1816
        %v1818 = vxor.u32 %v1796, 2147483648
        %v1819 = vmul.f32 %v1818, 1.442695
        %v1820 = vpow.pop %v1819
        %v1821 = vadd.f32 %v1820, 1.0
        %v1822 = vrcp.pop %v1821
        %v1823 = vmul.f32 1.0, %v1822
        %v1824 = vmul.f32 %v1803, %v1810
        %v1825 = vmul.f32 %v1809, %v1811
        %v1826 = vtanh.pop %v1824
        %v1827 = vmul.f32 %v1817, %v1826
        %v1828 = vtanh.pop %v1825
        %v1829 = vmul.f32 %v1823, %v1828
        %v1831 = vrot.slane %v1829, 6
        %v1833 = vpack.c.bf16 %v1827, %v1827
        %v1834 = vpack.c.bf16 %v1831, %v1831
        %v1963 = vunpack.c.l.b16 %v813
        %v1964 = vunpack.c.h.b16 %v813
        %v1965 = vunpack.c.l.b16 %v814
        %v1966 = vunpack.c.h.b16 %v814
        %v1967 = vunpack.c.l.b16 %v815
        %v1968 = vunpack.c.h.b16 %v815
        %v1969 = vunpack.c.l.b16 %v816
        %v1970 = vunpack.c.h.b16 %v816
        %v1971 = vunpack.c.l.b16 %v817
        %v1972 = vunpack.c.h.b16 %v817
        %v1973 = vunpack.c.l.b16 %v818
        %v1974 = vunpack.c.h.b16 %v818
        %v1975 = vunpack.c.l.b16 %v819
        %v1976 = vunpack.c.h.b16 %v819
        %v1977 = vunpack.c.l.b16 %v820
        %v1978 = vunpack.c.h.b16 %v820
        %v1979 = vunpack.c.l.b16 %v821
        %v1980 = vunpack.c.h.b16 %v821
        %v1981 = vunpack.c.l.b16 %v822
        %v1982 = vunpack.c.h.b16 %v822
        %v1983 = vunpack.c.l.b16 %v823
        %v1984 = vunpack.c.h.b16 %v823
        %v1985 = vunpack.c.l.b16 %v824
        %v1986 = vunpack.c.h.b16 %v824
        %v1987 = vunpack.c.l.b16 %v825
        %v1988 = vunpack.c.h.b16 %v825
        %v1989 = vunpack.c.l.b16 %v826
        %v1990 = vunpack.c.h.b16 %v826
        %v1991 = vunpack.c.l.b16 %v827
        %v1992 = vunpack.c.h.b16 %v827
        %v1993 = vunpack.c.l.b16 %v828
        %v1994 = vunpack.c.h.b16 %v828
        %v1995 = vunpack.c.l.b16 %v829
        %v1996 = vunpack.c.h.b16 %v829
        %v1997 = vunpack.c.l.b16 %v830
        %v1998 = vunpack.c.h.b16 %v830
        %v1999 = vunpack.c.l.b16 %v831
        %v2000 = vunpack.c.h.b16 %v831
        %v2001 = vunpack.c.l.b16 %v832
        %v2002 = vunpack.c.h.b16 %v832
        %v2003 = vunpack.c.l.b16 %v833
        %v2004 = vunpack.c.h.b16 %v833
        %v2005 = vunpack.c.l.b16 %v834
        %v2006 = vunpack.c.h.b16 %v834
        %v2007 = vunpack.c.l.b16 %v835
        %v2008 = vunpack.c.h.b16 %v835
        %v2009 = vunpack.c.l.b16 %v836
        %v2010 = vunpack.c.h.b16 %v836
        %v2011 = vunpack.c.l.b16 %v837
        %v2012 = vunpack.c.h.b16 %v837
        %v2013 = vunpack.c.l.b16 %v838
        %v2014 = vunpack.c.h.b16 %v838
        %v2015 = vunpack.c.l.b16 %v839
        %v2016 = vunpack.c.h.b16 %v839
        %v2017 = vunpack.c.l.b16 %v840
        %v2018 = vunpack.c.h.b16 %v840
        %v2019 = vunpack.c.l.b16 %v841
        %v2020 = vunpack.c.h.b16 %v841
        %v2021 = vunpack.c.l.b16 %v842
        %v2022 = vunpack.c.h.b16 %v842
        %v2023 = vunpack.c.l.b16 %v843
        %v2024 = vunpack.c.h.b16 %v843
        %v2025 = vunpack.c.l.b16 %v844
        %v2026 = vunpack.c.h.b16 %v844
        %v2027 = vunpack.c.l.b16 %v845
        %v2028 = vunpack.c.h.b16 %v845
        %v2029 = vunpack.c.l.b16 %v846
        %v2030 = vunpack.c.h.b16 %v846
        %v2031 = vunpack.c.l.b16 %v847
        %v2032 = vunpack.c.h.b16 %v847
        %v2033 = vunpack.c.l.b16 %v848
        %v2034 = vunpack.c.h.b16 %v848
        %v2035 = vunpack.c.l.b16 %v849
        %v2036 = vunpack.c.h.b16 %v849
        %v2037 = vunpack.c.l.b16 %v850
        %v2038 = vunpack.c.h.b16 %v850
        %v2039 = vunpack.c.l.b16 %v851
        %v2040 = vunpack.c.h.b16 %v851
        %v2041 = vunpack.c.l.b16 %v852
        %v2042 = vunpack.c.h.b16 %v852
        %v2043 = vunpack.c.l.b16 %v853
        %v2044 = vunpack.c.h.b16 %v853
        %v2045 = vunpack.c.l.b16 %v854
        %v2046 = vunpack.c.h.b16 %v854
        %v2047 = vunpack.c.l.b16 %v855
        %v2048 = vunpack.c.h.b16 %v855
        %v2049 = vunpack.c.l.b16 %v856
        %v2050 = vunpack.c.h.b16 %v856
        %v2051 = vunpack.c.l.b16 %v857
        %v2052 = vunpack.c.h.b16 %v857
        %v2053 = vunpack.c.l.b16 %v858
        %v2054 = vunpack.c.h.b16 %v858
        %v2055 = vunpack.c.l.b16 %v859
        %v2056 = vunpack.c.h.b16 %v859
        %v2057 = vunpack.c.l.b16 %v860
        %v2058 = vunpack.c.h.b16 %v860
        %v2059 = vunpack.c.l.b16 %v861
        %v2060 = vunpack.c.h.b16 %v861
        %v2061 = vunpack.c.l.b16 %v862
        %v2062 = vunpack.c.h.b16 %v862
        %v2063 = vunpack.c.l.b16 %v863
        %v2064 = vunpack.c.h.b16 %v863
        %v2065 = vunpack.c.l.b16 %v864
        %v2066 = vunpack.c.h.b16 %v864
        %v2067 = vunpack.c.l.b16 %v865
        %v2068 = vunpack.c.h.b16 %v865
        %v2069 = vunpack.c.l.b16 %v866
        %v2070 = vunpack.c.h.b16 %v866
        %v2071 = vunpack.c.l.b16 %v867
        %v2072 = vunpack.c.h.b16 %v867
        %v2073 = vunpack.c.l.b16 %v868
        %v2074 = vunpack.c.h.b16 %v868
        %v2075 = vunpack.c.l.b16 %v869
        %v2076 = vunpack.c.h.b16 %v869
        %v2077 = vunpack.c.l.b16 %v870
        %v2078 = vunpack.c.h.b16 %v870
        %v2079 = vunpack.c.l.b16 %v871
        %v2080 = vunpack.c.h.b16 %v871
        %v2081 = vunpack.c.l.b16 %v872
        %v2082 = vunpack.c.h.b16 %v872
        %v2083 = vunpack.c.l.b16 %v873
        %v2084 = vunpack.c.h.b16 %v873
        %v2085 = vunpack.c.l.b16 %v874
        %v2086 = vunpack.c.h.b16 %v874
        %v2087 = vunpack.c.l.b16 %v875
        %v2088 = vunpack.c.h.b16 %v875
        %v2089 = vunpack.c.l.b16 %v876
        %v2090 = vunpack.c.h.b16 %v876
        %v2091 = vunpack.c.l.b16 %v877
        %v2092 = vunpack.c.h.b16 %v877
        %v2093 = vunpack.c.l.b16 %v878
        %v2094 = vunpack.c.h.b16 %v878
        %v2095 = vunpack.c.l.b16 %v879
        %v2096 = vunpack.c.h.b16 %v879
        %v2097 = vunpack.c.l.b16 %v880
        %v2098 = vunpack.c.h.b16 %v880
        %v2099 = vunpack.c.l.b16 %v881
        %v2100 = vunpack.c.h.b16 %v881
        %v2101 = vunpack.c.l.b16 %v882
        %v2102 = vunpack.c.h.b16 %v882
        %v2103 = vunpack.c.l.b16 %v883
        %v2104 = vunpack.c.h.b16 %v883
        %v2105 = vunpack.c.l.b16 %v884
        %v2106 = vunpack.c.h.b16 %v884
        %v2107 = vunpack.c.l.b16 %v885
        %v2108 = vunpack.c.h.b16 %v885
        %v2109 = vunpack.c.l.b16 %v886
        %v2110 = vunpack.c.h.b16 %v886
        %v2111 = vunpack.c.l.b16 %v887
        %v2112 = vunpack.c.h.b16 %v887
        %v2113 = vunpack.c.l.b16 %v888
        %v2114 = vunpack.c.h.b16 %v888
        %v2115 = vunpack.c.l.b16 %v889
        %v2116 = vunpack.c.h.b16 %v889
        %v2117 = vunpack.c.l.b16 %v890
        %v2118 = vunpack.c.h.b16 %v890
        %v2119 = vunpack.c.l.b16 %v891
        %v2120 = vunpack.c.h.b16 %v891
        %v2121 = vunpack.c.l.b16 %v892
        %v2122 = vunpack.c.h.b16 %v892
        %v2123 = vunpack.c.l.b16 %v893
        %v2124 = vunpack.c.h.b16 %v893
        %v2125 = vunpack.c.l.b16 %v894
        %v2126 = vunpack.c.h.b16 %v894
        %v2127 = vunpack.c.l.b16 %v895
        %v2128 = vunpack.c.h.b16 %v895
        %v2129 = vunpack.c.l.b16 %v896
        %v2130 = vunpack.c.h.b16 %v896
        %v2131 = vunpack.c.l.b16 %v897
        %v2132 = vunpack.c.h.b16 %v897
        %v2133 = vunpack.c.l.b16 %v898
        %v2134 = vunpack.c.h.b16 %v898
        %v2135 = vunpack.c.l.b16 %v899
        %v2136 = vunpack.c.h.b16 %v899
        %v2137 = vunpack.c.l.b16 %v900
        %v2138 = vunpack.c.h.b16 %v900
        %v2139 = vunpack.c.l.b16 %v901
        %v2140 = vunpack.c.h.b16 %v901
        %v2141 = vunpack.c.l.b16 %v902
        %v2142 = vunpack.c.h.b16 %v902
        %v2143 = vunpack.c.l.b16 %v903
        %v2144 = vunpack.c.h.b16 %v903
        %v2145 = vunpack.c.l.b16 %v904
        %v2146 = vunpack.c.h.b16 %v904
        %v2147 = vunpack.c.l.b16 %v905
        %v2148 = vunpack.c.h.b16 %v905
        %v2149 = vunpack.c.l.b16 %v906
        %v2150 = vunpack.c.h.b16 %v906
        %v2151 = vunpack.c.l.b16 %v907
        %v2152 = vunpack.c.h.b16 %v907
        %v2153 = vunpack.c.l.b16 %v908
        %v2154 = vunpack.c.h.b16 %v908
        %v2155 = vunpack.c.l.b16 %v909
        %v2156 = vunpack.c.h.b16 %v909
        %v2157 = vunpack.c.l.b16 %v910
        %v2158 = vunpack.c.h.b16 %v910
        %v2159 = vunpack.c.l.b16 %v911
        %v2160 = vunpack.c.h.b16 %v911
        %v2161 = vunpack.c.l.b16 %v912
        %v2162 = vunpack.c.h.b16 %v912
        %v2163 = vunpack.c.l.b16 %v913
        %v2164 = vunpack.c.h.b16 %v913
        %v2165 = vunpack.c.l.b16 %v914
        %v2166 = vunpack.c.h.b16 %v914
        %v2167 = vunpack.c.l.b16 %v915
        %v2168 = vunpack.c.h.b16 %v915
        %v2169 = vunpack.c.l.b16 %v916
        %v2170 = vunpack.c.h.b16 %v916
        %v2171 = vunpack.c.l.b16 %v917
        %v2172 = vunpack.c.h.b16 %v917
        %v2173 = vunpack.c.l.b16 %v918
        %v2174 = vunpack.c.h.b16 %v918
        %v2175 = vunpack.c.l.b16 %v919
        %v2176 = vunpack.c.h.b16 %v919
        %v2177 = vunpack.c.l.b16 %v920
        %v2178 = vunpack.c.h.b16 %v920
        %v2179 = vunpack.c.l.b16 %v921
        %v2180 = vunpack.c.h.b16 %v921
        %v2181 = vunpack.c.l.b16 %v922
        %v2182 = vunpack.c.h.b16 %v922
        %v2183 = vunpack.c.l.b16 %v923
        %v2184 = vunpack.c.h.b16 %v923
        %v2185 = vunpack.c.l.b16 %v924
        %v2186 = vunpack.c.h.b16 %v924
        %v2187 = vunpack.c.l.b16 %v925
        %v2188 = vunpack.c.h.b16 %v925
        %v2189 = vunpack.c.l.b16 %v926
        %v2190 = vunpack.c.h.b16 %v926
        %v2191 = vunpack.c.l.b16 %v927
        %v2192 = vunpack.c.h.b16 %v927
        %v2193 = vunpack.c.l.b16 %v928
        %v2194 = vunpack.c.h.b16 %v928
        %v2195 = vunpack.c.l.b16 %v929
        %v2196 = vunpack.c.h.b16 %v929
        %v2197 = vunpack.c.l.b16 %v930
        %v2198 = vunpack.c.h.b16 %v930
        %v2199 = vunpack.c.l.b16 %v931
        %v2200 = vunpack.c.h.b16 %v931
        %v2201 = vunpack.c.l.b16 %v932
        %v2202 = vunpack.c.h.b16 %v932
        %v2203 = vunpack.c.l.b16 %v933
        %v2204 = vunpack.c.h.b16 %v933
        %v2205 = vunpack.c.l.b16 %v934
        %v2206 = vunpack.c.h.b16 %v934
        %v2207 = vunpack.c.l.b16 %v935
        %v2208 = vunpack.c.h.b16 %v935
        %v2209 = vunpack.c.l.b16 %v936
        %v2210 = vunpack.c.h.b16 %v936
        %v2211 = vunpack.c.l.b16 %v937
        %v2212 = vunpack.c.h.b16 %v937
        %v2213 = vunpack.c.l.b16 %v938
        %v2214 = vunpack.c.h.b16 %v938
        %v2215 = vunpack.c.l.b16 %v939
        %v2216 = vunpack.c.h.b16 %v939
        %v2217 = vunpack.c.l.b16 %v940
        %v2218 = vunpack.c.h.b16 %v940
        %v2219 = vpack.c.b16 %v1971, %v1963
        %v2220 = vpack.c.b16 %v1972, %v1964
        %v2221 = vpack.c.b16 %v1973, %v1965
        %v2222 = vpack.c.b16 %v1974, %v1966
        %v2223 = vpack.c.b16 %v1975, %v1967
        %v2224 = vpack.c.b16 %v1976, %v1968
        %v2225 = vpack.c.b16 %v1977, %v1969
        %v2226 = vpack.c.b16 %v1978, %v1970
        %v2227 = vpack.c.b16 %v1987, %v1979
        %v2228 = vpack.c.b16 %v1988, %v1980
        %v2229 = vpack.c.b16 %v1989, %v1981
        %v2230 = vpack.c.b16 %v1990, %v1982
        %v2231 = vpack.c.b16 %v1991, %v1983
        %v2232 = vpack.c.b16 %v1992, %v1984
        %v2233 = vpack.c.b16 %v1993, %v1985
        %v2234 = vpack.c.b16 %v1994, %v1986
        %v2235 = vpack.c.b16 %v2003, %v1995
        %v2236 = vpack.c.b16 %v2004, %v1996
        %v2237 = vpack.c.b16 %v2005, %v1997
        %v2238 = vpack.c.b16 %v2006, %v1998
        %v2239 = vpack.c.b16 %v2007, %v1999
        %v2240 = vpack.c.b16 %v2008, %v2000
        %v2241 = vpack.c.b16 %v2009, %v2001
        %v2242 = vpack.c.b16 %v2010, %v2002
        %v2243 = vpack.c.b16 %v2019, %v2011
        %v2244 = vpack.c.b16 %v2020, %v2012
        %v2245 = vpack.c.b16 %v2021, %v2013
        %v2246 = vpack.c.b16 %v2022, %v2014
        %v2247 = vpack.c.b16 %v2023, %v2015
        %v2248 = vpack.c.b16 %v2024, %v2016
        %v2249 = vpack.c.b16 %v2025, %v2017
        %v2250 = vpack.c.b16 %v2026, %v2018
        %v2251 = vpack.c.b16 %v2035, %v2027
        %v2252 = vpack.c.b16 %v2036, %v2028
        %v2253 = vpack.c.b16 %v2037, %v2029
        %v2254 = vpack.c.b16 %v2038, %v2030
        %v2255 = vpack.c.b16 %v2039, %v2031
        %v2256 = vpack.c.b16 %v2040, %v2032
        %v2257 = vpack.c.b16 %v2041, %v2033
        %v2258 = vpack.c.b16 %v2042, %v2034
        %v2259 = vpack.c.b16 %v2051, %v2043
        %v2260 = vpack.c.b16 %v2052, %v2044
        %v2261 = vpack.c.b16 %v2053, %v2045
        %v2262 = vpack.c.b16 %v2054, %v2046
        %v2263 = vpack.c.b16 %v2055, %v2047
        %v2264 = vpack.c.b16 %v2056, %v2048
        %v2265 = vpack.c.b16 %v2057, %v2049
        %v2266 = vpack.c.b16 %v2058, %v2050
        %v2267 = vpack.c.b16 %v2067, %v2059
        %v2268 = vpack.c.b16 %v2068, %v2060
        %v2269 = vpack.c.b16 %v2069, %v2061
        %v2270 = vpack.c.b16 %v2070, %v2062
        %v2271 = vpack.c.b16 %v2071, %v2063
        %v2272 = vpack.c.b16 %v2072, %v2064
        %v2273 = vpack.c.b16 %v2073, %v2065
        %v2274 = vpack.c.b16 %v2074, %v2066
        %v2275 = vpack.c.b16 %v2083, %v2075
        %v2276 = vpack.c.b16 %v2084, %v2076
        %v2277 = vpack.c.b16 %v2085, %v2077
        %v2278 = vpack.c.b16 %v2086, %v2078
        %v2279 = vpack.c.b16 %v2087, %v2079
        %v2280 = vpack.c.b16 %v2088, %v2080
        %v2281 = vpack.c.b16 %v2089, %v2081
        %v2282 = vpack.c.b16 %v2090, %v2082
        %v2283 = vpack.c.b16 %v2099, %v2091
        %v2284 = vpack.c.b16 %v2100, %v2092
        %v2285 = vpack.c.b16 %v2101, %v2093
        %v2286 = vpack.c.b16 %v2102, %v2094
        %v2287 = vpack.c.b16 %v2103, %v2095
        %v2288 = vpack.c.b16 %v2104, %v2096
        %v2289 = vpack.c.b16 %v2105, %v2097
        %v2290 = vpack.c.b16 %v2106, %v2098
        %v2291 = vpack.c.b16 %v2115, %v2107
        %v2292 = vpack.c.b16 %v2116, %v2108
        %v2293 = vpack.c.b16 %v2117, %v2109
        %v2294 = vpack.c.b16 %v2118, %v2110
        %v2295 = vpack.c.b16 %v2119, %v2111
        %v2296 = vpack.c.b16 %v2120, %v2112
        %v2297 = vpack.c.b16 %v2121, %v2113
        %v2298 = vpack.c.b16 %v2122, %v2114
        %v2299 = vpack.c.b16 %v2131, %v2123
        %v2300 = vpack.c.b16 %v2132, %v2124
        %v2301 = vpack.c.b16 %v2133, %v2125
        %v2302 = vpack.c.b16 %v2134, %v2126
        %v2303 = vpack.c.b16 %v2135, %v2127
        %v2304 = vpack.c.b16 %v2136, %v2128
        %v2305 = vpack.c.b16 %v2137, %v2129
        %v2306 = vpack.c.b16 %v2138, %v2130
        %v2307 = vpack.c.b16 %v2147, %v2139
        %v2308 = vpack.c.b16 %v2148, %v2140
        %v2309 = vpack.c.b16 %v2149, %v2141
        %v2310 = vpack.c.b16 %v2150, %v2142
        %v2311 = vpack.c.b16 %v2151, %v2143
        %v2312 = vpack.c.b16 %v2152, %v2144
        %v2313 = vpack.c.b16 %v2153, %v2145
        %v2314 = vpack.c.b16 %v2154, %v2146
        %v2315 = vpack.c.b16 %v2163, %v2155
        %v2316 = vpack.c.b16 %v2164, %v2156
        %v2317 = vpack.c.b16 %v2165, %v2157
        %v2318 = vpack.c.b16 %v2166, %v2158
        %v2319 = vpack.c.b16 %v2167, %v2159
        %v2320 = vpack.c.b16 %v2168, %v2160
        %v2321 = vpack.c.b16 %v2169, %v2161
        %v2322 = vpack.c.b16 %v2170, %v2162
        %v2323 = vpack.c.b16 %v2179, %v2171
        %v2324 = vpack.c.b16 %v2180, %v2172
        %v2325 = vpack.c.b16 %v2181, %v2173
        %v2326 = vpack.c.b16 %v2182, %v2174
        %v2327 = vpack.c.b16 %v2183, %v2175
        %v2328 = vpack.c.b16 %v2184, %v2176
        %v2329 = vpack.c.b16 %v2185, %v2177
        %v2330 = vpack.c.b16 %v2186, %v2178
        %v2331 = vpack.c.b16 %v2195, %v2187
        %v2332 = vpack.c.b16 %v2196, %v2188
        %v2333 = vpack.c.b16 %v2197, %v2189
        %v2334 = vpack.c.b16 %v2198, %v2190
        %v2335 = vpack.c.b16 %v2199, %v2191
        %v2336 = vpack.c.b16 %v2200, %v2192
        %v2337 = vpack.c.b16 %v2201, %v2193
        %v2338 = vpack.c.b16 %v2202, %v2194
        %v2339 = vpack.c.b16 %v2211, %v2203
        %v2340 = vpack.c.b16 %v2212, %v2204
        %v2341 = vpack.c.b16 %v2213, %v2205
        %v2342 = vpack.c.b16 %v2214, %v2206
        %v2343 = vpack.c.b16 %v2215, %v2207
        %v2344 = vpack.c.b16 %v2216, %v2208
        %v2345 = vpack.c.b16 %v2217, %v2209
        %v2346 = vpack.c.b16 %v2218, %v2210
        %2475 = vmatprep.subr.bf16.mxu0 %v2220
        %2476 = vmatpush1.bf16.msra.mxu0 %v2219
        %2477 = vmatprep.subr.bf16.mxu0 %v2228
        %2478 = vmatpush1.bf16.msra.mxu0 %v2227
        %2479 = vmatprep.subr.bf16.mxu0 %v2236
        %2480 = vmatpush1.bf16.msra.mxu0 %v2235
        %2481 = vmatprep.subr.bf16.mxu0 %v2244
        %2482 = vmatpush1.bf16.msra.mxu0 %v2243
        %2483 = vmatprep.subr.bf16.mxu0 %v2252
        %2484 = vmatpush1.bf16.msra.mxu0 %v2251
        %2485 = vmatprep.subr.bf16.mxu0 %v2260
        %2486 = vmatpush1.bf16.msra.mxu0 %v2259
        %2487 = vmatprep.subr.bf16.mxu0 %v2268
        %2488 = vmatpush1.bf16.msra.mxu0 %v2267
        %2489 = vmatprep.subr.bf16.mxu0 %v2276
        %2490 = vmatpush1.bf16.msra.mxu0 %v2275
        %2491 = vmatprep.subr.bf16.mxu0 %v2284
        %2492 = vmatpush1.bf16.msra.mxu0 %v2283
        %2493 = vmatprep.subr.bf16.mxu0 %v2292
        %2494 = vmatpush1.bf16.msra.mxu0 %v2291
        %2495 = vmatprep.subr.bf16.mxu0 %v2300
        %2496 = vmatpush1.bf16.msra.mxu0 %v2299
        %2497 = vmatprep.subr.bf16.mxu0 %v2308
        %2498 = vmatpush1.bf16.msra.mxu0 %v2307
        %2499 = vmatprep.subr.bf16.mxu0 %v2316
        %2500 = vmatpush1.bf16.msra.mxu0 %v2315
        %2501 = vmatprep.subr.bf16.mxu0 %v2324
        %2502 = vmatpush1.bf16.msra.mxu0 %v2323
        %2503 = vmatprep.subr.bf16.mxu0 %v2332
        %2504 = vmatpush1.bf16.msra.mxu0 %v2331
        %2505 = vmatprep.subr.bf16.mxu0 %v2340
        %2506 = vmatpush1.bf16.msra.mxu0 %v2339
        %2507 = vmatprep.mubr.bf16.mxu0 %v1834
        %2508 = vmatmul.mubr.bf16.gmra.mrb[0].mxu0 %v1833
        %v2509 = vpop.f32.mrb[0].mxu0
        %v2510 = vadd.f32 0.0, %v2509
        %v2511 = vpop.f32.mrb[0].mxu0
        %v2512 = vadd.f32 0.0, %v2511
        %v2513 = vpop.f32.mrb[0].mxu0
        %v2514 = vpop.f32.mrb[0].mxu0
        %2515 = vdwg.mxu0
        %2516 = vmatprep.subr.bf16.mxu0 %v2222
        %2517 = vmatpush1.bf16.msra.mxu0 %v2221
        %2518 = vmatprep.subr.bf16.mxu0 %v2230
        %2519 = vmatpush1.bf16.msra.mxu0 %v2229
        %2520 = vmatprep.subr.bf16.mxu0 %v2238
        %2521 = vmatpush1.bf16.msra.mxu0 %v2237
        %2522 = vmatprep.subr.bf16.mxu0 %v2246
        %2523 = vmatpush1.bf16.msra.mxu0 %v2245
        %2524 = vmatprep.subr.bf16.mxu0 %v2254
        %2525 = vmatpush1.bf16.msra.mxu0 %v2253
        %2526 = vmatprep.subr.bf16.mxu0 %v2262
        %2527 = vmatpush1.bf16.msra.mxu0 %v2261
        %2528 = vmatprep.subr.bf16.mxu0 %v2270
        %2529 = vmatpush1.bf16.msra.mxu0 %v2269
        %2530 = vmatprep.subr.bf16.mxu0 %v2278
        %2531 = vmatpush1.bf16.msra.mxu0 %v2277
        %2532 = vmatprep.subr.bf16.mxu0 %v2286
        %2533 = vmatpush1.bf16.msra.mxu0 %v2285
        %2534 = vmatprep.subr.bf16.mxu0 %v2294
        %2535 = vmatpush1.bf16.msra.mxu0 %v2293
        %2536 = vmatprep.subr.bf16.mxu0 %v2302
        %2537 = vmatpush1.bf16.msra.mxu0 %v2301
        %2538 = vmatprep.subr.bf16.mxu0 %v2310
        %2539 = vmatpush1.bf16.msra.mxu0 %v2309
        %2540 = vmatprep.subr.bf16.mxu0 %v2318
        %2541 = vmatpush1.bf16.msra.mxu0 %v2317
        %2542 = vmatprep.subr.bf16.mxu0 %v2326
        %2543 = vmatpush1.bf16.msra.mxu0 %v2325
        %2544 = vmatprep.subr.bf16.mxu0 %v2334
        %2545 = vmatpush1.bf16.msra.mxu0 %v2333
        %2546 = vmatprep.subr.bf16.mxu0 %v2342
        %2547 = vmatpush1.bf16.msra.mxu0 %v2341
        %2548 = vmatprep.mubr.bf16.mxu0 %v1834
        %2549 = vmatmul.mubr.bf16.gmra.mrb[0].mxu0 %v1833
        %v2550 = vpop.f32.mrb[0].mxu0
        %v2551 = vadd.f32 0.0, %v2550
        %v2552 = vpop.f32.mrb[0].mxu0
        %v2553 = vadd.f32 0.0, %v2552
        %v2554 = vpop.f32.mrb[0].mxu0
        %v2555 = vpop.f32.mrb[0].mxu0
        %2556 = vdwg.mxu0
        %2557 = vmatprep.subr.bf16.mxu0 %v2224
        %2558 = vmatpush1.bf16.msra.mxu0 %v2223
        %2559 = vmatprep.subr.bf16.mxu0 %v2232
        %2560 = vmatpush1.bf16.msra.mxu0 %v2231
        %2561 = vmatprep.subr.bf16.mxu0 %v2240
        %2562 = vmatpush1.bf16.msra.mxu0 %v2239
        %2563 = vmatprep.subr.bf16.mxu0 %v2248
        %2564 = vmatpush1.bf16.msra.mxu0 %v2247
        %2565 = vmatprep.subr.bf16.mxu0 %v2256
        %2566 = vmatpush1.bf16.msra.mxu0 %v2255
        %2567 = vmatprep.subr.bf16.mxu0 %v2264
        %2568 = vmatpush1.bf16.msra.mxu0 %v2263
        %2569 = vmatprep.subr.bf16.mxu0 %v2272
        %2570 = vmatpush1.bf16.msra.mxu0 %v2271
        %2571 = vmatprep.subr.bf16.mxu0 %v2280
        %2572 = vmatpush1.bf16.msra.mxu0 %v2279
        %2573 = vmatprep.subr.bf16.mxu0 %v2288
        %2574 = vmatpush1.bf16.msra.mxu0 %v2287
        %2575 = vmatprep.subr.bf16.mxu0 %v2296
        %2576 = vmatpush1.bf16.msra.mxu0 %v2295
        %2577 = vmatprep.subr.bf16.mxu0 %v2304
        %2578 = vmatpush1.bf16.msra.mxu0 %v2303
        %2579 = vmatprep.subr.bf16.mxu0 %v2312
        %2580 = vmatpush1.bf16.msra.mxu0 %v2311
        %2581 = vmatprep.subr.bf16.mxu0 %v2320
        %2582 = vmatpush1.bf16.msra.mxu0 %v2319
        %2583 = vmatprep.subr.bf16.mxu0 %v2328
        %2584 = vmatpush1.bf16.msra.mxu0 %v2327
        %2585 = vmatprep.subr.bf16.mxu0 %v2336
        %2586 = vmatpush1.bf16.msra.mxu0 %v2335
        %2587 = vmatprep.subr.bf16.mxu0 %v2344
        %2588 = vmatpush1.bf16.msra.mxu0 %v2343
        %2589 = vmatprep.mubr.bf16.mxu0 %v1834
        %2590 = vmatmul.mubr.bf16.gmra.mrb[0].mxu0 %v1833
        %v2591 = vpop.f32.mrb[0].mxu0
        %v2592 = vadd.f32 0.0, %v2591
        %v2593 = vpop.f32.mrb[0].mxu0
        %v2594 = vadd.f32 0.0, %v2593
        %v2595 = vpop.f32.mrb[0].mxu0
        %v2596 = vpop.f32.mrb[0].mxu0
        %2597 = vdwg.mxu0
        %2598 = vmatprep.subr.bf16.mxu0 %v2226
        %2599 = vmatpush1.bf16.msra.mxu0 %v2225
        %2600 = vmatprep.subr.bf16.mxu0 %v2234
        %2601 = vmatpush1.bf16.msra.mxu0 %v2233
        %2602 = vmatprep.subr.bf16.mxu0 %v2242
        %2603 = vmatpush1.bf16.msra.mxu0 %v2241
        %2604 = vmatprep.subr.bf16.mxu0 %v2250
        %2605 = vmatpush1.bf16.msra.mxu0 %v2249
        %2606 = vmatprep.subr.bf16.mxu0 %v2258
        %2607 = vmatpush1.bf16.msra.mxu0 %v2257
        %2608 = vmatprep.subr.bf16.mxu0 %v2266
        %2609 = vmatpush1.bf16.msra.mxu0 %v2265
        %2610 = vmatprep.subr.bf16.mxu0 %v2274
        %2611 = vmatpush1.bf16.msra.mxu0 %v2273
        %2612 = vmatprep.subr.bf16.mxu0 %v2282
        %2613 = vmatpush1.bf16.msra.mxu0 %v2281
        %2614 = vmatprep.subr.bf16.mxu0 %v2290
        %2615 = vmatpush1.bf16.msra.mxu0 %v2289
        %2616 = vmatprep.subr.bf16.mxu0 %v2298
        %2617 = vmatpush1.bf16.msra.mxu0 %v2297
        %2618 = vmatprep.subr.bf16.mxu0 %v2306
        %2619 = vmatpush1.bf16.msra.mxu0 %v2305
        %2620 = vmatprep.subr.bf16.mxu0 %v2314
        %2621 = vmatpush1.bf16.msra.mxu0 %v2313
        %2622 = vmatprep.subr.bf16.mxu0 %v2322
        %2623 = vmatpush1.bf16.msra.mxu0 %v2321
        %2624 = vmatprep.subr.bf16.mxu0 %v2330
        %2625 = vmatpush1.bf16.msra.mxu0 %v2329
        %2626 = vmatprep.subr.bf16.mxu0 %v2338
        %2627 = vmatpush1.bf16.msra.mxu0 %v2337
        %2628 = vmatprep.subr.bf16.mxu0 %v2346
        %2629 = vmatpush1.bf16.msra.mxu0 %v2345
        %2630 = vmatprep.mubr.bf16.mxu0 %v1834
        %2631 = vmatmul.mubr.bf16.gmra.mrb[0].mxu0 %v1833
        %v2632 = vpop.f32.mrb[0].mxu0
        %v2633 = vadd.f32 0.0, %v2632
        %v2634 = vpop.f32.mrb[0].mxu0
        %v2635 = vadd.f32 0.0, %v2634
        %v2636 = vpop.f32.mrb[0].mxu0
        %v2637 = vpop.f32.mrb[0].mxu0
        %2638 = vdwg.mxu0
        %v2643 = vrot.slane %v2510, 6
        %v2644 = vrot.slane %v2512, 6
        %v2645 = vrot.slane %v2551, 6
        %v2646 = vrot.slane %v2553, 6
        %v2651 = vadd.f32 %v1320, %v2643
        %v2652 = vadd.f32 %v1322, %v2644
        %v2653 = vadd.f32 %v1363, %v2645
        %v2654 = vadd.f32 %v1365, %v2646
        %v2659 = vrot.slane %v2592, 4
        %v2660 = vrot.slane %v2594, 4
        %v2661 = vrot.slane %v2633, 4
        %v2662 = vrot.slane %v2635, 4
        %v2667 = vadd.f32 %v1751, %v2659
        %v2668 = vadd.f32 %v1753, %v2660
        %v2669 = vadd.f32 %v1794, %v2661
        %v2670 = vadd.f32 %v1796, %v2662
        %v2671 = vxor.u32 %v2651, 2147483648
        %v2672 = vmul.f32 %v2671, 1.442695
        %v2673 = vpow.pop %v2672
        %v2674 = vadd.f32 %v2673, 1.0
        %v2675 = vrcp.pop %v2674
        %v2676 = vmul.f32 1.0, %v2675
        %v2677 = vxor.u32 %v2667, 2147483648
        %v2678 = vmul.f32 %v2677, 1.442695
        %v2679 = vpow.pop %v2678
        %v2680 = vadd.f32 %v2679, 1.0
        %v2681 = vrcp.pop %v2680
        %v2682 = vmul.f32 1.0, %v2681
        %v2683 = vxor.u32 %v2652, 2147483648
        %v2684 = vmul.f32 %v2683, 1.442695
        %v2685 = vpow.pop %v2684
        %v2686 = vadd.f32 %v2685, 1.0
        %v2687 = vrcp.pop %v2686
        %v2688 = vmul.f32 1.0, %v2687
        %v2689 = vxor.u32 %v2668, 2147483648
        %v2690 = vmul.f32 %v2689, 1.442695
        %v2691 = vpow.pop %v2690
        %v2692 = vadd.f32 %v2691, 1.0
        %v2693 = vrcp.pop %v2692
        %v2694 = vmul.f32 1.0, %v2693
        %v2695 = vtanh.pop %v2653
        %v2696 = vtanh.pop %v2669
        %v2697 = vxor.u32 %v2654, 2147483648
        %v2698 = vmul.f32 %v2697, 1.442695
        %v2699 = vpow.pop %v2698
        %v2700 = vadd.f32 %v2699, 1.0
        %v2701 = vrcp.pop %v2700
        %v2702 = vmul.f32 1.0, %v2701
        %v2703 = vxor.u32 %v2670, 2147483648
        %v2704 = vmul.f32 %v2703, 1.442695
        %v2705 = vpow.pop %v2704
        %v2706 = vadd.f32 %v2705, 1.0
        %v2707 = vrcp.pop %v2706
        %v2708 = vmul.f32 1.0, %v2707
        %v2710 = vrot.slane %v1824, 6
        %v2712 = vmul.f32 %v2688, %v2710
        %v2713 = vmul.f32 %v2676, %v2695
        %v2714 = vadd.f32 %v2712, %v2713
        %v2716 = vrot.slane %v1825, 2
        %v2718 = vmul.f32 %v2694, %v2716
        %v2719 = vmul.f32 %v2682, %v2696
        %v2720 = vadd.f32 %v2718, %v2719
        %v2721 = vtanh.pop %v2714
        %v2722 = vmul.f32 %v2702, %v2721
        %v2723 = vtanh.pop %v2720
        %v2724 = vmul.f32 %v2708, %v2723
        %v2726 = vrot.slane %v2724, 2
        %v2728 = vpack.c.bf16 %v2722, %v2722
        %v2729 = vpack.c.bf16 %v2726, %v2726
        %v2732 = vrot.slane %v2728, 1
        %v2733 = vrot.slane %v2729, 1
        %2736 = vmatprep.subr.bf16.mxu0 %v2220
        %2737 = vmatpush1.bf16.msra.mxu0 %v2219
        %2738 = vmatprep.subr.bf16.mxu0 %v2228
        %2739 = vmatpush1.bf16.msra.mxu0 %v2227
        %2740 = vmatprep.subr.bf16.mxu0 %v2236
        %2741 = vmatpush1.bf16.msra.mxu0 %v2235
        %2742 = vmatprep.subr.bf16.mxu0 %v2244
        %2743 = vmatpush1.bf16.msra.mxu0 %v2243
        %2744 = vmatprep.subr.bf16.mxu0 %v2252
        %2745 = vmatpush1.bf16.msra.mxu0 %v2251
        %2746 = vmatprep.subr.bf16.mxu0 %v2260
        %2747 = vmatpush1.bf16.msra.mxu0 %v2259
        %2748 = vmatprep.subr.bf16.mxu0 %v2268
        %2749 = vmatpush1.bf16.msra.mxu0 %v2267
        %2750 = vmatprep.subr.bf16.mxu0 %v2276
        %2751 = vmatpush1.bf16.msra.mxu0 %v2275
        %2752 = vmatprep.subr.bf16.mxu0 %v2284
        %2753 = vmatpush1.bf16.msra.mxu0 %v2283
        %2754 = vmatprep.subr.bf16.mxu0 %v2292
        %2755 = vmatpush1.bf16.msra.mxu0 %v2291
        %2756 = vmatprep.subr.bf16.mxu0 %v2300
        %2757 = vmatpush1.bf16.msra.mxu0 %v2299
        %2758 = vmatprep.subr.bf16.mxu0 %v2308
        %2759 = vmatpush1.bf16.msra.mxu0 %v2307
        %2760 = vmatprep.subr.bf16.mxu0 %v2316
        %2761 = vmatpush1.bf16.msra.mxu0 %v2315
        %2762 = vmatprep.subr.bf16.mxu0 %v2324
        %2763 = vmatpush1.bf16.msra.mxu0 %v2323
        %2764 = vmatprep.subr.bf16.mxu0 %v2332
        %2765 = vmatpush1.bf16.msra.mxu0 %v2331
        %2766 = vmatprep.subr.bf16.mxu0 %v2340
        %2767 = vmatpush1.bf16.msra.mxu0 %v2339
        %2768 = vmatprep.mubr.bf16.mxu0 %v2733
        %2769 = vmatmul.mubr.bf16.gmra.mrb[0].mxu0 %v2732
        %v2770 = vpop.f32.mrb[0].mxu0
        %v2771 = vadd.f32 0.0, %v2770
        %v2772 = vpop.f32.mrb[0].mxu0
        %v2773 = vadd.f32 0.0, %v2772
        %v2774 = vpop.f32.mrb[0].mxu0
        %v2775 = vpop.f32.mrb[0].mxu0
        %2776 = vdwg.mxu0
        %2777 = vmatprep.subr.bf16.mxu0 %v2222
        %2778 = vmatpush1.bf16.msra.mxu0 %v2221
        %2779 = vmatprep.subr.bf16.mxu0 %v2230
        %2780 = vmatpush1.bf16.msra.mxu0 %v2229
        %2781 = vmatprep.subr.bf16.mxu0 %v2238
        %2782 = vmatpush1.bf16.msra.mxu0 %v2237
        %2783 = vmatprep.subr.bf16.mxu0 %v2246
        %2784 = vmatpush1.bf16.msra.mxu0 %v2245
        %2785 = vmatprep.subr.bf16.mxu0 %v2254
        %2786 = vmatpush1.bf16.msra.mxu0 %v2253
        %2787 = vmatprep.subr.bf16.mxu0 %v2262
        %2788 = vmatpush1.bf16.msra.mxu0 %v2261
        %2789 = vmatprep.subr.bf16.mxu0 %v2270
        %2790 = vmatpush1.bf16.msra.mxu0 %v2269
        %2791 = vmatprep.subr.bf16.mxu0 %v2278
        %2792 = vmatpush1.bf16.msra.mxu0 %v2277
        %2793 = vmatprep.subr.bf16.mxu0 %v2286
        %2794 = vmatpush1.bf16.msra.mxu0 %v2285
        %2795 = vmatprep.subr.bf16.mxu0 %v2294
        %2796 = vmatpush1.bf16.msra.mxu0 %v2293
        %2797 = vmatprep.subr.bf16.mxu0 %v2302
        %2798 = vmatpush1.bf16.msra.mxu0 %v2301
        %2799 = vmatprep.subr.bf16.mxu0 %v2310
        %2800 = vmatpush1.bf16.msra.mxu0 %v2309
        %2801 = vmatprep.subr.bf16.mxu0 %v2318
        %2802 = vmatpush1.bf16.msra.mxu0 %v2317
        %2803 = vmatprep.subr.bf16.mxu0 %v2326
        %2804 = vmatpush1.bf16.msra.mxu0 %v2325
        %2805 = vmatprep.subr.bf16.mxu0 %v2334
        %2806 = vmatpush1.bf16.msra.mxu0 %v2333
        %2807 = vmatprep.subr.bf16.mxu0 %v2342
        %2808 = vmatpush1.bf16.msra.mxu0 %v2341
        %2809 = vmatprep.mubr.bf16.mxu0 %v2733
        %2810 = vmatmul.mubr.bf16.gmra.mrb[0].mxu0 %v2732
        %v2811 = vpop.f32.mrb[0].mxu0
        %v2812 = vadd.f32 0.0, %v2811
        %v2813 = vpop.f32.mrb[0].mxu0
        %v2814 = vadd.f32 0.0, %v2813
        %v2815 = vpop.f32.mrb[0].mxu0
        %v2816 = vpop.f32.mrb[0].mxu0
        %2817 = vdwg.mxu0
        %2818 = vmatprep.subr.bf16.mxu0 %v2224
        %2819 = vmatpush1.bf16.msra.mxu0 %v2223
        %2820 = vmatprep.subr.bf16.mxu0 %v2232
        %2821 = vmatpush1.bf16.msra.mxu0 %v2231
        %2822 = vmatprep.subr.bf16.mxu0 %v2240
        %2823 = vmatpush1.bf16.msra.mxu0 %v2239
        %2824 = vmatprep.subr.bf16.mxu0 %v2248
        %2825 = vmatpush1.bf16.msra.mxu0 %v2247
        %2826 = vmatprep.subr.bf16.mxu0 %v2256
        %2827 = vmatpush1.bf16.msra.mxu0 %v2255
        %2828 = vmatprep.subr.bf16.mxu0 %v2264
        %2829 = vmatpush1.bf16.msra.mxu0 %v2263
        %2830 = vmatprep.subr.bf16.mxu0 %v2272
        %2831 = vmatpush1.bf16.msra.mxu0 %v2271
        %2832 = vmatprep.subr.bf16.mxu0 %v2280
        %2833 = vmatpush1.bf16.msra.mxu0 %v2279
        %2834 = vmatprep.subr.bf16.mxu0 %v2288
        %2835 = vmatpush1.bf16.msra.mxu0 %v2287
        %2836 = vmatprep.subr.bf16.mxu0 %v2296
        %2837 = vmatpush1.bf16.msra.mxu0 %v2295
        %2838 = vmatprep.subr.bf16.mxu0 %v2304
        %2839 = vmatpush1.bf16.msra.mxu0 %v2303
        %2840 = vmatprep.subr.bf16.mxu0 %v2312
        %2841 = vmatpush1.bf16.msra.mxu0 %v2311
        %2842 = vmatprep.subr.bf16.mxu0 %v2320
        %2843 = vmatpush1.bf16.msra.mxu0 %v2319
        %2844 = vmatprep.subr.bf16.mxu0 %v2328
        %2845 = vmatpush1.bf16.msra.mxu0 %v2327
        %2846 = vmatprep.subr.bf16.mxu0 %v2336
        %2847 = vmatpush1.bf16.msra.mxu0 %v2335
        %2848 = vmatprep.subr.bf16.mxu0 %v2344
        %2849 = vmatpush1.bf16.msra.mxu0 %v2343
        %2850 = vmatprep.mubr.bf16.mxu0 %v2733
        %2851 = vmatmul.mubr.bf16.gmra.mrb[0].mxu0 %v2732
        %v2852 = vpop.f32.mrb[0].mxu0
        %v2853 = vadd.f32 0.0, %v2852
        %v2854 = vpop.f32.mrb[0].mxu0
        %v2855 = vadd.f32 0.0, %v2854
        %v2856 = vpop.f32.mrb[0].mxu0
        %v2857 = vpop.f32.mrb[0].mxu0
        %2858 = vdwg.mxu0
        %2859 = vmatprep.subr.bf16.mxu0 %v2226
        %2860 = vmatpush1.bf16.msra.mxu0 %v2225
        %2861 = vmatprep.subr.bf16.mxu0 %v2234
        %2862 = vmatpush1.bf16.msra.mxu0 %v2233
        %2863 = vmatprep.subr.bf16.mxu0 %v2242
        %2864 = vmatpush1.bf16.msra.mxu0 %v2241
        %2865 = vmatprep.subr.bf16.mxu0 %v2250
        %2866 = vmatpush1.bf16.msra.mxu0 %v2249
        %2867 = vmatprep.subr.bf16.mxu0 %v2258
        %2868 = vmatpush1.bf16.msra.mxu0 %v2257
        %2869 = vmatprep.subr.bf16.mxu0 %v2266
        %2870 = vmatpush1.bf16.msra.mxu0 %v2265
        %2871 = vmatprep.subr.bf16.mxu0 %v2274
        %2872 = vmatpush1.bf16.msra.mxu0 %v2273
        %2873 = vmatprep.subr.bf16.mxu0 %v2282
        %2874 = vmatpush1.bf16.msra.mxu0 %v2281
        %2875 = vmatprep.subr.bf16.mxu0 %v2290
        %2876 = vmatpush1.bf16.msra.mxu0 %v2289
        %2877 = vmatprep.subr.bf16.mxu0 %v2298
        %2878 = vmatpush1.bf16.msra.mxu0 %v2297
        %2879 = vmatprep.subr.bf16.mxu0 %v2306
        %2880 = vmatpush1.bf16.msra.mxu0 %v2305
        %2881 = vmatprep.subr.bf16.mxu0 %v2314
        %2882 = vmatpush1.bf16.msra.mxu0 %v2313
        %2883 = vmatprep.subr.bf16.mxu0 %v2322
        %2884 = vmatpush1.bf16.msra.mxu0 %v2321
        %2885 = vmatprep.subr.bf16.mxu0 %v2330
        %2886 = vmatpush1.bf16.msra.mxu0 %v2329
        %2887 = vmatprep.subr.bf16.mxu0 %v2338
        %2888 = vmatpush1.bf16.msra.mxu0 %v2337
        %2889 = vmatprep.subr.bf16.mxu0 %v2346
        %2890 = vmatpush1.bf16.msra.mxu0 %v2345
        %2891 = vmatprep.mubr.bf16.mxu0 %v2733
        %2892 = vmatmul.mubr.bf16.gmra.mrb[0].mxu0 %v2732
        %v2893 = vpop.f32.mrb[0].mxu0
        %v2894 = vadd.f32 0.0, %v2893
        %v2895 = vpop.f32.mrb[0].mxu0
        %v2896 = vadd.f32 0.0, %v2895
        %v2897 = vpop.f32.mrb[0].mxu0
        %v2898 = vpop.f32.mrb[0].mxu0
        %2899 = vdwg.mxu0
        %v2904 = vrot.slane %v2771, 4
        %v2905 = vrot.slane %v2773, 4
        %v2906 = vrot.slane %v2812, 4
        %v2907 = vrot.slane %v2814, 4
        %v2912 = vadd.f32 %v1320, %v2904
        %v2913 = vadd.f32 %v1322, %v2905
        %v2914 = vadd.f32 %v1363, %v2906
        %v2915 = vadd.f32 %v1365, %v2907
        %v2920 = vrot.slane %v2853, 6
        %v2921 = vrot.slane %v2855, 6
        %v2922 = vrot.slane %v2894, 6
        %v2923 = vrot.slane %v2896, 6
        %v2928 = vadd.f32 %v1751, %v2920
        %v2929 = vadd.f32 %v1753, %v2921
        %v2930 = vadd.f32 %v1794, %v2922
        %v2931 = vadd.f32 %v1796, %v2923
        %v2932 = vxor.u32 %v2912, 2147483648
        %v2933 = vmul.f32 %v2932, 1.442695
        %v2934 = vpow.pop %v2933
        %v2935 = vadd.f32 %v2934, 1.0
        %v2936 = vrcp.pop %v2935
        %v2937 = vmul.f32 1.0, %v2936
        %v2938 = vxor.u32 %v2928, 2147483648
        %v2939 = vmul.f32 %v2938, 1.442695
        %v2940 = vpow.pop %v2939
        %v2941 = vadd.f32 %v2940, 1.0
        %v2942 = vrcp.pop %v2941
        %v2943 = vmul.f32 1.0, %v2942
        %v2944 = vxor.u32 %v2913, 2147483648
        %v2945 = vmul.f32 %v2944, 1.442695
        %v2946 = vpow.pop %v2945
        %v2947 = vadd.f32 %v2946, 1.0
        %v2948 = vrcp.pop %v2947
        %v2949 = vmul.f32 1.0, %v2948
        %v2950 = vxor.u32 %v2929, 2147483648
        %v2951 = vmul.f32 %v2950, 1.442695
        %v2952 = vpow.pop %v2951
        %v2953 = vadd.f32 %v2952, 1.0
        %v2954 = vrcp.pop %v2953
        %v2955 = vmul.f32 1.0, %v2954
        %v2956 = vtanh.pop %v2914
        %v2957 = vtanh.pop %v2930
        %v2958 = vxor.u32 %v2915, 2147483648
        %v2959 = vmul.f32 %v2958, 1.442695
        %v2960 = vpow.pop %v2959
        %v2961 = vadd.f32 %v2960, 1.0
        %v2962 = vrcp.pop %v2961
        %v2963 = vmul.f32 1.0, %v2962
        %v2964 = vxor.u32 %v2931, 2147483648
        %v2965 = vmul.f32 %v2964, 1.442695
        %v2966 = vpow.pop %v2965
        %v2967 = vadd.f32 %v2966, 1.0
        %v2968 = vrcp.pop %v2967
        %v2969 = vmul.f32 1.0, %v2968
        %v2971 = vrot.slane %v2714, 6
        %v2973 = vmul.f32 %v2949, %v2971
        %v2974 = vmul.f32 %v2937, %v2956
        %v2975 = vadd.f32 %v2973, %v2974
        %v2977 = vrot.slane %v2720, 2
        %v2979 = vmul.f32 %v2955, %v2977
        %v2980 = vmul.f32 %v2943, %v2957
        %v2981 = vadd.f32 %v2979, %v2980
        %v2982 = vtanh.pop %v2975
        %v2983 = vmul.f32 %v2963, %v2982
        %v2984 = vtanh.pop %v2981
        %v2985 = vmul.f32 %v2969, %v2984
        %v2987 = vrot.slane %v2985, 6
        %v2989 = vpack.c.bf16 %v2983, %v2983
        %v2990 = vpack.c.bf16 %v2987, %v2987
        %v2993 = vrot.slane %v2989, 2
        %v2994 = vrot.slane %v2990, 2
        %2997 = vmatprep.subr.bf16.mxu0 %v2220
        %2998 = vmatpush1.bf16.msra.mxu0 %v2219
        %2999 = vmatprep.subr.bf16.mxu0 %v2228
        %3000 = vmatpush1.bf16.msra.mxu0 %v2227
        %3001 = vmatprep.subr.bf16.mxu0 %v2236
        %3002 = vmatpush1.bf16.msra.mxu0 %v2235
        %3003 = vmatprep.subr.bf16.mxu0 %v2244
        %3004 = vmatpush1.bf16.msra.mxu0 %v2243
        %3005 = vmatprep.subr.bf16.mxu0 %v2252
        %3006 = vmatpush1.bf16.msra.mxu0 %v2251
        %3007 = vmatprep.subr.bf16.mxu0 %v2260
        %3008 = vmatpush1.bf16.msra.mxu0 %v2259
        %3009 = vmatprep.subr.bf16.mxu0 %v2268
        %3010 = vmatpush1.bf16.msra.mxu0 %v2267
        %3011 = vmatprep.subr.bf16.mxu0 %v2276
        %3012 = vmatpush1.bf16.msra.mxu0 %v2275
        %3013 = vmatprep.subr.bf16.mxu0 %v2284
        %3014 = vmatpush1.bf16.msra.mxu0 %v2283
        %3015 = vmatprep.subr.bf16.mxu0 %v2292
        %3016 = vmatpush1.bf16.msra.mxu0 %v2291
        %3017 = vmatprep.subr.bf16.mxu0 %v2300
        %3018 = vmatpush1.bf16.msra.mxu0 %v2299
        %3019 = vmatprep.subr.bf16.mxu0 %v2308
        %3020 = vmatpush1.bf16.msra.mxu0 %v2307
        %3021 = vmatprep.subr.bf16.mxu0 %v2316
        %3022 = vmatpush1.bf16.msra.mxu0 %v2315
        %3023 = vmatprep.subr.bf16.mxu0 %v2324
        %3024 = vmatpush1.bf16.msra.mxu0 %v2323
        %3025 = vmatprep.subr.bf16.mxu0 %v2332
        %3026 = vmatpush1.bf16.msra.mxu0 %v2331
        %3027 = vmatprep.subr.bf16.mxu0 %v2340
        %3028 = vmatpush1.bf16.msra.mxu0 %v2339
        %3029 = vmatprep.mubr.bf16.mxu0 %v2994
        %3030 = vmatmul.mubr.bf16.gmra.mrb[0].mxu0 %v2993
        %v3031 = vpop.f32.mrb[0].mxu0
        %v3032 = vadd.f32 0.0, %v3031
        %v3033 = vpop.f32.mrb[0].mxu0
        %v3034 = vadd.f32 0.0, %v3033
        %v3035 = vpop.f32.mrb[0].mxu0
        %v3036 = vpop.f32.mrb[0].mxu0
        %3037 = vdwg.mxu0
        %3038 = vmatprep.subr.bf16.mxu0 %v2222
        %3039 = vmatpush1.bf16.msra.mxu0 %v2221
        %3040 = vmatprep.subr.bf16.mxu0 %v2230
        %3041 = vmatpush1.bf16.msra.mxu0 %v2229
        %3042 = vmatprep.subr.bf16.mxu0 %v2238
        %3043 = vmatpush1.bf16.msra.mxu0 %v2237
        %3044 = vmatprep.subr.bf16.mxu0 %v2246
        %3045 = vmatpush1.bf16.msra.mxu0 %v2245
        %3046 = vmatprep.subr.bf16.mxu0 %v2254
        %3047 = vmatpush1.bf16.msra.mxu0 %v2253
        %3048 = vmatprep.subr.bf16.mxu0 %v2262
        %3049 = vmatpush1.bf16.msra.mxu0 %v2261
        %3050 = vmatprep.subr.bf16.mxu0 %v2270
        %3051 = vmatpush1.bf16.msra.mxu0 %v2269
        %3052 = vmatprep.subr.bf16.mxu0 %v2278
        %3053 = vmatpush1.bf16.msra.mxu0 %v2277
        %3054 = vmatprep.subr.bf16.mxu0 %v2286
        %3055 = vmatpush1.bf16.msra.mxu0 %v2285
        %3056 = vmatprep.subr.bf16.mxu0 %v2294
        %3057 = vmatpush1.bf16.msra.mxu0 %v2293
        %3058 = vmatprep.subr.bf16.mxu0 %v2302
        %3059 = vmatpush1.bf16.msra.mxu0 %v2301
        %3060 = vmatprep.subr.bf16.mxu0 %v2310
        %3061 = vmatpush1.bf16.msra.mxu0 %v2309
        %3062 = vmatprep.subr.bf16.mxu0 %v2318
        %3063 = vmatpush1.bf16.msra.mxu0 %v2317
        %3064 = vmatprep.subr.bf16.mxu0 %v2326
        %3065 = vmatpush1.bf16.msra.mxu0 %v2325
        %3066 = vmatprep.subr.bf16.mxu0 %v2334
        %3067 = vmatpush1.bf16.msra.mxu0 %v2333
        %3068 = vmatprep.subr.bf16.mxu0 %v2342
        %3069 = vmatpush1.bf16.msra.mxu0 %v2341
        %3070 = vmatprep.mubr.bf16.mxu0 %v2994
        %3071 = vmatmul.mubr.bf16.gmra.mrb[0].mxu0 %v2993
        %v3072 = vpop.f32.mrb[0].mxu0
        %v3073 = vadd.f32 0.0, %v3072
        %v3074 = vpop.f32.mrb[0].mxu0
        %v3075 = vadd.f32 0.0, %v3074
        %v3076 = vpop.f32.mrb[0].mxu0
        %v3077 = vpop.f32.mrb[0].mxu0
        %3078 = vdwg.mxu0
        %3079 = vmatprep.subr.bf16.mxu0 %v2224
        %3080 = vmatpush1.bf16.msra.mxu0 %v2223
        %3081 = vmatprep.subr.bf16.mxu0 %v2232
        %3082 = vmatpush1.bf16.msra.mxu0 %v2231
        %3083 = vmatprep.subr.bf16.mxu0 %v2240
        %3084 = vmatpush1.bf16.msra.mxu0 %v2239
        %3085 = vmatprep.subr.bf16.mxu0 %v2248
        %3086 = vmatpush1.bf16.msra.mxu0 %v2247
        %3087 = vmatprep.subr.bf16.mxu0 %v2256
        %3088 = vmatpush1.bf16.msra.mxu0 %v2255
        %3089 = vmatprep.subr.bf16.mxu0 %v2264
        %3090 = vmatpush1.bf16.msra.mxu0 %v2263
        %3091 = vmatprep.subr.bf16.mxu0 %v2272
        %3092 = vmatpush1.bf16.msra.mxu0 %v2271
        %3093 = vmatprep.subr.bf16.mxu0 %v2280
        %3094 = vmatpush1.bf16.msra.mxu0 %v2279
        %3095 = vmatprep.subr.bf16.mxu0 %v2288
        %3096 = vmatpush1.bf16.msra.mxu0 %v2287
        %3097 = vmatprep.subr.bf16.mxu0 %v2296
        %3098 = vmatpush1.bf16.msra.mxu0 %v2295
        %3099 = vmatprep.subr.bf16.mxu0 %v2304
        %3100 = vmatpush1.bf16.msra.mxu0 %v2303
        %3101 = vmatprep.subr.bf16.mxu0 %v2312
        %3102 = vmatpush1.bf16.msra.mxu0 %v2311
        %3103 = vmatprep.subr.bf16.mxu0 %v2320
        %3104 = vmatpush1.bf16.msra.mxu0 %v2319
        %3105 = vmatprep.subr.bf16.mxu0 %v2328
        %3106 = vmatpush1.bf16.msra.mxu0 %v2327
        %3107 = vmatprep.subr.bf16.mxu0 %v2336
        %3108 = vmatpush1.bf16.msra.mxu0 %v2335
        %3109 = vmatprep.subr.bf16.mxu0 %v2344
        %3110 = vmatpush1.bf16.msra.mxu0 %v2343
        %3111 = vmatprep.mubr.bf16.mxu0 %v2994
        %3112 = vmatmul.mubr.bf16.gmra.mrb[0].mxu0 %v2993
        %v3113 = vpop.f32.mrb[0].mxu0
        %v3114 = vadd.f32 0.0, %v3113
        %v3115 = vpop.f32.mrb[0].mxu0
        %v3116 = vadd.f32 0.0, %v3115
        %v3117 = vpop.f32.mrb[0].mxu0
        %v3118 = vpop.f32.mrb[0].mxu0
        %3119 = vdwg.mxu0
        %3120 = vmatprep.subr.bf16.mxu0 %v2226
        %3121 = vmatpush1.bf16.msra.mxu0 %v2225
        %3122 = vmatprep.subr.bf16.mxu0 %v2234
        %3123 = vmatpush1.bf16.msra.mxu0 %v2233
        %3124 = vmatprep.subr.bf16.mxu0 %v2242
        %3125 = vmatpush1.bf16.msra.mxu0 %v2241
        %3126 = vmatprep.subr.bf16.mxu0 %v2250
        %3127 = vmatpush1.bf16.msra.mxu0 %v2249
        %3128 = vmatprep.subr.bf16.mxu0 %v2258
        %3129 = vmatpush1.bf16.msra.mxu0 %v2257
        %3130 = vmatprep.subr.bf16.mxu0 %v2266
        %3131 = vmatpush1.bf16.msra.mxu0 %v2265
        %3132 = vmatprep.subr.bf16.mxu0 %v2274
        %3133 = vmatpush1.bf16.msra.mxu0 %v2273
        %3134 = vmatprep.subr.bf16.mxu0 %v2282
        %3135 = vmatpush1.bf16.msra.mxu0 %v2281
        %3136 = vmatprep.subr.bf16.mxu0 %v2290
        %3137 = vmatpush1.bf16.msra.mxu0 %v2289
        %3138 = vmatprep.subr.bf16.mxu0 %v2298
        %3139 = vmatpush1.bf16.msra.mxu0 %v2297
        %3140 = vmatprep.subr.bf16.mxu0 %v2306
        %3141 = vmatpush1.bf16.msra.mxu0 %v2305
        %3142 = vmatprep.subr.bf16.mxu0 %v2314
        %3143 = vmatpush1.bf16.msra.mxu0 %v2313
        %3144 = vmatprep.subr.bf16.mxu0 %v2322
        %3145 = vmatpush1.bf16.msra.mxu0 %v2321
        %3146 = vmatprep.subr.bf16.mxu0 %v2330
        %3147 = vmatpush1.bf16.msra.mxu0 %v2329
        %3148 = vmatprep.subr.bf16.mxu0 %v2338
        %3149 = vmatpush1.bf16.msra.mxu0 %v2337
        %3150 = vmatprep.subr.bf16.mxu0 %v2346
        %3151 = vmatpush1.bf16.msra.mxu0 %v2345
        %3152 = vmatprep.mubr.bf16.mxu0 %v2994
        %3153 = vmatmul.mubr.bf16.gmra.mrb[0].mxu0 %v2993
        %v3154 = vpop.f32.mrb[0].mxu0
        %v3155 = vadd.f32 0.0, %v3154
        %v3156 = vpop.f32.mrb[0].mxu0
        %v3157 = vadd.f32 0.0, %v3156
        %v3158 = vpop.f32.mrb[0].mxu0
        %v3159 = vpop.f32.mrb[0].mxu0
        %3160 = vdwg.mxu0
        %v3165 = vrot.slane %v3032, 2
        %v3166 = vrot.slane %v3034, 2
        %v3167 = vrot.slane %v3073, 2
        %v3168 = vrot.slane %v3075, 2
        %v3173 = vadd.f32 %v1320, %v3165
        %v3174 = vadd.f32 %v1322, %v3166
        %v3175 = vadd.f32 %v1363, %v3167
        %v3176 = vadd.f32 %v1365, %v3168
        %v3177 = vadd.f32 %v1751, %v3114
        %v3178 = vadd.f32 %v1753, %v3116
        %v3179 = vadd.f32 %v1794, %v3155
        %v3180 = vadd.f32 %v1796, %v3157
        %v3181 = vxor.u32 %v3173, 2147483648
        %v3182 = vmul.f32 %v3181, 1.442695
        %v3183 = vpow.pop %v3182
        %v3184 = vadd.f32 %v3183, 1.0
        %v3185 = vrcp.pop %v3184
        %v3186 = vmul.f32 1.0, %v3185
        %v3187 = vxor.u32 %v3177, 2147483648
        %v3188 = vmul.f32 %v3187, 1.442695
        %v3189 = vpow.pop %v3188
        %v3190 = vadd.f32 %v3189, 1.0
        %v3191 = vrcp.pop %v3190
        %v3192 = vmul.f32 1.0, %v3191
        %v3193 = vxor.u32 %v3174, 2147483648
        %v3194 = vmul.f32 %v3193, 1.442695
        %v3195 = vpow.pop %v3194
        %v3196 = vadd.f32 %v3195, 1.0
        %v3197 = vrcp.pop %v3196
        %v3198 = vmul.f32 1.0, %v3197
        %v3199 = vxor.u32 %v3178, 2147483648
        %v3200 = vmul.f32 %v3199, 1.442695
        %v3201 = vpow.pop %v3200
        %v3202 = vadd.f32 %v3201, 1.0
        %v3203 = vrcp.pop %v3202
        %v3204 = vmul.f32 1.0, %v3203
        %v3205 = vtanh.pop %v3175
        %v3206 = vtanh.pop %v3179
        %v3207 = vxor.u32 %v3176, 2147483648
        %v3208 = vmul.f32 %v3207, 1.442695
        %v3209 = vpow.pop %v3208
        %v3210 = vadd.f32 %v3209, 1.0
        %v3211 = vrcp.pop %v3210
        %v3212 = vmul.f32 1.0, %v3211
        %v3213 = vxor.u32 %v3180, 2147483648
        %v3214 = vmul.f32 %v3213, 1.442695
        %v3215 = vpow.pop %v3214
        %v3216 = vadd.f32 %v3215, 1.0
        %v3217 = vrcp.pop %v3216
        %v3218 = vmul.f32 1.0, %v3217
        %v3220 = vrot.slane %v2975, 6
        %v3222 = vmul.f32 %v3198, %v3220
        %v3223 = vmul.f32 %v3186, %v3205
        %v3224 = vadd.f32 %v3222, %v3223
        %v3226 = vrot.slane %v2981, 2
        %v3228 = vmul.f32 %v3204, %v3226
        %v3229 = vmul.f32 %v3192, %v3206
        %v3230 = vadd.f32 %v3228, %v3229
        %v3231 = vtanh.pop %v3224
        %v3232 = vmul.f32 %v3212, %v3231
        %v3233 = vtanh.pop %v3230
        %v3234 = vmul.f32 %v3218, %v3233
        %v3236 = vrot.slane %v3234, 2
        %v3238 = vpack.c.bf16 %v3232, %v3232
        %v3239 = vpack.c.bf16 %v3236, %v3236
        %v3242 = vrot.slane %v3238, 3
        %v3243 = vrot.slane %v3239, 3
        %3246 = vmatprep.subr.bf16.mxu0 %v2220
        %3247 = vmatpush1.bf16.msra.mxu0 %v2219
        %3248 = vmatprep.subr.bf16.mxu0 %v2228
        %3249 = vmatpush1.bf16.msra.mxu0 %v2227
        %3250 = vmatprep.subr.bf16.mxu0 %v2236
        %3251 = vmatpush1.bf16.msra.mxu0 %v2235
        %3252 = vmatprep.subr.bf16.mxu0 %v2244
        %3253 = vmatpush1.bf16.msra.mxu0 %v2243
        %3254 = vmatprep.subr.bf16.mxu0 %v2252
        %3255 = vmatpush1.bf16.msra.mxu0 %v2251
        %3256 = vmatprep.subr.bf16.mxu0 %v2260
        %3257 = vmatpush1.bf16.msra.mxu0 %v2259
        %3258 = vmatprep.subr.bf16.mxu0 %v2268
        %3259 = vmatpush1.bf16.msra.mxu0 %v2267
        %3260 = vmatprep.subr.bf16.mxu0 %v2276
        %3261 = vmatpush1.bf16.msra.mxu0 %v2275
        %3262 = vmatprep.subr.bf16.mxu0 %v2284
        %3263 = vmatpush1.bf16.msra.mxu0 %v2283
        %3264 = vmatprep.subr.bf16.mxu0 %v2292
        %3265 = vmatpush1.bf16.msra.mxu0 %v2291
        %3266 = vmatprep.subr.bf16.mxu0 %v2300
        %3267 = vmatpush1.bf16.msra.mxu0 %v2299
        %3268 = vmatprep.subr.bf16.mxu0 %v2308
        %3269 = vmatpush1.bf16.msra.mxu0 %v2307
        %3270 = vmatprep.subr.bf16.mxu0 %v2316
        %3271 = vmatpush1.bf16.msra.mxu0 %v2315
        %3272 = vmatprep.subr.bf16.mxu0 %v2324
        %3273 = vmatpush1.bf16.msra.mxu0 %v2323
        %3274 = vmatprep.subr.bf16.mxu0 %v2332
        %3275 = vmatpush1.bf16.msra.mxu0 %v2331
        %3276 = vmatprep.subr.bf16.mxu0 %v2340
        %3277 = vmatpush1.bf16.msra.mxu0 %v2339
        %3278 = vmatprep.mubr.bf16.mxu0 %v3243
        %3279 = vmatmul.mubr.bf16.gmra.mrb[0].mxu0 %v3242
        %v3280 = vpop.f32.mrb[0].mxu0
        %v3281 = vadd.f32 0.0, %v3280
        %v3282 = vpop.f32.mrb[0].mxu0
        %v3283 = vadd.f32 0.0, %v3282
        %v3284 = vpop.f32.mrb[0].mxu0
        %v3285 = vpop.f32.mrb[0].mxu0
        %3286 = vdwg.mxu0
        %3287 = vmatprep.subr.bf16.mxu0 %v2222
        %3288 = vmatpush1.bf16.msra.mxu0 %v2221
        %3289 = vmatprep.subr.bf16.mxu0 %v2230
        %3290 = vmatpush1.bf16.msra.mxu0 %v2229
        %3291 = vmatprep.subr.bf16.mxu0 %v2238
        %3292 = vmatpush1.bf16.msra.mxu0 %v2237
        %3293 = vmatprep.subr.bf16.mxu0 %v2246
        %3294 = vmatpush1.bf16.msra.mxu0 %v2245
        %3295 = vmatprep.subr.bf16.mxu0 %v2254
        %3296 = vmatpush1.bf16.msra.mxu0 %v2253
        %3297 = vmatprep.subr.bf16.mxu0 %v2262
        %3298 = vmatpush1.bf16.msra.mxu0 %v2261
        %3299 = vmatprep.subr.bf16.mxu0 %v2270
        %3300 = vmatpush1.bf16.msra.mxu0 %v2269
        %3301 = vmatprep.subr.bf16.mxu0 %v2278
        %3302 = vmatpush1.bf16.msra.mxu0 %v2277
        %3303 = vmatprep.subr.bf16.mxu0 %v2286
        %3304 = vmatpush1.bf16.msra.mxu0 %v2285
        %3305 = vmatprep.subr.bf16.mxu0 %v2294
        %3306 = vmatpush1.bf16.msra.mxu0 %v2293
        %3307 = vmatprep.subr.bf16.mxu0 %v2302
        %3308 = vmatpush1.bf16.msra.mxu0 %v2301
        %3309 = vmatprep.subr.bf16.mxu0 %v2310
        %3310 = vmatpush1.bf16.msra.mxu0 %v2309
        %3311 = vmatprep.subr.bf16.mxu0 %v2318
        %3312 = vmatpush1.bf16.msra.mxu0 %v2317
        %3313 = vmatprep.subr.bf16.mxu0 %v2326
        %3314 = vmatpush1.bf16.msra.mxu0 %v2325
        %3315 = vmatprep.subr.bf16.mxu0 %v2334
        %3316 = vmatpush1.bf16.msra.mxu0 %v2333
        %3317 = vmatprep.subr.bf16.mxu0 %v2342
        %3318 = vmatpush1.bf16.msra.mxu0 %v2341
        %3319 = vmatprep.mubr.bf16.mxu0 %v3243
        %3320 = vmatmul.mubr.bf16.gmra.mrb[0].mxu0 %v3242
        %v3321 = vpop.f32.mrb[0].mxu0
        %v3322 = vadd.f32 0.0, %v3321
        %v3323 = vpop.f32.mrb[0].mxu0
        %v3324 = vadd.f32 0.0, %v3323
        %v3325 = vpop.f32.mrb[0].mxu0
        %v3326 = vpop.f32.mrb[0].mxu0
        %3327 = vdwg.mxu0
        %3328 = vmatprep.subr.bf16.mxu0 %v2224
        %3329 = vmatpush1.bf16.msra.mxu0 %v2223
        %3330 = vmatprep.subr.bf16.mxu0 %v2232
        %3331 = vmatpush1.bf16.msra.mxu0 %v2231
        %3332 = vmatprep.subr.bf16.mxu0 %v2240
        %3333 = vmatpush1.bf16.msra.mxu0 %v2239
        %3334 = vmatprep.subr.bf16.mxu0 %v2248
        %3335 = vmatpush1.bf16.msra.mxu0 %v2247
        %3336 = vmatprep.subr.bf16.mxu0 %v2256
        %3337 = vmatpush1.bf16.msra.mxu0 %v2255
        %3338 = vmatprep.subr.bf16.mxu0 %v2264
        %3339 = vmatpush1.bf16.msra.mxu0 %v2263
        %3340 = vmatprep.subr.bf16.mxu0 %v2272
        %3341 = vmatpush1.bf16.msra.mxu0 %v2271
        %3342 = vmatprep.subr.bf16.mxu0 %v2280
        %3343 = vmatpush1.bf16.msra.mxu0 %v2279
        %3344 = vmatprep.subr.bf16.mxu0 %v2288
        %3345 = vmatpush1.bf16.msra.mxu0 %v2287
        %3346 = vmatprep.subr.bf16.mxu0 %v2296
        %3347 = vmatpush1.bf16.msra.mxu0 %v2295
        %3348 = vmatprep.subr.bf16.mxu0 %v2304
        %3349 = vmatpush1.bf16.msra.mxu0 %v2303
        %3350 = vmatprep.subr.bf16.mxu0 %v2312
        %3351 = vmatpush1.bf16.msra.mxu0 %v2311
        %3352 = vmatprep.subr.bf16.mxu0 %v2320
        %3353 = vmatpush1.bf16.msra.mxu0 %v2319
        %3354 = vmatprep.subr.bf16.mxu0 %v2328
        %3355 = vmatpush1.bf16.msra.mxu0 %v2327
        %3356 = vmatprep.subr.bf16.mxu0 %v2336
        %3357 = vmatpush1.bf16.msra.mxu0 %v2335
        %3358 = vmatprep.subr.bf16.mxu0 %v2344
        %3359 = vmatpush1.bf16.msra.mxu0 %v2343
        %3360 = vmatprep.mubr.bf16.mxu0 %v3243
        %3361 = vmatmul.mubr.bf16.gmra.mrb[0].mxu0 %v3242
        %v3362 = vpop.f32.mrb[0].mxu0
        %v3363 = vadd.f32 0.0, %v3362
        %v3364 = vpop.f32.mrb[0].mxu0
        %v3365 = vadd.f32 0.0, %v3364
        %v3366 = vpop.f32.mrb[0].mxu0
        %v3367 = vpop.f32.mrb[0].mxu0
        %3368 = vdwg.mxu0
        %3369 = vmatprep.subr.bf16.mxu0 %v2226
        %3370 = vmatpush1.bf16.msra.mxu0 %v2225
        %3371 = vmatprep.subr.bf16.mxu0 %v2234
        %3372 = vmatpush1.bf16.msra.mxu0 %v2233
        %3373 = vmatprep.subr.bf16.mxu0 %v2242
        %3374 = vmatpush1.bf16.msra.mxu0 %v2241
        %3375 = vmatprep.subr.bf16.mxu0 %v2250
        %3376 = vmatpush1.bf16.msra.mxu0 %v2249
        %3377 = vmatprep.subr.bf16.mxu0 %v2258
        %3378 = vmatpush1.bf16.msra.mxu0 %v2257
        %3379 = vmatprep.subr.bf16.mxu0 %v2266
        %3380 = vmatpush1.bf16.msra.mxu0 %v2265
        %3381 = vmatprep.subr.bf16.mxu0 %v2274
        %3382 = vmatpush1.bf16.msra.mxu0 %v2273
        %3383 = vmatprep.subr.bf16.mxu0 %v2282
        %3384 = vmatpush1.bf16.msra.mxu0 %v2281
        %3385 = vmatprep.subr.bf16.mxu0 %v2290
        %3386 = vmatpush1.bf16.msra.mxu0 %v2289
        %3387 = vmatprep.subr.bf16.mxu0 %v2298
        %3388 = vmatpush1.bf16.msra.mxu0 %v2297
        %3389 = vmatprep.subr.bf16.mxu0 %v2306
        %3390 = vmatpush1.bf16.msra.mxu0 %v2305
        %3391 = vmatprep.subr.bf16.mxu0 %v2314
        %3392 = vmatpush1.bf16.msra.mxu0 %v2313
        %3393 = vmatprep.subr.bf16.mxu0 %v2322
        %3394 = vmatpush1.bf16.msra.mxu0 %v2321
        %3395 = vmatprep.subr.bf16.mxu0 %v2330
        %3396 = vmatpush1.bf16.msra.mxu0 %v2329
        %3397 = vmatprep.subr.bf16.mxu0 %v2338
        %3398 = vmatpush1.bf16.msra.mxu0 %v2337
        %3399 = vmatprep.subr.bf16.mxu0 %v2346
        %3400 = vmatpush1.bf16.msra.mxu0 %v2345
        %3401 = vmatprep.mubr.bf16.mxu0 %v3243
        %3402 = vmatmul.mubr.bf16.gmra.mrb[0].mxu0 %v3242
        %v3403 = vpop.f32.mrb[0].mxu0
        %v3404 = vadd.f32 0.0, %v3403
        %v3405 = vpop.f32.mrb[0].mxu0
        %v3406 = vadd.f32 0.0, %v3405
        %v3407 = vpop.f32.mrb[0].mxu0
        %v3408 = vpop.f32.mrb[0].mxu0
        %3409 = vdwg.mxu0
        %v3410 = vadd.f32 %v1324, %v3281
        %v3411 = vadd.f32 %v1326, %v3283
        %v3412 = vadd.f32 %v1367, %v3322
        %v3413 = vadd.f32 %v1369, %v3324
        %v3418 = vrot.slane %v3363, 2
        %v3419 = vrot.slane %v3365, 2
        %v3420 = vrot.slane %v3404, 2
        %v3421 = vrot.slane %v3406, 2
        %v3426 = vadd.f32 %v1747, %v3418
        %v3427 = vadd.f32 %v1749, %v3419
        %v3428 = vadd.f32 %v1790, %v3420
        %v3429 = vadd.f32 %v1792, %v3421
        %v3430 = vxor.u32 %v3410, 2147483648
        %v3431 = vmul.f32 %v3430, 1.442695
        %v3432 = vpow.pop %v3431
        %v3433 = vadd.f32 %v3432, 1.0
        %v3434 = vrcp.pop %v3433
        %v3435 = vmul.f32 1.0, %v3434
        %v3436 = vxor.u32 %v3426, 2147483648
        %v3437 = vmul.f32 %v3436, 1.442695
        %v3438 = vpow.pop %v3437
        %v3439 = vadd.f32 %v3438, 1.0
        %v3440 = vrcp.pop %v3439
        %v3441 = vmul.f32 1.0, %v3440
        %v3442 = vxor.u32 %v3411, 2147483648
        %v3443 = vmul.f32 %v3442, 1.442695
        %v3444 = vpow.pop %v3443
        %v3445 = vadd.f32 %v3444, 1.0
        %v3446 = vrcp.pop %v3445
        %v3447 = vmul.f32 1.0, %v3446
        %v3448 = vxor.u32 %v3427, 2147483648
        %v3449 = vmul.f32 %v3448, 1.442695
        %v3450 = vpow.pop %v3449
        %v3451 = vadd.f32 %v3450, 1.0
        %v3452 = vrcp.pop %v3451
        %v3453 = vmul.f32 1.0, %v3452
        %v3454 = vtanh.pop %v3412
        %v3455 = vtanh.pop %v3428
        %v3456 = vxor.u32 %v3413, 2147483648
        %v3457 = vmul.f32 %v3456, 1.442695
        %v3458 = vpow.pop %v3457
        %v3459 = vadd.f32 %v3458, 1.0
        %v3460 = vrcp.pop %v3459
        %v3461 = vmul.f32 1.0, %v3460
        %v3462 = vxor.u32 %v3429, 2147483648
        %v3463 = vmul.f32 %v3462, 1.442695
        %v3464 = vpow.pop %v3463
        %v3465 = vadd.f32 %v3464, 1.0
        %v3466 = vrcp.pop %v3465
        %v3467 = vmul.f32 1.0, %v3466
        %v3469 = vrot.slane %v3224, 6
        %v3471 = vmul.f32 %v3447, %v3469
        %v3472 = vmul.f32 %v3435, %v3454
        %v3473 = vadd.f32 %v3471, %v3472
        %v3475 = vrot.slane %v3230, 2
        %v3477 = vmul.f32 %v3453, %v3475
        %v3478 = vmul.f32 %v3441, %v3455
        %v3479 = vadd.f32 %v3477, %v3478
        %v3480 = vtanh.pop %v3473
        %v3481 = vmul.f32 %v3461, %v3480
        %v3482 = vtanh.pop %v3479
        %v3483 = vmul.f32 %v3467, %v3482
        %v3485 = vrot.slane %v3483, 6
        %v3487 = vpack.c.bf16 %v3481, %v3481
        %v3488 = vpack.c.bf16 %v3485, %v3485
        %3489 = vmatprep.subr.bf16.mxu0 %v2220
        %3490 = vmatpush1.bf16.msra.mxu0 %v2219
        %3491 = vmatprep.subr.bf16.mxu0 %v2228
        %3492 = vmatpush1.bf16.msra.mxu0 %v2227
        %3493 = vmatprep.subr.bf16.mxu0 %v2236
        %3494 = vmatpush1.bf16.msra.mxu0 %v2235
        %3495 = vmatprep.subr.bf16.mxu0 %v2244
        %3496 = vmatpush1.bf16.msra.mxu0 %v2243
        %3497 = vmatprep.subr.bf16.mxu0 %v2252
        %3498 = vmatpush1.bf16.msra.mxu0 %v2251
        %3499 = vmatprep.subr.bf16.mxu0 %v2260
        %3500 = vmatpush1.bf16.msra.mxu0 %v2259
        %3501 = vmatprep.subr.bf16.mxu0 %v2268
        %3502 = vmatpush1.bf16.msra.mxu0 %v2267
        %3503 = vmatprep.subr.bf16.mxu0 %v2276
        %3504 = vmatpush1.bf16.msra.mxu0 %v2275
        %3505 = vmatprep.subr.bf16.mxu0 %v2284
        %3506 = vmatpush1.bf16.msra.mxu0 %v2283
        %3507 = vmatprep.subr.bf16.mxu0 %v2292
        %3508 = vmatpush1.bf16.msra.mxu0 %v2291
        %3509 = vmatprep.subr.bf16.mxu0 %v2300
        %3510 = vmatpush1.bf16.msra.mxu0 %v2299
        %3511 = vmatprep.subr.bf16.mxu0 %v2308
        %3512 = vmatpush1.bf16.msra.mxu0 %v2307
        %3513 = vmatprep.subr.bf16.mxu0 %v2316
        %3514 = vmatpush1.bf16.msra.mxu0 %v2315
        %3515 = vmatprep.subr.bf16.mxu0 %v2324
        %3516 = vmatpush1.bf16.msra.mxu0 %v2323
        %3517 = vmatprep.subr.bf16.mxu0 %v2332
        %3518 = vmatpush1.bf16.msra.mxu0 %v2331
        %3519 = vmatprep.subr.bf16.mxu0 %v2340
        %3520 = vmatpush1.bf16.msra.mxu0 %v2339
        %3521 = vmatprep.mubr.bf16.mxu0 %v3488
        %3522 = vmatmul.mubr.bf16.gmra.mrb[0].mxu0 %v3487
        %v3523 = vpop.f32.mrb[0].mxu0
        %v3524 = vadd.f32 0.0, %v3523
        %v3525 = vpop.f32.mrb[0].mxu0
        %v3526 = vadd.f32 0.0, %v3525
        %v3527 = vpop.f32.mrb[0].mxu0
        %v3528 = vpop.f32.mrb[0].mxu0
        %3529 = vdwg.mxu0
        %3530 = vmatprep.subr.bf16.mxu0 %v2222
        %3531 = vmatpush1.bf16.msra.mxu0 %v2221
        %3532 = vmatprep.subr.bf16.mxu0 %v2230
        %3533 = vmatpush1.bf16.msra.mxu0 %v2229
        %3534 = vmatprep.subr.bf16.mxu0 %v2238
        %3535 = vmatpush1.bf16.msra.mxu0 %v2237
        %3536 = vmatprep.subr.bf16.mxu0 %v2246
        %3537 = vmatpush1.bf16.msra.mxu0 %v2245
        %3538 = vmatprep.subr.bf16.mxu0 %v2254
        %3539 = vmatpush1.bf16.msra.mxu0 %v2253
        %3540 = vmatprep.subr.bf16.mxu0 %v2262
        %3541 = vmatpush1.bf16.msra.mxu0 %v2261
        %3542 = vmatprep.subr.bf16.mxu0 %v2270
        %3543 = vmatpush1.bf16.msra.mxu0 %v2269
        %3544 = vmatprep.subr.bf16.mxu0 %v2278
        %3545 = vmatpush1.bf16.msra.mxu0 %v2277
        %3546 = vmatprep.subr.bf16.mxu0 %v2286
        %3547 = vmatpush1.bf16.msra.mxu0 %v2285
        %3548 = vmatprep.subr.bf16.mxu0 %v2294
        %3549 = vmatpush1.bf16.msra.mxu0 %v2293
        %3550 = vmatprep.subr.bf16.mxu0 %v2302
        %3551 = vmatpush1.bf16.msra.mxu0 %v2301
        %3552 = vmatprep.subr.bf16.mxu0 %v2310
        %3553 = vmatpush1.bf16.msra.mxu0 %v2309
        %3554 = vmatprep.subr.bf16.mxu0 %v2318
        %3555 = vmatpush1.bf16.msra.mxu0 %v2317
        %3556 = vmatprep.subr.bf16.mxu0 %v2326
        %3557 = vmatpush1.bf16.msra.mxu0 %v2325
        %3558 = vmatprep.subr.bf16.mxu0 %v2334
        %3559 = vmatpush1.bf16.msra.mxu0 %v2333
        %3560 = vmatprep.subr.bf16.mxu0 %v2342
        %3561 = vmatpush1.bf16.msra.mxu0 %v2341
        %3562 = vmatprep.mubr.bf16.mxu0 %v3488
        %3563 = vmatmul.mubr.bf16.gmra.mrb[0].mxu0 %v3487
        %v3564 = vpop.f32.mrb[0].mxu0
        %v3565 = vadd.f32 0.0, %v3564
        %v3566 = vpop.f32.mrb[0].mxu0
        %v3567 = vadd.f32 0.0, %v3566
        %v3568 = vpop.f32.mrb[0].mxu0
        %v3569 = vpop.f32.mrb[0].mxu0
        %3570 = vdwg.mxu0
        %3571 = vmatprep.subr.bf16.mxu0 %v2224
        %3572 = vmatpush1.bf16.msra.mxu0 %v2223
        %3573 = vmatprep.subr.bf16.mxu0 %v2232
        %3574 = vmatpush1.bf16.msra.mxu0 %v2231
        %3575 = vmatprep.subr.bf16.mxu0 %v2240
        %3576 = vmatpush1.bf16.msra.mxu0 %v2239
        %3577 = vmatprep.subr.bf16.mxu0 %v2248
        %3578 = vmatpush1.bf16.msra.mxu0 %v2247
        %3579 = vmatprep.subr.bf16.mxu0 %v2256
        %3580 = vmatpush1.bf16.msra.mxu0 %v2255
        %3581 = vmatprep.subr.bf16.mxu0 %v2264
        %3582 = vmatpush1.bf16.msra.mxu0 %v2263
        %3583 = vmatprep.subr.bf16.mxu0 %v2272
        %3584 = vmatpush1.bf16.msra.mxu0 %v2271
        %3585 = vmatprep.subr.bf16.mxu0 %v2280
        %3586 = vmatpush1.bf16.msra.mxu0 %v2279
        %3587 = vmatprep.subr.bf16.mxu0 %v2288
        %3588 = vmatpush1.bf16.msra.mxu0 %v2287
        %3589 = vmatprep.subr.bf16.mxu0 %v2296
        %3590 = vmatpush1.bf16.msra.mxu0 %v2295
        %3591 = vmatprep.subr.bf16.mxu0 %v2304
        %3592 = vmatpush1.bf16.msra.mxu0 %v2303
        %3593 = vmatprep.subr.bf16.mxu0 %v2312
        %3594 = vmatpush1.bf16.msra.mxu0 %v2311
        %3595 = vmatprep.subr.bf16.mxu0 %v2320
        %3596 = vmatpush1.bf16.msra.mxu0 %v2319
        %3597 = vmatprep.subr.bf16.mxu0 %v2328
        %3598 = vmatpush1.bf16.msra.mxu0 %v2327
        %3599 = vmatprep.subr.bf16.mxu0 %v2336
        %3600 = vmatpush1.bf16.msra.mxu0 %v2335
        %3601 = vmatprep.subr.bf16.mxu0 %v2344
        %3602 = vmatpush1.bf16.msra.mxu0 %v2343
        %3603 = vmatprep.mubr.bf16.mxu0 %v3488
        %3604 = vmatmul.mubr.bf16.gmra.mrb[0].mxu0 %v3487
        %v3605 = vpop.f32.mrb[0].mxu0
        %v3606 = vadd.f32 0.0, %v3605
        %v3607 = vpop.f32.mrb[0].mxu0
        %v3608 = vadd.f32 0.0, %v3607
        %v3609 = vpop.f32.mrb[0].mxu0
        %v3610 = vpop.f32.mrb[0].mxu0
        %3611 = vdwg.mxu0
        %3612 = vmatprep.subr.bf16.mxu0 %v2226
        %3613 = vmatpush1.bf16.msra.mxu0 %v2225
        %3614 = vmatprep.subr.bf16.mxu0 %v2234
        %3615 = vmatpush1.bf16.msra.mxu0 %v2233
        %3616 = vmatprep.subr.bf16.mxu0 %v2242
        %3617 = vmatpush1.bf16.msra.mxu0 %v2241
        %3618 = vmatprep.subr.bf16.mxu0 %v2250
        %3619 = vmatpush1.bf16.msra.mxu0 %v2249
        %3620 = vmatprep.subr.bf16.mxu0 %v2258
        %3621 = vmatpush1.bf16.msra.mxu0 %v2257
        %3622 = vmatprep.subr.bf16.mxu0 %v2266
        %3623 = vmatpush1.bf16.msra.mxu0 %v2265
        %3624 = vmatprep.subr.bf16.mxu0 %v2274
        %3625 = vmatpush1.bf16.msra.mxu0 %v2273
        %3626 = vmatprep.subr.bf16.mxu0 %v2282
        %3627 = vmatpush1.bf16.msra.mxu0 %v2281
        %3628 = vmatprep.subr.bf16.mxu0 %v2290
        %3629 = vmatpush1.bf16.msra.mxu0 %v2289
        %3630 = vmatprep.subr.bf16.mxu0 %v2298
        %3631 = vmatpush1.bf16.msra.mxu0 %v2297
        %3632 = vmatprep.subr.bf16.mxu0 %v2306
        %3633 = vmatpush1.bf16.msra.mxu0 %v2305
        %3634 = vmatprep.subr.bf16.mxu0 %v2314
        %3635 = vmatpush1.bf16.msra.mxu0 %v2313
        %3636 = vmatprep.subr.bf16.mxu0 %v2322
        %3637 = vmatpush1.bf16.msra.mxu0 %v2321
        %3638 = vmatprep.subr.bf16.mxu0 %v2330
        %3639 = vmatpush1.bf16.msra.mxu0 %v2329
        %3640 = vmatprep.subr.bf16.mxu0 %v2338
        %3641 = vmatpush1.bf16.msra.mxu0 %v2337
        %3642 = vmatprep.subr.bf16.mxu0 %v2346
        %3643 = vmatpush1.bf16.msra.mxu0 %v2345
        %3644 = vmatprep.mubr.bf16.mxu0 %v3488
        %3645 = vmatmul.mubr.bf16.gmra.mrb[0].mxu0 %v3487
        %v3646 = vpop.f32.mrb[0].mxu0
        %v3647 = vadd.f32 0.0, %v3646
        %v3648 = vpop.f32.mrb[0].mxu0
        %v3649 = vadd.f32 0.0, %v3648
        %v3650 = vpop.f32.mrb[0].mxu0
        %v3651 = vpop.f32.mrb[0].mxu0
        %3652 = vdwg.mxu0
        %v3657 = vrot.slane %v3524, 6
        %v3658 = vrot.slane %v3526, 6
        %v3659 = vrot.slane %v3565, 6
        %v3660 = vrot.slane %v3567, 6
        %v3665 = vadd.f32 %v1324, %v3657
        %v3666 = vadd.f32 %v1326, %v3658
        %v3667 = vadd.f32 %v1367, %v3659
        %v3668 = vadd.f32 %v1369, %v3660
        %v3673 = vrot.slane %v3606, 4
        %v3674 = vrot.slane %v3608, 4
        %v3675 = vrot.slane %v3647, 4
        %v3676 = vrot.slane %v3649, 4
        %v3681 = vadd.f32 %v1747, %v3673
        %v3682 = vadd.f32 %v1749, %v3674
        %v3683 = vadd.f32 %v1790, %v3675
        %v3684 = vadd.f32 %v1792, %v3676
        %v3685 = vxor.u32 %v3665, 2147483648
        %v3686 = vmul.f32 %v3685, 1.442695
        %v3687 = vpow.pop %v3686
        %v3688 = vadd.f32 %v3687, 1.0
        %v3689 = vrcp.pop %v3688
        %v3690 = vmul.f32 1.0, %v3689
        %v3691 = vxor.u32 %v3681, 2147483648
        %v3692 = vmul.f32 %v3691, 1.442695
        %v3693 = vpow.pop %v3692
        %v3694 = vadd.f32 %v3693, 1.0
        %v3695 = vrcp.pop %v3694
        %v3696 = vmul.f32 1.0, %v3695
        %v3697 = vxor.u32 %v3666, 2147483648
        %v3698 = vmul.f32 %v3697, 1.442695
        %v3699 = vpow.pop %v3698
        %v3700 = vadd.f32 %v3699, 1.0
        %v3701 = vrcp.pop %v3700
        %v3702 = vmul.f32 1.0, %v3701
        %v3703 = vxor.u32 %v3682, 2147483648
        %v3704 = vmul.f32 %v3703, 1.442695
        %v3705 = vpow.pop %v3704
        %v3706 = vadd.f32 %v3705, 1.0
        %v3707 = vrcp.pop %v3706
        %v3708 = vmul.f32 1.0, %v3707
        %v3709 = vtanh.pop %v3667
        %v3710 = vtanh.pop %v3683
        %v3711 = vxor.u32 %v3668, 2147483648
        %v3712 = vmul.f32 %v3711, 1.442695
        %v3713 = vpow.pop %v3712
        %v3714 = vadd.f32 %v3713, 1.0
        %v3715 = vrcp.pop %v3714
        %v3716 = vmul.f32 1.0, %v3715
        %v3717 = vxor.u32 %v3684, 2147483648
        %v3718 = vmul.f32 %v3717, 1.442695
        %v3719 = vpow.pop %v3718
        %v3720 = vadd.f32 %v3719, 1.0
        %v3721 = vrcp.pop %v3720
        %v3722 = vmul.f32 1.0, %v3721
        %v3724 = vrot.slane %v3473, 6
        %v3726 = vmul.f32 %v3702, %v3724
        %v3727 = vmul.f32 %v3690, %v3709
        %v3728 = vadd.f32 %v3726, %v3727
        %v3730 = vrot.slane %v3479, 2
        %v3732 = vmul.f32 %v3708, %v3730
        %v3733 = vmul.f32 %v3696, %v3710
        %v3734 = vadd.f32 %v3732, %v3733
        %v3735 = vtanh.pop %v3728
        %v3736 = vmul.f32 %v3716, %v3735
        %v3737 = vtanh.pop %v3734
        %v3738 = vmul.f32 %v3722, %v3737
        %v3740 = vrot.slane %v3738, 2
        %v3742 = vpack.c.bf16 %v3736, %v3736
        %v3743 = vpack.c.bf16 %v3740, %v3740
        %v3746 = vrot.slane %v3742, 1
        %v3747 = vrot.slane %v3743, 1
        %3750 = vmatprep.subr.bf16.mxu0 %v2220
        %3751 = vmatpush1.bf16.msra.mxu0 %v2219
        %3752 = vmatprep.subr.bf16.mxu0 %v2228
        %3753 = vmatpush1.bf16.msra.mxu0 %v2227
        %3754 = vmatprep.subr.bf16.mxu0 %v2236
        %3755 = vmatpush1.bf16.msra.mxu0 %v2235
        %3756 = vmatprep.subr.bf16.mxu0 %v2244
        %3757 = vmatpush1.bf16.msra.mxu0 %v2243
        %3758 = vmatprep.subr.bf16.mxu0 %v2252
        %3759 = vmatpush1.bf16.msra.mxu0 %v2251
        %3760 = vmatprep.subr.bf16.mxu0 %v2260
        %3761 = vmatpush1.bf16.msra.mxu0 %v2259
        %3762 = vmatprep.subr.bf16.mxu0 %v2268
        %3763 = vmatpush1.bf16.msra.mxu0 %v2267
        %3764 = vmatprep.subr.bf16.mxu0 %v2276
        %3765 = vmatpush1.bf16.msra.mxu0 %v2275
        %3766 = vmatprep.subr.bf16.mxu0 %v2284
        %3767 = vmatpush1.bf16.msra.mxu0 %v2283
        %3768 = vmatprep.subr.bf16.mxu0 %v2292
        %3769 = vmatpush1.bf16.msra.mxu0 %v2291
        %3770 = vmatprep.subr.bf16.mxu0 %v2300
        %3771 = vmatpush1.bf16.msra.mxu0 %v2299
        %3772 = vmatprep.subr.bf16.mxu0 %v2308
        %3773 = vmatpush1.bf16.msra.mxu0 %v2307
        %3774 = vmatprep.subr.bf16.mxu0 %v2316
        %3775 = vmatpush1.bf16.msra.mxu0 %v2315
        %3776 = vmatprep.subr.bf16.mxu0 %v2324
        %3777 = vmatpush1.bf16.msra.mxu0 %v2323
        %3778 = vmatprep.subr.bf16.mxu0 %v2332
        %3779 = vmatpush1.bf16.msra.mxu0 %v2331
        %3780 = vmatprep.subr.bf16.mxu0 %v2340
        %3781 = vmatpush1.bf16.msra.mxu0 %v2339
        %3782 = vmatprep.mubr.bf16.mxu0 %v3747
        %3783 = vmatmul.mubr.bf16.gmra.mrb[0].mxu0 %v3746
        %v3784 = vpop.f32.mrb[0].mxu0
        %v3785 = vadd.f32 0.0, %v3784
        %v3786 = vpop.f32.mrb[0].mxu0
        %v3787 = vadd.f32 0.0, %v3786
        %v3788 = vpop.f32.mrb[0].mxu0
        %v3789 = vpop.f32.mrb[0].mxu0
        %3790 = vdwg.mxu0
        %3791 = vmatprep.subr.bf16.mxu0 %v2222
        %3792 = vmatpush1.bf16.msra.mxu0 %v2221
        %3793 = vmatprep.subr.bf16.mxu0 %v2230
        %3794 = vmatpush1.bf16.msra.mxu0 %v2229
        %3795 = vmatprep.subr.bf16.mxu0 %v2238
        %3796 = vmatpush1.bf16.msra.mxu0 %v2237
        %3797 = vmatprep.subr.bf16.mxu0 %v2246
        %3798 = vmatpush1.bf16.msra.mxu0 %v2245
        %3799 = vmatprep.subr.bf16.mxu0 %v2254
        %3800 = vmatpush1.bf16.msra.mxu0 %v2253
        %3801 = vmatprep.subr.bf16.mxu0 %v2262
        %3802 = vmatpush1.bf16.msra.mxu0 %v2261
        %3803 = vmatprep.subr.bf16.mxu0 %v2270
        %3804 = vmatpush1.bf16.msra.mxu0 %v2269
        %3805 = vmatprep.subr.bf16.mxu0 %v2278
        %3806 = vmatpush1.bf16.msra.mxu0 %v2277
        %3807 = vmatprep.subr.bf16.mxu0 %v2286
        %3808 = vmatpush1.bf16.msra.mxu0 %v2285
        %3809 = vmatprep.subr.bf16.mxu0 %v2294
        %3810 = vmatpush1.bf16.msra.mxu0 %v2293
        %3811 = vmatprep.subr.bf16.mxu0 %v2302
        %3812 = vmatpush1.bf16.msra.mxu0 %v2301
        %3813 = vmatprep.subr.bf16.mxu0 %v2310
        %3814 = vmatpush1.bf16.msra.mxu0 %v2309
        %3815 = vmatprep.subr.bf16.mxu0 %v2318
        %3816 = vmatpush1.bf16.msra.mxu0 %v2317
        %3817 = vmatprep.subr.bf16.mxu0 %v2326
        %3818 = vmatpush1.bf16.msra.mxu0 %v2325
        %3819 = vmatprep.subr.bf16.mxu0 %v2334
        %3820 = vmatpush1.bf16.msra.mxu0 %v2333
        %3821 = vmatprep.subr.bf16.mxu0 %v2342
        %3822 = vmatpush1.bf16.msra.mxu0 %v2341
        %3823 = vmatprep.mubr.bf16.mxu0 %v3747
        %3824 = vmatmul.mubr.bf16.gmra.mrb[0].mxu0 %v3746
        %v3825 = vpop.f32.mrb[0].mxu0
        %v3826 = vadd.f32 0.0, %v3825
        %v3827 = vpop.f32.mrb[0].mxu0
        %v3828 = vadd.f32 0.0, %v3827
        %v3829 = vpop.f32.mrb[0].mxu0
        %v3830 = vpop.f32.mrb[0].mxu0
        %3831 = vdwg.mxu0
        %3832 = vmatprep.subr.bf16.mxu0 %v2224
        %3833 = vmatpush1.bf16.msra.mxu0 %v2223
        %3834 = vmatprep.subr.bf16.mxu0 %v2232
        %3835 = vmatpush1.bf16.msra.mxu0 %v2231
        %3836 = vmatprep.subr.bf16.mxu0 %v2240
        %3837 = vmatpush1.bf16.msra.mxu0 %v2239
        %3838 = vmatprep.subr.bf16.mxu0 %v2248
        %3839 = vmatpush1.bf16.msra.mxu0 %v2247
        %3840 = vmatprep.subr.bf16.mxu0 %v2256
        %3841 = vmatpush1.bf16.msra.mxu0 %v2255
        %3842 = vmatprep.subr.bf16.mxu0 %v2264
        %3843 = vmatpush1.bf16.msra.mxu0 %v2263
        %3844 = vmatprep.subr.bf16.mxu0 %v2272
        %3845 = vmatpush1.bf16.msra.mxu0 %v2271
        %3846 = vmatprep.subr.bf16.mxu0 %v2280
        %3847 = vmatpush1.bf16.msra.mxu0 %v2279
        %3848 = vmatprep.subr.bf16.mxu0 %v2288
        %3849 = vmatpush1.bf16.msra.mxu0 %v2287
        %3850 = vmatprep.subr.bf16.mxu0 %v2296
        %3851 = vmatpush1.bf16.msra.mxu0 %v2295
        %3852 = vmatprep.subr.bf16.mxu0 %v2304
        %3853 = vmatpush1.bf16.msra.mxu0 %v2303
        %3854 = vmatprep.subr.bf16.mxu0 %v2312
        %3855 = vmatpush1.bf16.msra.mxu0 %v2311
        %3856 = vmatprep.subr.bf16.mxu0 %v2320
        %3857 = vmatpush1.bf16.msra.mxu0 %v2319
        %3858 = vmatprep.subr.bf16.mxu0 %v2328
        %3859 = vmatpush1.bf16.msra.mxu0 %v2327
        %3860 = vmatprep.subr.bf16.mxu0 %v2336
        %3861 = vmatpush1.bf16.msra.mxu0 %v2335
        %3862 = vmatprep.subr.bf16.mxu0 %v2344
        %3863 = vmatpush1.bf16.msra.mxu0 %v2343
        %3864 = vmatprep.mubr.bf16.mxu0 %v3747
        %3865 = vmatmul.mubr.bf16.gmra.mrb[0].mxu0 %v3746
        %v3866 = vpop.f32.mrb[0].mxu0
        %v3867 = vadd.f32 0.0, %v3866
        %v3868 = vpop.f32.mrb[0].mxu0
        %v3869 = vadd.f32 0.0, %v3868
        %v3870 = vpop.f32.mrb[0].mxu0
        %v3871 = vpop.f32.mrb[0].mxu0
        %3872 = vdwg.mxu0
        %3873 = vmatprep.subr.bf16.mxu0 %v2226
        %3874 = vmatpush1.bf16.msra.mxu0 %v2225
        %3875 = vmatprep.subr.bf16.mxu0 %v2234
        %3876 = vmatpush1.bf16.msra.mxu0 %v2233
        %3877 = vmatprep.subr.bf16.mxu0 %v2242
        %3878 = vmatpush1.bf16.msra.mxu0 %v2241
        %3879 = vmatprep.subr.bf16.mxu0 %v2250
        %3880 = vmatpush1.bf16.msra.mxu0 %v2249
        %3881 = vmatprep.subr.bf16.mxu0 %v2258
        %3882 = vmatpush1.bf16.msra.mxu0 %v2257
        %3883 = vmatprep.subr.bf16.mxu0 %v2266
        %3884 = vmatpush1.bf16.msra.mxu0 %v2265
        %3885 = vmatprep.subr.bf16.mxu0 %v2274
        %3886 = vmatpush1.bf16.msra.mxu0 %v2273
        %3887 = vmatprep.subr.bf16.mxu0 %v2282
        %3888 = vmatpush1.bf16.msra.mxu0 %v2281
        %3889 = vmatprep.subr.bf16.mxu0 %v2290
        %3890 = vmatpush1.bf16.msra.mxu0 %v2289
        %3891 = vmatprep.subr.bf16.mxu0 %v2298
        %3892 = vmatpush1.bf16.msra.mxu0 %v2297
        %3893 = vmatprep.subr.bf16.mxu0 %v2306
        %3894 = vmatpush1.bf16.msra.mxu0 %v2305
        %3895 = vmatprep.subr.bf16.mxu0 %v2314
        %3896 = vmatpush1.bf16.msra.mxu0 %v2313
        %3897 = vmatprep.subr.bf16.mxu0 %v2322
        %3898 = vmatpush1.bf16.msra.mxu0 %v2321
        %3899 = vmatprep.subr.bf16.mxu0 %v2330
        %3900 = vmatpush1.bf16.msra.mxu0 %v2329
        %3901 = vmatprep.subr.bf16.mxu0 %v2338
        %3902 = vmatpush1.bf16.msra.mxu0 %v2337
        %3903 = vmatprep.subr.bf16.mxu0 %v2346
        %3904 = vmatpush1.bf16.msra.mxu0 %v2345
        %3905 = vmatprep.mubr.bf16.mxu0 %v3747
        %3906 = vmatmul.mubr.bf16.gmra.mrb[0].mxu0 %v3746
        %v3907 = vpop.f32.mrb[0].mxu0
        %v3908 = vadd.f32 0.0, %v3907
        %v3909 = vpop.f32.mrb[0].mxu0
        %v3910 = vadd.f32 0.0, %v3909
        %v3911 = vpop.f32.mrb[0].mxu0
        %v3912 = vpop.f32.mrb[0].mxu0
        %3913 = vdwg.mxu0
        %v3918 = vrot.slane %v3785, 4
        %v3919 = vrot.slane %v3787, 4
        %v3920 = vrot.slane %v3826, 4
        %v3921 = vrot.slane %v3828, 4
        %v3926 = vadd.f32 %v1324, %v3918
        %v3927 = vadd.f32 %v1326, %v3919
        %v3928 = vadd.f32 %v1367, %v3920
        %v3929 = vadd.f32 %v1369, %v3921
        %v3934 = vrot.slane %v3867, 6
        %v3935 = vrot.slane %v3869, 6
        %v3936 = vrot.slane %v3908, 6
        %v3937 = vrot.slane %v3910, 6
        %v3942 = vadd.f32 %v1747, %v3934
        %v3943 = vadd.f32 %v1749, %v3935
        %v3944 = vadd.f32 %v1790, %v3936
        %v3945 = vadd.f32 %v1792, %v3937
        %v3946 = vxor.u32 %v3926, 2147483648
        %v3947 = vmul.f32 %v3946, 1.442695
        %v3948 = vpow.pop %v3947
        %v3949 = vadd.f32 %v3948, 1.0
        %v3950 = vrcp.pop %v3949
        %v3951 = vmul.f32 1.0, %v3950
        %v3952 = vxor.u32 %v3942, 2147483648
        %v3953 = vmul.f32 %v3952, 1.442695
        %v3954 = vpow.pop %v3953
        %v3955 = vadd.f32 %v3954, 1.0
        %v3956 = vrcp.pop %v3955
        %v3957 = vmul.f32 1.0, %v3956
        %v3958 = vxor.u32 %v3927, 2147483648
        %v3959 = vmul.f32 %v3958, 1.442695
        %v3960 = vpow.pop %v3959
        %v3961 = vadd.f32 %v3960, 1.0
        %v3962 = vrcp.pop %v3961
        %v3963 = vmul.f32 1.0, %v3962
        %v3964 = vxor.u32 %v3943, 2147483648
        %v3965 = vmul.f32 %v3964, 1.442695
        %v3966 = vpow.pop %v3965
        %v3967 = vadd.f32 %v3966, 1.0
        %v3968 = vrcp.pop %v3967
        %v3969 = vmul.f32 1.0, %v3968
        %v3970 = vtanh.pop %v3928
        %v3971 = vtanh.pop %v3944
        %v3972 = vxor.u32 %v3929, 2147483648
        %v3973 = vmul.f32 %v3972, 1.442695
        %v3974 = vpow.pop %v3973
        %v3975 = vadd.f32 %v3974, 1.0
        %v3976 = vrcp.pop %v3975
        %v3977 = vmul.f32 1.0, %v3976
        %v3978 = vxor.u32 %v3945, 2147483648
        %v3979 = vmul.f32 %v3978, 1.442695
        %v3980 = vpow.pop %v3979
        %v3981 = vadd.f32 %v3980, 1.0
        %v3982 = vrcp.pop %v3981
        %v3983 = vmul.f32 1.0, %v3982
        %v3985 = vrot.slane %v3728, 6
        %v3987 = vmul.f32 %v3963, %v3985
        %v3988 = vmul.f32 %v3951, %v3970
        %v3989 = vadd.f32 %v3987, %v3988
        %v3991 = vrot.slane %v3734, 2
        %v3993 = vmul.f32 %v3969, %v3991
        %v3994 = vmul.f32 %v3957, %v3971
        %v3995 = vadd.f32 %v3993, %v3994
        %v3996 = vtanh.pop %v3989
        %v3997 = vmul.f32 %v3977, %v3996
        %v3998 = vtanh.pop %v3995
        %v3999 = vmul.f32 %v3983, %v3998
        %v4001 = vrot.slane %v3999, 6
        %v4003 = vpack.c.bf16 %v3997, %v3997
        %v4004 = vpack.c.bf16 %v4001, %v4001
        %v4007 = vrot.slane %v4003, 2
        %v4008 = vrot.slane %v4004, 2
        %4011 = vmatprep.subr.bf16.mxu0 %v2220
        %4012 = vmatpush1.bf16.msra.mxu0 %v2219
        %4013 = vmatprep.subr.bf16.mxu0 %v2228
        %4014 = vmatpush1.bf16.msra.mxu0 %v2227
        %4015 = vmatprep.subr.bf16.mxu0 %v2236
        %4016 = vmatpush1.bf16.msra.mxu0 %v2235
        %4017 = vmatprep.subr.bf16.mxu0 %v2244
        %4018 = vmatpush1.bf16.msra.mxu0 %v2243
        %4019 = vmatprep.subr.bf16.mxu0 %v2252
        %4020 = vmatpush1.bf16.msra.mxu0 %v2251
        %4021 = vmatprep.subr.bf16.mxu0 %v2260
        %4022 = vmatpush1.bf16.msra.mxu0 %v2259
        %4023 = vmatprep.subr.bf16.mxu0 %v2268
        %4024 = vmatpush1.bf16.msra.mxu0 %v2267
        %4025 = vmatprep.subr.bf16.mxu0 %v2276
        %4026 = vmatpush1.bf16.msra.mxu0 %v2275
        %4027 = vmatprep.subr.bf16.mxu0 %v2284
        %4028 = vmatpush1.bf16.msra.mxu0 %v2283
        %4029 = vmatprep.subr.bf16.mxu0 %v2292
        %4030 = vmatpush1.bf16.msra.mxu0 %v2291
        %4031 = vmatprep.subr.bf16.mxu0 %v2300
        %4032 = vmatpush1.bf16.msra.mxu0 %v2299
        %4033 = vmatprep.subr.bf16.mxu0 %v2308
        %4034 = vmatpush1.bf16.msra.mxu0 %v2307
        %4035 = vmatprep.subr.bf16.mxu0 %v2316
        %4036 = vmatpush1.bf16.msra.mxu0 %v2315
        %4037 = vmatprep.subr.bf16.mxu0 %v2324
        %4038 = vmatpush1.bf16.msra.mxu0 %v2323
        %4039 = vmatprep.subr.bf16.mxu0 %v2332
        %4040 = vmatpush1.bf16.msra.mxu0 %v2331
        %4041 = vmatprep.subr.bf16.mxu0 %v2340
        %4042 = vmatpush1.bf16.msra.mxu0 %v2339
        %4043 = vmatprep.mubr.bf16.mxu0 %v4008
        %4044 = vmatmul.mubr.bf16.gmra.mrb[0].mxu0 %v4007
        %v4045 = vpop.f32.mrb[0].mxu0
        %v4046 = vadd.f32 0.0, %v4045
        %v4047 = vpop.f32.mrb[0].mxu0
        %v4048 = vadd.f32 0.0, %v4047
        %v4049 = vpop.f32.mrb[0].mxu0
        %v4050 = vpop.f32.mrb[0].mxu0
        %4051 = vdwg.mxu0
        %4052 = vmatprep.subr.bf16.mxu0 %v2222
        %4053 = vmatpush1.bf16.msra.mxu0 %v2221
        %4054 = vmatprep.subr.bf16.mxu0 %v2230
        %4055 = vmatpush1.bf16.msra.mxu0 %v2229
        %4056 = vmatprep.subr.bf16.mxu0 %v2238
        %4057 = vmatpush1.bf16.msra.mxu0 %v2237
        %4058 = vmatprep.subr.bf16.mxu0 %v2246
        %4059 = vmatpush1.bf16.msra.mxu0 %v2245
        %4060 = vmatprep.subr.bf16.mxu0 %v2254
        %4061 = vmatpush1.bf16.msra.mxu0 %v2253
        %4062 = vmatprep.subr.bf16.mxu0 %v2262
        %4063 = vmatpush1.bf16.msra.mxu0 %v2261
        %4064 = vmatprep.subr.bf16.mxu0 %v2270
        %4065 = vmatpush1.bf16.msra.mxu0 %v2269
        %4066 = vmatprep.subr.bf16.mxu0 %v2278
        %4067 = vmatpush1.bf16.msra.mxu0 %v2277
        %4068 = vmatprep.subr.bf16.mxu0 %v2286
        %4069 = vmatpush1.bf16.msra.mxu0 %v2285
        %4070 = vmatprep.subr.bf16.mxu0 %v2294
        %4071 = vmatpush1.bf16.msra.mxu0 %v2293
        %4072 = vmatprep.subr.bf16.mxu0 %v2302
        %4073 = vmatpush1.bf16.msra.mxu0 %v2301
        %4074 = vmatprep.subr.bf16.mxu0 %v2310
        %4075 = vmatpush1.bf16.msra.mxu0 %v2309
        %4076 = vmatprep.subr.bf16.mxu0 %v2318
        %4077 = vmatpush1.bf16.msra.mxu0 %v2317
        %4078 = vmatprep.subr.bf16.mxu0 %v2326
        %4079 = vmatpush1.bf16.msra.mxu0 %v2325
        %4080 = vmatprep.subr.bf16.mxu0 %v2334
        %4081 = vmatpush1.bf16.msra.mxu0 %v2333
        %4082 = vmatprep.subr.bf16.mxu0 %v2342
        %4083 = vmatpush1.bf16.msra.mxu0 %v2341
        %4084 = vmatprep.mubr.bf16.mxu0 %v4008
        %4085 = vmatmul.mubr.bf16.gmra.mrb[0].mxu0 %v4007
        %v4086 = vpop.f32.mrb[0].mxu0
        %v4087 = vadd.f32 0.0, %v4086
        %v4088 = vpop.f32.mrb[0].mxu0
        %v4089 = vadd.f32 0.0, %v4088
        %v4090 = vpop.f32.mrb[0].mxu0
        %v4091 = vpop.f32.mrb[0].mxu0
        %4092 = vdwg.mxu0
        %4093 = vmatprep.subr.bf16.mxu0 %v2224
        %4094 = vmatpush1.bf16.msra.mxu0 %v2223
        %4095 = vmatprep.subr.bf16.mxu0 %v2232
        %4096 = vmatpush1.bf16.msra.mxu0 %v2231
        %4097 = vmatprep.subr.bf16.mxu0 %v2240
        %4098 = vmatpush1.bf16.msra.mxu0 %v2239
        %4099 = vmatprep.subr.bf16.mxu0 %v2248
        %4100 = vmatpush1.bf16.msra.mxu0 %v2247
        %4101 = vmatprep.subr.bf16.mxu0 %v2256
        %4102 = vmatpush1.bf16.msra.mxu0 %v2255
        %4103 = vmatprep.subr.bf16.mxu0 %v2264
        %4104 = vmatpush1.bf16.msra.mxu0 %v2263
        %4105 = vmatprep.subr.bf16.mxu0 %v2272
        %4106 = vmatpush1.bf16.msra.mxu0 %v2271
        %4107 = vmatprep.subr.bf16.mxu0 %v2280
        %4108 = vmatpush1.bf16.msra.mxu0 %v2279
        %4109 = vmatprep.subr.bf16.mxu0 %v2288
        %4110 = vmatpush1.bf16.msra.mxu0 %v2287
        %4111 = vmatprep.subr.bf16.mxu0 %v2296
        %4112 = vmatpush1.bf16.msra.mxu0 %v2295
        %4113 = vmatprep.subr.bf16.mxu0 %v2304
        %4114 = vmatpush1.bf16.msra.mxu0 %v2303
        %4115 = vmatprep.subr.bf16.mxu0 %v2312
        %4116 = vmatpush1.bf16.msra.mxu0 %v2311
        %4117 = vmatprep.subr.bf16.mxu0 %v2320
        %4118 = vmatpush1.bf16.msra.mxu0 %v2319
        %4119 = vmatprep.subr.bf16.mxu0 %v2328
        %4120 = vmatpush1.bf16.msra.mxu0 %v2327
        %4121 = vmatprep.subr.bf16.mxu0 %v2336
        %4122 = vmatpush1.bf16.msra.mxu0 %v2335
        %4123 = vmatprep.subr.bf16.mxu0 %v2344
        %4124 = vmatpush1.bf16.msra.mxu0 %v2343
        %4125 = vmatprep.mubr.bf16.mxu0 %v4008
        %4126 = vmatmul.mubr.bf16.gmra.mrb[0].mxu0 %v4007
        %v4127 = vpop.f32.mrb[0].mxu0
        %v4128 = vadd.f32 0.0, %v4127
        %v4129 = vpop.f32.mrb[0].mxu0
        %v4130 = vadd.f32 0.0, %v4129
        %v4131 = vpop.f32.mrb[0].mxu0
        %v4132 = vpop.f32.mrb[0].mxu0
        %4133 = vdwg.mxu0
        %4134 = vmatprep.subr.bf16.mxu0 %v2226
        %4135 = vmatpush1.bf16.msra.mxu0 %v2225
        %4136 = vmatprep.subr.bf16.mxu0 %v2234
        %4137 = vmatpush1.bf16.msra.mxu0 %v2233
        %4138 = vmatprep.subr.bf16.mxu0 %v2242
        %4139 = vmatpush1.bf16.msra.mxu0 %v2241
        %4140 = vmatprep.subr.bf16.mxu0 %v2250
        %4141 = vmatpush1.bf16.msra.mxu0 %v2249
        %4142 = vmatprep.subr.bf16.mxu0 %v2258
        %4143 = vmatpush1.bf16.msra.mxu0 %v2257
        %4144 = vmatprep.subr.bf16.mxu0 %v2266
        %4145 = vmatpush1.bf16.msra.mxu0 %v2265
        %4146 = vmatprep.subr.bf16.mxu0 %v2274
        %4147 = vmatpush1.bf16.msra.mxu0 %v2273
        %4148 = vmatprep.subr.bf16.mxu0 %v2282
        %4149 = vmatpush1.bf16.msra.mxu0 %v2281
        %4150 = vmatprep.subr.bf16.mxu0 %v2290
        %4151 = vmatpush1.bf16.msra.mxu0 %v2289
        %4152 = vmatprep.subr.bf16.mxu0 %v2298
        %4153 = vmatpush1.bf16.msra.mxu0 %v2297
        %4154 = vmatprep.subr.bf16.mxu0 %v2306
        %4155 = vmatpush1.bf16.msra.mxu0 %v2305
        %4156 = vmatprep.subr.bf16.mxu0 %v2314
        %4157 = vmatpush1.bf16.msra.mxu0 %v2313
        %4158 = vmatprep.subr.bf16.mxu0 %v2322
        %4159 = vmatpush1.bf16.msra.mxu0 %v2321
        %4160 = vmatprep.subr.bf16.mxu0 %v2330
        %4161 = vmatpush1.bf16.msra.mxu0 %v2329
        %4162 = vmatprep.subr.bf16.mxu0 %v2338
        %4163 = vmatpush1.bf16.msra.mxu0 %v2337
        %4164 = vmatprep.subr.bf16.mxu0 %v2346
        %4165 = vmatpush1.bf16.msra.mxu0 %v2345
        %4166 = vmatprep.mubr.bf16.mxu0 %v4008
        %4167 = vmatmul.mubr.bf16.gmra.mrb[0].mxu0 %v4007
        %v4168 = vpop.f32.mrb[0].mxu0
        %v4169 = vadd.f32 0.0, %v4168
        %v4170 = vpop.f32.mrb[0].mxu0
        %v4171 = vadd.f32 0.0, %v4170
        %v4172 = vpop.f32.mrb[0].mxu0
        %v4173 = vpop.f32.mrb[0].mxu0
        %4174 = vdwg.mxu0
        %v4179 = vrot.slane %v4046, 2
        %v4180 = vrot.slane %v4048, 2
        %v4181 = vrot.slane %v4087, 2
        %v4182 = vrot.slane %v4089, 2
        %v4187 = vadd.f32 %v1324, %v4179
        %v4188 = vadd.f32 %v1326, %v4180
        %v4189 = vadd.f32 %v1367, %v4181
        %v4190 = vadd.f32 %v1369, %v4182
        %v4191 = vadd.f32 %v1747, %v4128
        %v4192 = vadd.f32 %v1749, %v4130
        %v4193 = vadd.f32 %v1790, %v4169
        %v4194 = vadd.f32 %v1792, %v4171
        %v4195 = vxor.u32 %v4187, 2147483648
        %v4196 = vmul.f32 %v4195, 1.442695
        %v4197 = vpow.pop %v4196
        %v4198 = vadd.f32 %v4197, 1.0
        %v4199 = vrcp.pop %v4198
        %v4200 = vmul.f32 1.0, %v4199
        %v4201 = vxor.u32 %v4191, 2147483648
        %v4202 = vmul.f32 %v4201, 1.442695
        %v4203 = vpow.pop %v4202
        %v4204 = vadd.f32 %v4203, 1.0
        %v4205 = vrcp.pop %v4204
        %v4206 = vmul.f32 1.0, %v4205
        %v4207 = vxor.u32 %v4188, 2147483648
        %v4208 = vmul.f32 %v4207, 1.442695
        %v4209 = vpow.pop %v4208
        %v4210 = vadd.f32 %v4209, 1.0
        %v4211 = vrcp.pop %v4210
        %v4212 = vmul.f32 1.0, %v4211
        %v4213 = vxor.u32 %v4192, 2147483648
        %v4214 = vmul.f32 %v4213, 1.442695
        %v4215 = vpow.pop %v4214
        %v4216 = vadd.f32 %v4215, 1.0
        %v4217 = vrcp.pop %v4216
        %v4218 = vmul.f32 1.0, %v4217
        %v4219 = vtanh.pop %v4189
        %v4220 = vtanh.pop %v4193
        %v4221 = vxor.u32 %v4190, 2147483648
        %v4222 = vmul.f32 %v4221, 1.442695
        %v4223 = vpow.pop %v4222
        %v4224 = vadd.f32 %v4223, 1.0
        %v4225 = vrcp.pop %v4224
        %v4226 = vmul.f32 1.0, %v4225
        %v4227 = vxor.u32 %v4194, 2147483648
        %v4228 = vmul.f32 %v4227, 1.442695
        %v4229 = vpow.pop %v4228
        %v4230 = vadd.f32 %v4229, 1.0
        %v4231 = vrcp.pop %v4230
        %v4232 = vmul.f32 1.0, %v4231
        %v4234 = vrot.slane %v3989, 6
        %v4236 = vmul.f32 %v4212, %v4234
        %v4237 = vmul.f32 %v4200, %v4219
        %v4238 = vadd.f32 %v4236, %v4237
        %v4240 = vrot.slane %v3995, 2
        %v4242 = vmul.f32 %v4218, %v4240
        %v4243 = vmul.f32 %v4206, %v4220
        %v4244 = vadd.f32 %v4242, %v4243
        %v4245 = vtanh.pop %v4238
        %v4246 = vmul.f32 %v4226, %v4245
        %v4247 = vtanh.pop %v4244
        %v4248 = vmul.f32 %v4232, %v4247
        %p4249 = scmp.ne.s32.totalorder %s34, 2
        // Predicated region
        $region89: #{my_model_forward.1} parent=51 // pred_check
          %p4250 = pneg %p4249
        $region90: #{my_model_forward.1} parent=51 // pred_check_branch
          %4252 = sbr.rel (%p4250) target = $region92
        $region91: #{my_model_forward.1} parent=51 // pred_region
          %vm4253 = vcmask 1041408
          %v4254 = vsel %vm4253, %v1827, %v2722
          %v4255 = vsel %vm4253, %v4248, %v3999
          %vm4256 = vcmask 1043456
          %v4257 = vsel %vm4256, %v4254, %v2983
          %v4258 = vsel %vm4256, %v4255, %v3738
          %vm4259 = vcmask 1045504
          %v4260 = vsel %vm4259, %v4257, %v3232
          %v4261 = vsel %vm4259, %v4258, %v3483
          %v4262 = vsel %vm4253, %v3481, %v3736
          %v4263 = vsel %vm4253, %v3234, %v2985
          %v4264 = vsel %vm4256, %v4262, %v3997
          %v4265 = vsel %vm4256, %v4263, %v2724
          %v4266 = vsel %vm4259, %v4264, %v4246
          %v4267 = vsel %vm4259, %v4265, %v1829
          %4268 = vst [vmem:[#allocation2] sm:$0xff] %v4260
          %4269 = vst [vmem:[#allocation2 + $0x8] sm:$0xff] %v4261
          %4270 = vst [vmem:[#allocation2 + $0x10] sm:$0xff] %v4266
          %4271 = vst [vmem:[#allocation2 + $0x18] sm:$0xff] %v4267
        $region92: #{my_model_forward.1} parent=51 // pred_fallthru
          _
        %p4272 = scmp.eq.s32.totalorder %s34, 2
        // Predicated region
        $region93: #{my_model_forward.1} parent=51 // pred_check
          %p4273 = pneg %p4272
        $region94: #{my_model_forward.1} parent=51 // pred_check_branch
          %4275 = sbr.rel (%p4273) target = $region96
        $region95: #{my_model_forward.1} parent=51 // pred_region
          %v4277 = vrot.slane %v4248, 2
          %v4278 = vld [vmem:[#allocation13] sm:$0xff]
          %v4279 = vld [vmem:[#allocation13 + $0x8] sm:$0xff]
          %v4280 = vld [vmem:[#allocation13 + $0x10] sm:$0xff]
          %v4281 = vld [vmem:[#allocation13 + $0x18] sm:$0xff]
          %v4282 = vld [vmem:[#allocation13 + $0x20] sm:$0xff]
          %v4283 = vld [vmem:[#allocation13 + $0x28] sm:$0xff]
          %v4284 = vld [vmem:[#allocation13 + $0x30] sm:$0xff]
          %v4285 = vld [vmem:[#allocation13 + $0x38] sm:$0xff]
          %v4286 = vld [vmem:[#allocation13 + $0x40] sm:$0xff]
          %v4287 = vld [vmem:[#allocation13 + $0x48] sm:$0xff]
          %v4288 = vld [vmem:[#allocation13 + $0x50] sm:$0xff]
          %v4289 = vld [vmem:[#allocation13 + $0x58] sm:$0xff]
          %v4290 = vld [vmem:[#allocation13 + $0x60] sm:$0xff]
          %v4291 = vld [vmem:[#allocation13 + $0x68] sm:$0xff]
          %v4292 = vld [vmem:[#allocation13 + $0x70] sm:$0xff]
          %v4293 = vld [vmem:[#allocation13 + $0x78] sm:$0xff]
          %v4294 = vld [vmem:[#allocation13 + $0x80] sm:$0xff]
          %v4295 = vld [vmem:[#allocation13 + $0x88] sm:$0xff]
          %v4296 = vld [vmem:[#allocation13 + $0x90] sm:$0xff]
          %v4297 = vld [vmem:[#allocation13 + $0x98] sm:$0xff]
          %v4298 = vld [vmem:[#allocation13 + $0xa0] sm:$0xff]
          %v4299 = vld [vmem:[#allocation13 + $0xa8] sm:$0xff]
          %v4300 = vld [vmem:[#allocation13 + $0xb0] sm:$0xff]
          %v4301 = vld [vmem:[#allocation13 + $0xb8] sm:$0xff]
          %v4302 = vld [vmem:[#allocation13 + $0xc0] sm:$0xff]
          %v4303 = vld [vmem:[#allocation13 + $0xc8] sm:$0xff]
          %v4304 = vld [vmem:[#allocation13 + $0xd0] sm:$0xff]
          %v4305 = vld [vmem:[#allocation13 + $0xd8] sm:$0xff]
          %v4306 = vld [vmem:[#allocation13 + $0xe0] sm:$0xff]
          %v4307 = vld [vmem:[#allocation13 + $0xe8] sm:$0xff]
          %v4308 = vld [vmem:[#allocation13 + $0xf0] sm:$0xff]
          %v4309 = vld [vmem:[#allocation13 + $0xf8] sm:$0xff]
          %v4310 = vld [vmem:[#allocation14] sm:$0x1]
          %v4312 = vlaneseq
          %v4313 = vshrl.u32 %v4312, 7
          %v4314 = vsub.s32 0, %v4313
          %v4315 = vrot.slane %v4310, %v4314
          %v4318 = vrot.slane %v4246, 6
          %v4319 = vrot.slane %v4277, 6
          %4322 = vmatprep.subr.mxu0 0.0
          %4323 = vmatpush1.msra.mxu0 %v4278
          %4324 = vmatprep.subr.mxu0 0.0
          %4325 = vmatpush1.msra.mxu0 %v4279
          %4326 = vmatprep.subr.mxu0 0.0
          %4327 = vmatpush1.msra.mxu0 %v4280
          %4328 = vmatprep.subr.mxu0 0.0
          %4329 = vmatpush1.msra.mxu0 %v4281
          %4330 = vmatprep.subr.mxu0 0.0
          %4331 = vmatpush1.msra.mxu0 %v4282
          %4332 = vmatprep.subr.mxu0 0.0
          %4333 = vmatpush1.msra.mxu0 %v4283
          %4334 = vmatprep.subr.mxu0 0.0
          %4335 = vmatpush1.msra.mxu0 %v4284
          %4336 = vmatprep.subr.mxu0 0.0
          %4337 = vmatpush1.msra.mxu0 %v4285
          %4338 = vmatprep.subr.mxu0 0.0
          %4339 = vmatpush1.msra.mxu0 %v4286
          %4340 = vmatprep.subr.mxu0 0.0
          %4341 = vmatpush1.msra.mxu0 %v4287
          %4342 = vmatprep.subr.mxu0 0.0
          %4343 = vmatpush1.msra.mxu0 %v4288
          %4344 = vmatprep.subr.mxu0 0.0
          %4345 = vmatpush1.msra.mxu0 %v4289
          %4346 = vmatprep.subr.mxu0 0.0
          %4347 = vmatpush1.msra.mxu0 %v4290
          %4348 = vmatprep.subr.mxu0 0.0
          %4349 = vmatpush1.msra.mxu0 %v4291
          %4350 = vmatprep.subr.mxu0 0.0
          %4351 = vmatpush1.msra.mxu0 %v4292
          %4352 = vmatprep.subr.mxu0 0.0
          %4353 = vmatpush1.msra.mxu0 %v4293
          %4354 = vmatprep.subr.mxu0 0.0
          %4355 = vmatpush1.msra.mxu0 %v4294
          %4356 = vmatprep.subr.mxu0 0.0
          %4357 = vmatpush1.msra.mxu0 %v4295
          %4358 = vmatprep.subr.mxu0 0.0
          %4359 = vmatpush1.msra.mxu0 %v4296
          %4360 = vmatprep.subr.mxu0 0.0
          %4361 = vmatpush1.msra.mxu0 %v4297
          %4362 = vmatprep.subr.mxu0 0.0
          %4363 = vmatpush1.msra.mxu0 %v4298
          %4364 = vmatprep.subr.mxu0 0.0
          %4365 = vmatpush1.msra.mxu0 %v4299
          %4366 = vmatprep.subr.mxu0 0.0
          %4367 = vmatpush1.msra.mxu0 %v4300
          %4368 = vmatprep.subr.mxu0 0.0
          %4369 = vmatpush1.msra.mxu0 %v4301
          %4370 = vmatprep.subr.mxu0 0.0
          %4371 = vmatpush1.msra.mxu0 %v4302
          %4372 = vmatprep.subr.mxu0 0.0
          %4373 = vmatpush1.msra.mxu0 %v4303
          %4374 = vmatprep.subr.mxu0 0.0
          %4375 = vmatpush1.msra.mxu0 %v4304
          %4376 = vmatprep.subr.mxu0 0.0
          %4377 = vmatpush1.msra.mxu0 %v4305
          %4378 = vmatprep.subr.mxu0 0.0
          %4379 = vmatpush1.msra.mxu0 %v4306
          %4380 = vmatprep.subr.mxu0 0.0
          %4381 = vmatpush1.msra.mxu0 %v4307
          %4382 = vmatprep.subr.mxu0 0.0
          %4383 = vmatpush1.msra.mxu0 %v4308
          %4384 = vmatprep.subr.mxu0 0.0
          %4385 = vmatpush1.msra.mxu0 %v4309
          %4386 = vmatprep.mubr.f32.mxu0 %v4319
          %4387 = vmatmul.mubr.f32.gmra.mrb[0].mxu0 %v4318
          %v4388 = vpop.f32.mrb[0].mxu0
          %v4389 = vadd.f32 %v4315, %v4388
          %v4390 = vpop.f32.mrb[0].mxu0
          %4391 = vdwg.mxu0
          %v4392 = vld [vmem:[#allocation16] sm:$0xff]
          %v4393 = vld [vmem:[#allocation16 + $0x8] sm:$0xff]
          %v4394 = vld [vmem:[#allocation16 + $0x10] sm:$0xff]
          %v4395 = vld [vmem:[#allocation16 + $0x18] sm:$0xff]
          %v4396 = vld [vmem:[#allocation16 + $0x20] sm:$0xff]
          %v4397 = vld [vmem:[#allocation16 + $0x28] sm:$0xff]
          %v4398 = vld [vmem:[#allocation16 + $0x30] sm:$0xff]
          %v4399 = vld [vmem:[#allocation16 + $0x38] sm:$0xff]
          %v4400 = vld [vmem:[#allocation16 + $0x40] sm:$0xff]
          %v4401 = vld [vmem:[#allocation16 + $0x48] sm:$0xff]
          %v4402 = vld [vmem:[#allocation16 + $0x50] sm:$0xff]
          %v4403 = vld [vmem:[#allocation16 + $0x58] sm:$0xff]
          %v4404 = vld [vmem:[#allocation16 + $0x60] sm:$0xff]
          %v4405 = vld [vmem:[#allocation16 + $0x68] sm:$0xff]
          %v4406 = vld [vmem:[#allocation16 + $0x70] sm:$0xff]
          %v4407 = vld [vmem:[#allocation16 + $0x78] sm:$0xff]
          %v4408 = vld [vmem:[#allocation17] sm:$0x1]
          %v4410 = vlaneseq
          %v4411 = vshrl.u32 %v4410, 7
          %v4412 = vsub.s32 0, %v4411
          %v4413 = vrot.slane %v4408, %v4412
          %4415 = vmatprep.subr.mxu0 0.0
          %4416 = vmatpush1.msra.mxu0 %v4392
          %4417 = vmatprep.subr.mxu0 0.0
          %4418 = vmatpush1.msra.mxu0 %v4393
          %4419 = vmatprep.subr.mxu0 0.0
          %4420 = vmatpush1.msra.mxu0 %v4394
          %4421 = vmatprep.subr.mxu0 0.0
          %4422 = vmatpush1.msra.mxu0 %v4395
          %4423 = vmatprep.subr.mxu0 0.0
          %4424 = vmatpush1.msra.mxu0 %v4396
          %4425 = vmatprep.subr.mxu0 0.0
          %4426 = vmatpush1.msra.mxu0 %v4397
          %4427 = vmatprep.subr.mxu0 0.0
          %4428 = vmatpush1.msra.mxu0 %v4398
          %4429 = vmatprep.subr.mxu0 0.0
          %4430 = vmatpush1.msra.mxu0 %v4399
          %4431 = vmatprep.subr.mxu0 0.0
          %4432 = vmatpush1.msra.mxu0 %v4400
          %4433 = vmatprep.subr.mxu0 0.0
          %4434 = vmatpush1.msra.mxu0 %v4401
          %4435 = vmatprep.subr.mxu0 0.0
          %4436 = vmatpush1.msra.mxu0 %v4402
          %4437 = vmatprep.subr.mxu0 0.0
          %4438 = vmatpush1.msra.mxu0 %v4403
          %4439 = vmatprep.subr.mxu0 0.0
          %4440 = vmatpush1.msra.mxu0 %v4404
          %4441 = vmatprep.subr.mxu0 0.0
          %4442 = vmatpush1.msra.mxu0 %v4405
          %4443 = vmatprep.subr.mxu0 0.0
          %4444 = vmatpush1.msra.mxu0 %v4406
          %4445 = vmatprep.subr.mxu0 0.0
          %4446 = vmatpush1.msra.mxu0 %v4407
          %4447 = vmatprep.subr.mxu0 0.0
          %4448 = vmatpush1.msra.mxu0 0.0
          %4449 = vmatprep.subr.mxu0 0.0
          %4450 = vmatpush1.msra.mxu0 0.0
          %4451 = vmatprep.subr.mxu0 0.0
          %4452 = vmatpush1.msra.mxu0 0.0
          %4453 = vmatprep.subr.mxu0 0.0
          %4454 = vmatpush1.msra.mxu0 0.0
          %4455 = vmatprep.subr.mxu0 0.0
          %4456 = vmatpush1.msra.mxu0 0.0
          %4457 = vmatprep.subr.mxu0 0.0
          %4458 = vmatpush1.msra.mxu0 0.0
          %4459 = vmatprep.subr.mxu0 0.0
          %4460 = vmatpush1.msra.mxu0 0.0
          %4461 = vmatprep.subr.mxu0 0.0
          %4462 = vmatpush1.msra.mxu0 0.0
          %4463 = vmatprep.subr.mxu0 0.0
          %4464 = vmatpush1.msra.mxu0 0.0
          %4465 = vmatprep.subr.mxu0 0.0
          %4466 = vmatpush1.msra.mxu0 0.0
          %4467 = vmatprep.subr.mxu0 0.0
          %4468 = vmatpush1.msra.mxu0 0.0
          %4469 = vmatprep.subr.mxu0 0.0
          %4470 = vmatpush1.msra.mxu0 0.0
          %4471 = vmatprep.subr.mxu0 0.0
          %4472 = vmatpush1.msra.mxu0 0.0
          %4473 = vmatprep.subr.mxu0 0.0
          %4474 = vmatpush1.msra.mxu0 0.0
          %4475 = vmatprep.subr.mxu0 0.0
          %4476 = vmatpush1.msra.mxu0 0.0
          %4477 = vmatprep.subr.mxu0 0.0
          %4478 = vmatpush1.msra.mxu0 0.0
          %4479 = vmatprep.mubr.f32.mxu0 0.0
          %4480 = vmatmul.mubr.f32.gmra.mrb[0].mxu0 %v4389
          %v4481 = vpop.f32.mrb[0].mxu0
          %v4482 = vadd.f32 %v4413, %v4481
          %v4483 = vpop.f32.mrb[0].mxu0
          %4484 = vdwg.mxu0
          %vm4485 = vcmask 1041408
          %v4486 = vsel %vm4485, %v4482, -inf
          %4487 = vmax.xlane.f32.xlu0 %v4486
          %v4488 = vpop.xlane.xlu0 %4487
          %v4489 = vsub.f32 %v4482, %v4488
          %v4490 = vmul.f32 %v4489, 1.442695
          %v4491 = vpow.pop %v4490
          %v4492 = vsel %vm4485, %v4491, 0.0
          %4493 = vadd.xlane.f32.xlu0 %v4492
          %v4494 = vpop.xlane.xlu0 %4493
          %v4495 = vlog2.pop %v4494
          %v4496 = vmul.f32 %v4495, 0.6931472
          %v4497 = vsub.f32 %v4489, %v4496
          %vm4498 = vcmask 107520
          %4499 = vst.msk [vmem:[#allocation19] sm:$0x3] %vm4498, %v4497
        $region96: #{my_model_forward.1} parent=51 // pred_fallthru
          _
        // Predicated region
        $region97: #{my_model_forward.1} parent=51 // pred_check
          %p4500 = pneg %p230
        $region98: #{my_model_forward.1} parent=51 // pred_check_branch
          %4502 = sbr.rel (%p4500) target = $region100
        $region99: #{my_model_forward.1} parent=51 // pred_region
          %s4504 = ssub.s32 32, 32
          %4505 = vsyncadd [#allocation7], %s4504
          %s4507 = sshll.u32 [#allocation19], 4
          %s4508 = int_to_ptr.vmem [resolvable:$true] %s4507
          %4510 = dma.vmem_to_hbm [thread:$0]  %s4508, 32, %s9, [#allocation7]
        $region100: #{my_model_forward.1} parent=51 // pred_fallthru
          _
        // Predicated region
        $region101: #{my_model_forward.1} parent=51 // pred_check
          %p4511 = pneg %p230
        $region102: #{my_model_forward.1} parent=51 // pred_check_branch
          %4513 = sbr.rel (%p4511) target = $region104
        $region103: #{my_model_forward.1} parent=51 // pred_region
          %4514 = dma.done [#allocation7], 32
        $region104: #{my_model_forward.1} parent=51 // pred_fallthru
          _
      $region52: #{my_model_forward.1} parent=5 // pred_fallthru
        _
      %p4515 = scmp.le.s32.totalorder 2, %s29
      // Predicated region
      $region105: #{my_model_forward.1} parent=5 // pred_check
        %p4516 = pneg %p4515
      $region106: #{my_model_forward.1} parent=5 // pred_check_branch
        %4518 = sbr.rel (%p4516) target = $region108
      $region107: #{my_model_forward.1} parent=5 // pred_region
        %s4519 = ssub.s32 %s29, 2
      $region108: #{my_model_forward.1} parent=5 // pred_fallthru
        _
    $region6: #{my_model_forward.1} parent=1 // loop_footer
      %s33 = sadd.s32 1, %s29
    $region7: #{my_model_forward.1} parent=1 // loop_footer_branch
      %28 = sbr.rel target = $region3
    $region8: #{my_model_forward.1} parent=1 // loop_exit
      _
    %4520 = vsyncpa [#allocation6], 1
    %s4521 = scalar_lea.sflag [#allocation6], 1
    %4522 = vsyncpa %s4521, 1
    %4523 = vsyncpa [#allocation9], 1
    %s4524 = scalar_lea.sflag [#allocation9], 1
    %4525 = vsyncpa %s4524, 1
    %4526 = vsyncpa [#allocation12], 1
    %s4527 = scalar_lea.sflag [#allocation12], 1
    %4528 = vsyncpa %s4527, 1
    %4529 = vsyncpa [#allocation15], 1
    %4530 = vsyncpa [#allocation18], 1
    %4531 = vsyncpa [#allocation7], 1
    %s4532 = scalar_lea.sflag [#allocation7], 1
    %4533 = vsyncpa %s4532, 1

</llo_original>
